<compile_context>
chip_gen: v6e
topology: v6e:2x2x1
jax: 0.10.0
libtpu: 0.0.40
codegen_flags: <defaults>
</compile_context>

<pallas_src>
import functools

import jax
import jax.numpy as jnp
from jax.experimental import pallas as pl
from jax.experimental.pallas import tpu as pltpu

LEAKY_SLOPE = 0.01  # PyTorch nn.LeakyReLU default

# ---------------------------------------------------------------------------
# Static dimensions (lane-padded to 128 where they feed the MXU / stores)
# ---------------------------------------------------------------------------
C_IN = 4
C1 = 16          # conv1 real output channels
C2 = 32          # conv2 real output channels
EMB = 32         # real embedding dim
HIDDEN = 128     # decoder MLP hidden width (already lane-dense)

K1 = 3 * 3 * C_IN   # 36 conv1 patch features
K1P = 128           # conv1 patch features, lane-padded
C1P = 128           # conv1 channels, lane-padded
C2P = 128           # conv2 channels, lane-padded
EMB_PAD = 128       # embedding, lane-padded
COORD_PAD = 8       # decoder coordinate features (3 real, padded to 8)
OUT_PAD = 128       # decoder output slab width (real flow = first 3 lanes)

N_TAPS = 9          # 3x3 conv2 kernel taps
POS1 = 64           # 8x8 conv1 output positions per image
N_POS2 = 16         # 4x4 conv2 output positions per image


# ---------------------------------------------------------------------------
# Pallas kernels
# ---------------------------------------------------------------------------
def _encoder_kernel(p_ref, sel_ref, w1_ref, b1_ref, w2_ref, b2_ref,
                    wfc_ref, bfc_ref, w1e_ref, db1_ref,
                    emb_ref, v_ref, *, slope):
    """Fused per-image encoder: conv1 + LReLU + conv2 + LReLU + FC (+ hoisted dec L1)."""
    # conv1 as one lane-dense matmul over the 64 patches of this image.
    h1 = jnp.dot(p_ref[...], w1_ref[...],
                 preferred_element_type=jnp.float32) + b1_ref[...]
    h1 = jnp.where(h1 > 0, h1, slope * h1).astype(jnp.bfloat16)      # (64, C1P)

    # conv2 im2col via constant 0/1 selection matmul: rows = tap*16 + out_pos.
    pat = jnp.dot(sel_ref[...], h1,
                  preferred_element_type=jnp.float32).astype(jnp.bfloat16)  # (144, C1P)

    acc2 = jnp.dot(pat[:N_POS2, :], w2_ref[0],
                   preferred_element_type=jnp.float32)
    for t in range(1, N_TAPS):
        acc2 = acc2 + jnp.dot(pat[t * N_POS2:(t + 1) * N_POS2, :], w2_ref[t],
                              preferred_element_type=jnp.float32)
    acc2 = acc2 + b2_ref[...]
    h2 = jnp.where(acc2 > 0, acc2, slope * acc2).astype(jnp.bfloat16)  # (16, C2P)

    # FC over flattened (position, channel) features, expressed per position.
    acc_fc = jnp.dot(h2[0:1, :], wfc_ref[0], preferred_element_type=jnp.float32)
    for q in range(1, N_POS2):
        acc_fc = acc_fc + jnp.dot(h2[q:q + 1, :], wfc_ref[q],
                                  preferred_element_type=jnp.float32)
    emb = acc_fc + bfc_ref[...]                                        # (1, EMB_PAD) f32
    emb_ref[0] = emb.astype(emb_ref.dtype)

    # Hoisted flow-decoder layer-1 embedding contribution: v = emb @ W1_emb + b1.
    v = jnp.dot(emb, w1e_ref[...], preferred_element_type=jnp.float32) + db1_ref[...]
    v_ref[0] = v.astype(v_ref.dtype)


def _flow_mlp_kernel(c_ref, v_ref, w1c_ref, w2_ref, b2_ref, w3_ref, b3_ref,
                     o_ref, *, slope):
    """Fused 3-layer flow MLP; coords-only input + per-batch hoisted embedding row."""
    # layer 1: small-K coordinate dot (K=8, real 3) + per-batch embedding vector.
    h = jnp.dot(c_ref[...], w1c_ref[...],
                preferred_element_type=jnp.float32) + v_ref[0]
    h = jnp.where(h > 0, h, slope * h).astype(jnp.bfloat16)
    h = jnp.dot(h, w2_ref[...], preferred_element_type=jnp.float32) + b2_ref[...]
    h = jnp.where(h > 0, h, slope * h).astype(jnp.bfloat16)
    out = jnp.dot(h, w3_ref[...], preferred_element_type=jnp.float32) + b3_ref[...]
    o_ref[...] = out.astype(o_ref.dtype)   # bf16 store, lane-dense 128 wide


# ---------------------------------------------------------------------------
# Kernel wrappers
# ---------------------------------------------------------------------------
def fused_encoder(patches_bf16, p, *, batch):
    """patches_bf16: (batch*64, K1P) bf16 -> ((batch,1,EMB_PAD), (batch,1,HIDDEN)) f32."""
    M = patches_bf16.shape[0]
    assert M == batch * POS1
    kernel = functools.partial(_encoder_kernel, slope=LEAKY_SLOPE)

    flops = 2 * batch * (POS1 * K1P * C1P                       # conv1
                         + (N_TAPS * N_POS2) * POS1 * C1P       # im2col select
                         + N_TAPS * N_POS2 * C1P * C2P          # conv2
                         + N_POS2 * C2P * EMB_PAD               # fc
                         + EMB_PAD * HIDDEN)                    # hoisted decoder L1
    w_bytes = sum(int(p[k].size) * p[k].dtype.itemsize
                  for k in ("enc_sel", "enc_w1", "enc_b1", "enc_w2", "enc_b2",
                            "enc_wfc", "enc_bfc", "dec_w1e", "dec_b1"))
    bytes_accessed = (int(patches_bf16.size) * patches_bf16.dtype.itemsize
                      + w_bytes + batch * (EMB_PAD + HIDDEN) * 4)

    return pl.pallas_call(
        kernel,
        out_shape=(jax.ShapeDtypeStruct((batch, 1, EMB_PAD), jnp.float32),
                   jax.ShapeDtypeStruct((batch, 1, HIDDEN), jnp.float32)),
        grid=(batch,),
        in_specs=[
            pl.BlockSpec((POS1, K1P), lambda b: (b, 0)),
            pl.BlockSpec((N_TAPS * N_POS2, POS1), lambda b: (0, 0)),
            pl.BlockSpec((K1P, C1P), lambda b: (0, 0)),
            pl.BlockSpec((1, C1P), lambda b: (0, 0)),
            pl.BlockSpec((N_TAPS, C1P, C2P), lambda b: (0, 0, 0)),
            pl.BlockSpec((1, C2P), lambda b: (0, 0)),
            pl.BlockSpec((N_POS2, C2P, EMB_PAD), lambda b: (0, 0, 0)),
            pl.BlockSpec((1, EMB_PAD), lambda b: (0, 0)),
            pl.BlockSpec((EMB_PAD, HIDDEN), lambda b: (0, 0)),
            pl.BlockSpec((1, HIDDEN), lambda b: (0, 0)),
        ],
        out_specs=(pl.BlockSpec((1, 1, EMB_PAD), lambda b: (b, 0, 0)),
                   pl.BlockSpec((1, 1, HIDDEN), lambda b: (b, 0, 0))),
        compiler_params=pltpu.CompilerParams(dimension_semantics=("parallel",)),
        cost_estimate=pl.CostEstimate(flops=int(flops), transcendentals=0,
                                      bytes_accessed=int(bytes_accessed)),
    )(patches_bf16, p["enc_sel"], p["enc_w1"], p["enc_b1"], p["enc_w2"],
      p["enc_b2"], p["enc_wfc"], p["enc_bfc"], p["dec_w1e"], p["dec_b1"])


def _choose_tile_m(n_pad, batch, *, min_total_steps=4, max_tile=2048):
    """Largest 128-multiple tile dividing n_pad that keeps >= min_total_steps grid steps
    (>= 2 per v7x TensorCore) so the BlockSpec pipeline can double-buffer."""
    best = 128
    t = 128
    while t <= min(n_pad, max_tile):
        if n_pad % t == 0 and batch * (n_pad // t) >= min_total_steps:
            best = t
        t += 128
    return best


def fused_flow_mlp(coords_pad, v, p):
    """coords_pad: (B, N_pad, COORD_PAD) f32, v: (B, HIDDEN) f32 -> (B*N_pad, OUT_PAD) bf16."""
    B, N_pad, _ = coords_pad.shape
    tile_m = _choose_tile_m(N_pad, B)
    steps = N_pad // tile_m
    c2d = coords_pad.reshape(B * N_pad, COORD_PAD)
    v3d = v.reshape(B, 1, HIDDEN)

    flops = 2 * B * N_pad * (COORD_PAD * HIDDEN + HIDDEN * HIDDEN + HIDDEN * OUT_PAD)
    w_bytes = sum(int(p[k].size) * p[k].dtype.itemsize
                  for k in ("dec_w1c", "dec_w2", "dec_b2", "dec_w3", "dec_b3"))
    bytes_accessed = (int(c2d.size) * 4 + int(v.size) * 4 + w_bytes
                      + B * N_pad * OUT_PAD * 2)

    kernel = functools.partial(_flow_mlp_kernel, slope=LEAKY_SLOPE)
    return pl.pallas_call(
        kernel,
        out_shape=jax.ShapeDtypeStruct((B * N_pad, OUT_PAD), jnp.bfloat16),
        grid=(B, steps),
        in_specs=[
            pl.BlockSpec((tile_m, COORD_PAD), lambda b, i: (b * steps + i, 0)),
            pl.BlockSpec((1, 1, HIDDEN), lambda b, i: (b, 0, 0)),
            pl.BlockSpec((COORD_PAD, HIDDEN), lambda b, i: (0, 0)),
            pl.BlockSpec((HIDDEN, HIDDEN), lambda b, i: (0, 0)),
            pl.BlockSpec((1, HIDDEN), lambda b, i: (0, 0)),
            pl.BlockSpec((HIDDEN, OUT_PAD), lambda b, i: (0, 0)),
            pl.BlockSpec((1, OUT_PAD), lambda b, i: (0, 0)),
        ],
        out_specs=pl.BlockSpec((tile_m, OUT_PAD), lambda b, i: (b * steps + i, 0)),
        compiler_params=pltpu.CompilerParams(
            dimension_semantics=("parallel", "parallel")),
        cost_estimate=pl.CostEstimate(flops=int(flops), transcendentals=0,
                                      bytes_accessed=int(bytes_accessed)),
    )(c2d, v3d, p["dec_w1c"], p["dec_w2"], p["dec_b2"], p["dec_w3"], p["dec_b3"])


# ---------------------------------------------------------------------------
# Host-side layout plumbing (runs once in XLA, feeds the fused kernels)
# ---------------------------------------------------------------------------
def _im2col(x_nhwc, kh, kw, stride, pad):
    x = jnp.pad(x_nhwc, ((0, 0), (pad, pad), (pad, pad), (0, 0)))
    _, H, W, _ = x.shape
    ho = (H - kh) // stride + 1
    wo = (W - kw) // stride + 1
    cols = [x[:, i:i + stride * ho:stride, j:j + stride * wo:stride, :]
            for i in range(kh) for j in range(kw)]
    return jnp.concatenate(cols, axis=-1)  # (B, ho, wo, kh*kw*Cin)


def _build_conv2_select(h=8, w=8, k=3, stride=2, pad=1, out_h=4, out_w=4):
    """0/1 matrix (k*k*out_h*out_w, h*w): conv2 im2col as a matmul on conv1 output."""
    rows = []
    for ki in range(k):
        for kj in range(k):
            for oy in range(out_h):
                for ox in range(out_w):
                    col = [0.0] * (h * w)
                    iy = stride * oy - pad + ki
                    ix = stride * ox - pad + kj
                    if 0 <= iy < h and 0 <= ix < w:
                        col[iy * w + ix] = 1.0
                    rows.append(col)
    return jnp.array(rows, dtype=jnp.float32)


# ---------------------------------------------------------------------------
# Parameters (deterministic synthetic init, stored pre-padded)
# ---------------------------------------------------------------------------
def init_params(key):
    ks = jax.random.split(key, 12)
    s = 0.1

    def w(k, shape):
        return s * jax.random.normal(k, shape, dtype=jnp.float32)

    def pad_to(a, shape):
        out = jnp.zeros(shape, jnp.float32)
        return out.at[tuple(slice(0, d) for d in a.shape)].set(a)

    dec_w1_full = w(ks[6], (3 + EMB, HIDDEN))       # original layer-1 weight, split below

    params = {
        # encoder (weights bf16 for MXU, biases f32 for the f32 accumulators)
        "enc_w1": pad_to(w(ks[0], (K1, C1)), (K1P, C1P)).astype(jnp.bfloat16),
        "enc_b1": pad_to(w(ks[1], (1, C1)), (1, C1P)),
        "enc_w2": pad_to(w(ks[2], (N_TAPS, C1, C2)),
                         (N_TAPS, C1P, C2P)).astype(jnp.bfloat16),
        "enc_b2": pad_to(w(ks[3], (1, C2)), (1, C2P)),
        "enc_wfc": pad_to(w(ks[4], (N_POS2, C2, EMB)),
                          (N_POS2, C2P, EMB_PAD)).astype(jnp.bfloat16),
        "enc_bfc": pad_to(w(ks[5], (1, EMB)), (1, EMB_PAD)),
        # decoder flow MLP; layer-1 weight split into coord / embedding parts so the
        # embedding contribution can be hoisted out of the per-coordinate kernel
        "dec_w1c": pad_to(dec_w1_full[:3], (COORD_PAD, HIDDEN)),          # f32, K=8 dot
        "dec_w1e": pad_to(dec_w1_full[3:], (EMB_PAD, HIDDEN)),            # f32, used in encoder
        "dec_b1": w(ks[7], (1, HIDDEN)),
        "dec_w2": w(ks[8], (HIDDEN, HIDDEN)).astype(jnp.bfloat16),
        "dec_b2": w(ks[9], (1, HIDDEN)),
        "dec_w3": pad_to(w(ks[10], (HIDDEN, 3)), (HIDDEN, OUT_PAD)).astype(jnp.bfloat16),
        "dec_b3": pad_to(w(ks[11], (1, 3)), (1, OUT_PAD)),
        # constant conv2 im2col selection matrix (rows = tap*16 + out_pos)
        "enc_sel": _build_conv2_select().astype(jnp.bfloat16),
    }
    return params


# ---------------------------------------------------------------------------
# AutoEncoder forward (mirrors AutoEncoder.forward semantics)
# ---------------------------------------------------------------------------
def image_encoder(x_nchw, p):
    x = jnp.transpose(x_nchw, (0, 2, 3, 1))           # NCHW -> NHWC
    patches = _im2col(x, 3, 3, 2, 1)                  # (B, 8, 8, 36)
    B, ho, wo, K = patches.shape
    patches = patches.reshape(B * ho * wo, K)
    patches = jnp.pad(patches, ((0, 0), (0, K1P - K))).astype(jnp.bfloat16)
    emb3, v3 = fused_encoder(patches, p, batch=B)
    return emb3[:, 0, :], v3[:, 0, :]                 # (B, EMB_PAD), (B, HIDDEN)


def flow_decoder(v, coords, p):
    B, N, _ = coords.shape
    N_pad = max(128, ((N + 127) // 128) * 128)
    cpad = jnp.zeros((B, N_pad, COORD_PAD), jnp.float32)
    cpad = cpad.at[:, :N, :3].set(coords)
    flow_slab = fused_flow_mlp(cpad, v, p)            # (B*N_pad, OUT_PAD) bf16
    flow = flow_slab.reshape(B, N_pad, OUT_PAD)[:, :N, :3].astype(jnp.float32)
    return coords + flow                              # deformed coordinates


def autoencoder_forward(inputs, coordinates_inputs, params):
    emb_pad, v = image_encoder(inputs, params)
    embedding = emb_pad[:, :EMB]
    if coordinates_inputs is None:
        return embedding
    outputs = flow_decoder(v, coordinates_inputs, params)
    return outputs, embedding


# ---------------------------------------------------------------------------
if __name__ == "__main__":
    key = jax.random.PRNGKey(0)
    kx, kc, kp = jax.random.split(key, 3)

    B, C, H, W = 2, 4, 16, 16
    N = 512  # query coordinates per batch element

    x = jax.random.normal(kx, (B, C, H, W), dtype=jnp.float32)
    coords = jax.random.uniform(kc, (B, N, 3), dtype=jnp.float32,
                                minval=-1.0, maxval=1.0)
    params = init_params(kp)

    fwd = jax.jit(autoencoder_forward)
    outputs, embedding = fwd(x, coords, params)
    emb_only = fwd(x, None, params)

    jax.block_until_ready((outputs, embedding, emb_only))
    assert outputs.shape == (B, N, 3)
    assert embedding.shape == (B, EMB)
    assert emb_only.shape == (B, EMB)
    print("KERNEL_OK")
</pallas_src>

<mosaic_0001>
module attributes {stable_mosaic.version = 11 : i64} {
  func.func @_flow_mlp_kernel(%arg0: i32, %arg1: i32, %arg2: memref<256x8xf32, #tpu.memory_space<vmem>>, %arg3: memref<1x1x128xf32, #tpu.memory_space<vmem>>, %arg4: memref<8x128xf32, #tpu.memory_space<vmem>>, %arg5: memref<128x128xbf16, #tpu.memory_space<vmem>>, %arg6: memref<1x128xf32, #tpu.memory_space<vmem>>, %arg7: memref<128x128xbf16, #tpu.memory_space<vmem>>, %arg8: memref<1x128xf32, #tpu.memory_space<vmem>>, %arg9: memref<256x128xbf16, #tpu.memory_space<vmem>>) attributes {dimension_semantics = [#tpu.dimension_semantics<parallel>, #tpu.dimension_semantics<parallel>], iteration_bounds = array<i64: 2, 2>, scalar_prefetch = 0 : i64, scratch_operands = 0 : i64, tpu.core_type = #tpu.core_type<tc>, window_params = [{transform_indices = @transform_0, window_bounds = array<i64: 256, 8>}, {transform_indices = @transform_1, window_bounds = array<i64: 1, 1, 128>}, {pipeline_mode = #tpu.pipeline_mode<synchronous>, transform_indices = @transform_2, window_bounds = array<i64: 8, 128>}, {pipeline_mode = #tpu.pipeline_mode<synchronous>, transform_indices = @transform_3, window_bounds = array<i64: 128, 128>}, {pipeline_mode = #tpu.pipeline_mode<synchronous>, transform_indices = @transform_4, window_bounds = array<i64: 1, 128>}, {pipeline_mode = #tpu.pipeline_mode<synchronous>, transform_indices = @transform_5, window_bounds = array<i64: 128, 128>}, {pipeline_mode = #tpu.pipeline_mode<synchronous>, transform_indices = @transform_6, window_bounds = array<i64: 1, 128>}, {transform_indices = @transform_7, window_bounds = array<i64: 256, 128>}]} {
    %c0 = arith.constant 0 : index
    %c0_0 = arith.constant 0 : index
    %0 = vector.load %arg2[%c0, %c0_0] : memref<256x8xf32, #tpu.memory_space<vmem>>, vector<256x8xf32>
    %c0_1 = arith.constant 0 : index
    %c0_2 = arith.constant 0 : index
    %1 = vector.load %arg4[%c0_1, %c0_2] : memref<8x128xf32, #tpu.memory_space<vmem>>, vector<8x128xf32>
    %cst = arith.constant dense<0.000000e+00> : vector<256x128xf32>
    %2 = tpu.matmul %0, %1, %cst {dimension_numbers = #tpu.dot_dimension_numbers<[1], [0], [0], [1], [0, 0, 1, 1], [], []>} : vector<256x8xf32>, vector<8x128xf32>, vector<256x128xf32> -> vector<256x128xf32>
    %c0_3 = arith.constant 0 : index
    %c0_4 = arith.constant 0 : index
    %c0_5 = arith.constant 0 : index
    %3 = vector.load %arg3[%c0_3, %c0_4, %c0_5] : memref<1x1x128xf32, #tpu.memory_space<vmem>>, vector<1x1x128xf32>
    %4 = vector.shape_cast %3 : vector<1x1x128xf32> to vector<1x128xf32>
    %5 = vector.broadcast %4 : vector<1x128xf32> to vector<256x128xf32>
    %6 = arith.addf %2, %5 : vector<256x128xf32>
    %cst_6 = arith.constant 0.000000e+00 : f32
    %7 = vector.broadcast %cst_6 : f32 to vector<256x128xf32>
    %8 = arith.cmpf ogt, %6, %7 : vector<256x128xf32>
    %cst_7 = arith.constant 0.00999999977 : f32
    %9 = vector.broadcast %cst_7 : f32 to vector<256x128xf32>
    %10 = arith.mulf %9, %6 : vector<256x128xf32>
    %11 = arith.select %8, %6, %10 : vector<256x128xi1>, vector<256x128xf32>
    %12 = arith.truncf %11 : vector<256x128xf32> to vector<256x128xbf16>
    %c0_8 = arith.constant 0 : index
    %c0_9 = arith.constant 0 : index
    %13 = vector.load %arg5[%c0_8, %c0_9] : memref<128x128xbf16, #tpu.memory_space<vmem>>, vector<128x128xbf16>
    %cst_10 = arith.constant dense<0.000000e+00> : vector<256x128xf32>
    %14 = tpu.matmul %12, %13, %cst_10 {dimension_numbers = #tpu.dot_dimension_numbers<[1], [0], [0], [1], [0, 0, 1, 1], [], []>} : vector<256x128xbf16>, vector<128x128xbf16>, vector<256x128xf32> -> vector<256x128xf32>
    %c0_11 = arith.constant 0 : index
    %c0_12 = arith.constant 0 : index
    %15 = vector.load %arg6[%c0_11, %c0_12] : memref<1x128xf32, #tpu.memory_space<vmem>>, vector<1x128xf32>
    %16 = vector.broadcast %15 : vector<1x128xf32> to vector<256x128xf32>
    %17 = arith.addf %14, %16 : vector<256x128xf32>
    %cst_13 = arith.constant 0.000000e+00 : f32
    %18 = vector.broadcast %cst_13 : f32 to vector<256x128xf32>
    %19 = arith.cmpf ogt, %17, %18 : vector<256x128xf32>
    %cst_14 = arith.constant 0.00999999977 : f32
    %20 = vector.broadcast %cst_14 : f32 to vector<256x128xf32>
    %21 = arith.mulf %20, %17 : vector<256x128xf32>
    %22 = arith.select %19, %17, %21 : vector<256x128xi1>, vector<256x128xf32>
    %23 = arith.truncf %22 : vector<256x128xf32> to vector<256x128xbf16>
    %c0_15 = arith.constant 0 : index
    %c0_16 = arith.constant 0 : index
    %24 = vector.load %arg7[%c0_15, %c0_16] : memref<128x128xbf16, #tpu.memory_space<vmem>>, vector<128x128xbf16>
    %cst_17 = arith.constant dense<0.000000e+00> : vector<256x128xf32>
    %25 = tpu.matmul %23, %24, %cst_17 {dimension_numbers = #tpu.dot_dimension_numbers<[1], [0], [0], [1], [0, 0, 1, 1], [], []>} : vector<256x128xbf16>, vector<128x128xbf16>, vector<256x128xf32> -> vector<256x128xf32>
    %c0_18 = arith.constant 0 : index
    %c0_19 = arith.constant 0 : index
    %26 = vector.load %arg8[%c0_18, %c0_19] : memref<1x128xf32, #tpu.memory_space<vmem>>, vector<1x128xf32>
    %27 = vector.broadcast %26 : vector<1x128xf32> to vector<256x128xf32>
    %28 = arith.addf %25, %27 : vector<256x128xf32>
    %29 = arith.truncf %28 : vector<256x128xf32> to vector<256x128xbf16>
    %c0_20 = arith.constant 0 : index
    %c0_21 = arith.constant 0 : index
    %30 = vector.load %arg9[%c0_20, %c0_21] : memref<256x128xbf16, #tpu.memory_space<vmem>>, vector<256x128xbf16>
    tpu.vector_store %arg9[%c0_20, %c0_21], %29 {strides = array<i32>} : memref<256x128xbf16, #tpu.memory_space<vmem>>, vector<256x128xbf16>,
    return
  }
  func.func @transform_0(%arg0: i32, %arg1: i32) -> (i32, i32) {
    %c2_i32 = arith.constant 2 : i32
    %0 = arith.muli %arg0, %c2_i32 : i32
    %1 = arith.addi %0, %arg1 : i32
    %c0_i32 = arith.constant 0 : i32
    %c0_i32_0 = arith.constant 0 : i32
    return %1, %c0_i32 : i32, i32
  }
  func.func @transform_1(%arg0: i32, %arg1: i32) -> (i32, i32, i32) {
    %c0_i32 = arith.constant 0 : i32
    %c0_i32_0 = arith.constant 0 : i32
    %c0_i32_1 = arith.constant 0 : i32
    return %arg0, %c0_i32, %c0_i32_0 : i32, i32, i32
  }
  func.func @transform_2(%arg0: i32, %arg1: i32) -> (i32, i32) {
    %c0_i32 = arith.constant 0 : i32
    %c0_i32_0 = arith.constant 0 : i32
    %c0_i32_1 = arith.constant 0 : i32
    return %c0_i32, %c0_i32_0 : i32, i32
  }
  func.func @transform_3(%arg0: i32, %arg1: i32) -> (i32, i32) {
    %c0_i32 = arith.constant 0 : i32
    %c0_i32_0 = arith.constant 0 : i32
    %c0_i32_1 = arith.constant 0 : i32
    return %c0_i32, %c0_i32_0 : i32, i32
  }
  func.func @transform_4(%arg0: i32, %arg1: i32) -> (i32, i32) {
    %c0_i32 = arith.constant 0 : i32
    %c0_i32_0 = arith.constant 0 : i32
    %c0_i32_1 = arith.constant 0 : i32
    return %c0_i32, %c0_i32_0 : i32, i32
  }
  func.func @transform_5(%arg0: i32, %arg1: i32) -> (i32, i32) {
    %c0_i32 = arith.constant 0 : i32
    %c0_i32_0 = arith.constant 0 : i32
    %c0_i32_1 = arith.constant 0 : i32
    return %c0_i32, %c0_i32_0 : i32, i32
  }
  func.func @transform_6(%arg0: i32, %arg1: i32) -> (i32, i32) {
    %c0_i32 = arith.constant 0 : i32
    %c0_i32_0 = arith.constant 0 : i32
    %c0_i32_1 = arith.constant 0 : i32
    return %c0_i32, %c0_i32_0 : i32, i32
  }
  func.func @transform_7(%arg0: i32, %arg1: i32) -> (i32, i32) {
    %c2_i32 = arith.constant 2 : i32
    %0 = arith.muli %arg0, %c2_i32 : i32
    %1 = arith.addi %0, %arg1 : i32
    %c0_i32 = arith.constant 0 : i32
    %c0_i32_0 = arith.constant 0 : i32
    return %1, %c0_i32 : i32, i32
  }
}

module attributes {stable_mosaic.version = 11 : i64} {
  func.func @_encoder_kernel(%arg0: i32, %arg1: memref<64x128xbf16, #tpu.memory_space<vmem>>, %arg2: memref<144x64xbf16, #tpu.memory_space<vmem>>, %arg3: memref<128x128xbf16, #tpu.memory_space<vmem>>, %arg4: memref<1x128xf32, #tpu.memory_space<vmem>>, %arg5: memref<9x128x128xbf16, #tpu.memory_space<vmem>>, %arg6: memref<1x128xf32, #tpu.memory_space<vmem>>, %arg7: memref<16x128x128xbf16, #tpu.memory_space<vmem>>, %arg8: memref<1x128xf32, #tpu.memory_space<vmem>>, %arg9: memref<128x128xf32, #tpu.memory_space<vmem>>, %arg10: memref<1x128xf32, #tpu.memory_space<vmem>>, %arg11: memref<1x1x128xf32, #tpu.memory_space<vmem>>, %arg12: memref<1x1x128xf32, #tpu.memory_space<vmem>>) attributes {dimension_semantics = [#tpu.dimension_semantics<parallel>], iteration_bounds = array<i64: 2>, scalar_prefetch = 0 : i64, scratch_operands = 0 : i64, tpu.core_type = #tpu.core_type<tc>, window_params = [{transform_indices = @transform_0, window_bounds = array<i64: 64, 128>}, {pipeline_mode = #tpu.pipeline_mode<synchronous>, transform_indices = @transform_1, window_bounds = array<i64: 144, 64>}, {pipeline_mode = #tpu.pipeline_mode<synchronous>, transform_indices = @transform_2, window_bounds = array<i64: 128, 128>}, {pipeline_mode = #tpu.pipeline_mode<synchronous>, transform_indices = @transform_3, window_bounds = array<i64: 1, 128>}, {pipeline_mode = #tpu.pipeline_mode<synchronous>, transform_indices = @transform_4, window_bounds = array<i64: 9, 128, 128>}, {pipeline_mode = #tpu.pipeline_mode<synchronous>, transform_indices = @transform_5, window_bounds = array<i64: 1, 128>}, {pipeline_mode = #tpu.pipeline_mode<synchronous>, transform_indices = @transform_6, window_bounds = array<i64: 16, 128, 128>}, {pipeline_mode = #tpu.pipeline_mode<synchronous>, transform_indices = @transform_7, window_bounds = array<i64: 1, 128>}, {pipeline_mode = #tpu.pipeline_mode<synchronous>, transform_indices = @transform_8, window_bounds = array<i64: 128, 128>}, {pipeline_mode = #tpu.pipeline_mode<synchronous>, transform_indices = @transform_9, window_bounds = array<i64: 1, 128>}, {transform_indices = @transform_10, window_bounds = array<i64: 1, 1, 128>}, {transform_indices = @transform_11, window_bounds = array<i64: 1, 1, 128>}]} {
    %c0 = arith.constant 0 : index
    %c0_0 = arith.constant 0 : index
    %0 = vector.load %arg1[%c0, %c0_0] : memref<64x128xbf16, #tpu.memory_space<vmem>>, vector<64x128xbf16>
    %c0_1 = arith.constant 0 : index
    %c0_2 = arith.constant 0 : index
    %1 = vector.load %arg3[%c0_1, %c0_2] : memref<128x128xbf16, #tpu.memory_space<vmem>>, vector<128x128xbf16>
    %cst = arith.constant dense<0.000000e+00> : vector<64x128xf32>
    %2 = tpu.matmul %0, %1, %cst {dimension_numbers = #tpu.dot_dimension_numbers<[1], [0], [0], [1], [0, 0, 1, 1], [], []>} : vector<64x128xbf16>, vector<128x128xbf16>, vector<64x128xf32> -> vector<64x128xf32>
    %c0_3 = arith.constant 0 : index
    %c0_4 = arith.constant 0 : index
    %3 = vector.load %arg4[%c0_3, %c0_4] : memref<1x128xf32, #tpu.memory_space<vmem>>, vector<1x128xf32>
    %4 = vector.broadcast %3 : vector<1x128xf32> to vector<64x128xf32>
    %5 = arith.addf %2, %4 : vector<64x128xf32>
    %cst_5 = arith.constant 0.000000e+00 : f32
    %6 = vector.broadcast %cst_5 : f32 to vector<64x128xf32>
    %7 = arith.cmpf ogt, %5, %6 : vector<64x128xf32>
    %cst_6 = arith.constant 0.00999999977 : f32
    %8 = vector.broadcast %cst_6 : f32 to vector<64x128xf32>
    %9 = arith.mulf %8, %5 : vector<64x128xf32>
    %10 = arith.select %7, %5, %9 : vector<64x128xi1>, vector<64x128xf32>
    %11 = arith.truncf %10 : vector<64x128xf32> to vector<64x128xbf16>
    %c0_7 = arith.constant 0 : index
    %c0_8 = arith.constant 0 : index
    %12 = vector.load %arg2[%c0_7, %c0_8] : memref<144x64xbf16, #tpu.memory_space<vmem>>, vector<144x64xbf16>
    %cst_9 = arith.constant dense<0.000000e+00> : vector<144x128xf32>
    %13 = tpu.matmul %12, %11, %cst_9 {dimension_numbers = #tpu.dot_dimension_numbers<[1], [0], [0], [1], [0, 0, 1, 1], [], []>} : vector<144x64xbf16>, vector<64x128xbf16>, vector<144x128xf32> -> vector<144x128xf32>
    %14 = arith.truncf %13 : vector<144x128xf32> to vector<144x128xbf16>
    %15 = vector.extract_strided_slice %14 {offsets = [0, 0], sizes = [16, 128], strides = [1, 1]} : vector<144x128xbf16> to vector<16x128xbf16>
    %c0_10 = arith.constant 0 : index
    %c0_11 = arith.constant 0 : index
    %c0_12 = arith.constant 0 : index
    %16 = vector.load %arg5[%c0_10, %c0_11, %c0_12] : memref<9x128x128xbf16, #tpu.memory_space<vmem>>, vector<1x128x128xbf16>
    %17 = vector.shape_cast %16 : vector<1x128x128xbf16> to vector<128x128xbf16>
    %cst_13 = arith.constant dense<0.000000e+00> : vector<16x128xf32>
    %18 = tpu.matmul %15, %17, %cst_13 {dimension_numbers = #tpu.dot_dimension_numbers<[1], [0], [0], [1], [0, 0, 1, 1], [], []>} : vector<16x128xbf16>, vector<128x128xbf16>, vector<16x128xf32> -> vector<16x128xf32>
    %19 = vector.extract_strided_slice %14 {offsets = [16, 0], sizes = [16, 128], strides = [1, 1]} : vector<144x128xbf16> to vector<16x128xbf16>
    %c1 = arith.constant 1 : index
    %c0_14 = arith.constant 0 : index
    %c0_15 = arith.constant 0 : index
    %20 = vector.load %arg5[%c1, %c0_14, %c0_15] : memref<9x128x128xbf16, #tpu.memory_space<vmem>>, vector<1x128x128xbf16>
    %21 = vector.shape_cast %20 : vector<1x128x128xbf16> to vector<128x128xbf16>
    %cst_16 = arith.constant dense<0.000000e+00> : vector<16x128xf32>
    %22 = tpu.matmul %19, %21, %cst_16 {dimension_numbers = #tpu.dot_dimension_numbers<[1], [0], [0], [1], [0, 0, 1, 1], [], []>} : vector<16x128xbf16>, vector<128x128xbf16>, vector<16x128xf32> -> vector<16x128xf32>
    %23 = arith.addf %18, %22 : vector<16x128xf32>
    %24 = vector.extract_strided_slice %14 {offsets = [32, 0], sizes = [16, 128], strides = [1, 1]} : vector<144x128xbf16> to vector<16x128xbf16>
    %c2 = arith.constant 2 : index
    %c0_17 = arith.constant 0 : index
    %c0_18 = arith.constant 0 : index
    %25 = vector.load %arg5[%c2, %c0_17, %c0_18] : memref<9x128x128xbf16, #tpu.memory_space<vmem>>, vector<1x128x128xbf16>
    %26 = vector.shape_cast %25 : vector<1x128x128xbf16> to vector<128x128xbf16>
    %cst_19 = arith.constant dense<0.000000e+00> : vector<16x128xf32>
    %27 = tpu.matmul %24, %26, %cst_19 {dimension_numbers = #tpu.dot_dimension_numbers<[1], [0], [0], [1], [0, 0, 1, 1], [], []>} : vector<16x128xbf16>, vector<128x128xbf16>, vector<16x128xf32> -> vector<16x128xf32>
    %28 = arith.addf %23, %27 : vector<16x128xf32>
    %29 = vector.extract_strided_slice %14 {offsets = [48, 0], sizes = [16, 128], strides = [1, 1]} : vector<144x128xbf16> to vector<16x128xbf16>
    %c3 = arith.constant 3 : index
    %c0_20 = arith.constant 0 : index
    %c0_21 = arith.constant 0 : index
    %30 = vector.load %arg5[%c3, %c0_20, %c0_21] : memref<9x128x128xbf16, #tpu.memory_space<vmem>>, vector<1x128x128xbf16>
    %31 = vector.shape_cast %30 : vector<1x128x128xbf16> to vector<128x128xbf16>
    %cst_22 = arith.constant dense<0.000000e+00> : vector<16x128xf32>
    %32 = tpu.matmul %29, %31, %cst_22 {dimension_numbers = #tpu.dot_dimension_numbers<[1], [0], [0], [1], [0, 0, 1, 1], [], []>} : vector<16x128xbf16>, vector<128x128xbf16>, vector<16x128xf32> -> vector<16x128xf32>
    %33 = arith.addf %28, %32 : vector<16x128xf32>
    %34 = vector.extract_strided_slice %14 {offsets = [64, 0], sizes = [16, 128], strides = [1, 1]} : vector<144x128xbf16> to vector<16x128xbf16>
    %c4 = arith.constant 4 : index
    %c0_23 = arith.constant 0 : index
    %c0_24 = arith.constant 0 : index
    %35 = vector.load %arg5[%c4, %c0_23, %c0_24] : memref<9x128x128xbf16, #tpu.memory_space<vmem>>, vector<1x128x128xbf16>
    %36 = vector.shape_cast %35 : vector<1x128x128xbf16> to vector<128x128xbf16>
    %cst_25 = arith.constant dense<0.000000e+00> : vector<16x128xf32>
    %37 = tpu.matmul %34, %36, %cst_25 {dimension_numbers = #tpu.dot_dimension_numbers<[1], [0], [0], [1], [0, 0, 1, 1], [], []>} : vector<16x128xbf16>, vector<128x128xbf16>, vector<16x128xf32> -> vector<16x128xf32>
    %38 = arith.addf %33, %37 : vector<16x128xf32>
    %39 = vector.extract_strided_slice %14 {offsets = [80, 0], sizes = [16, 128], strides = [1, 1]} : vector<144x128xbf16> to vector<16x128xbf16>
    %c5 = arith.constant 5 : index
    %c0_26 = arith.constant 0 : index
    %c0_27 = arith.constant 0 : index
    %40 = vector.load %arg5[%c5, %c0_26, %c0_27] : memref<9x128x128xbf16, #tpu.memory_space<vmem>>, vector<1x128x128xbf16>
    %41 = vector.shape_cast %40 : vector<1x128x128xbf16> to vector<128x128xbf16>
    %cst_28 = arith.constant dense<0.000000e+00> : vector<16x128xf32>
    %42 = tpu.matmul %39, %41, %cst_28 {dimension_numbers = #tpu.dot_dimension_numbers<[1], [0], [0], [1], [0, 0, 1, 1], [], []>} : vector<16x128xbf16>, vector<128x128xbf16>, vector<16x128xf32> -> vector<16x128xf32>
    %43 = arith.addf %38, %42 : vector<16x128xf32>
    %44 = vector.extract_strided_slice %14 {offsets = [96, 0], sizes = [16, 128], strides = [1, 1]} : vector<144x128xbf16> to vector<16x128xbf16>
    %c6 = arith.constant 6 : index
    %c0_29 = arith.constant 0 : index
    %c0_30 = arith.constant 0 : index
    %45 = vector.load %arg5[%c6, %c0_29, %c0_30] : memref<9x128x128xbf16, #tpu.memory_space<vmem>>, vector<1x128x128xbf16>
    %46 = vector.shape_cast %45 : vector<1x128x128xbf16> to vector<128x128xbf16>
    %cst_31 = arith.constant dense<0.000000e+00> : vector<16x128xf32>
    %47 = tpu.matmul %44, %46, %cst_31 {dimension_numbers = #tpu.dot_dimension_numbers<[1], [0], [0], [1], [0, 0, 1, 1], [], []>} : vector<16x128xbf16>, vector<128x128xbf16>, vector<16x128xf32> -> vector<16x128xf32>
    %48 = arith.addf %43, %47 : vector<16x128xf32>
    %49 = vector.extract_strided_slice %14 {offsets = [112, 0], sizes = [16, 128], strides = [1, 1]} : vector<144x128xbf16> to vector<16x128xbf16>
    %c7 = arith.constant 7 : index
    %c0_32 = arith.constant 0 : index
    %c0_33 = arith.constant 0 : index
    %50 = vector.load %arg5[%c7, %c0_32, %c0_33] : memref<9x128x128xbf16, #tpu.memory_space<vmem>>, vector<1x128x128xbf16>
    %51 = vector.shape_cast %50 : vector<1x128x128xbf16> to vector<128x128xbf16>
    %cst_34 = arith.constant dense<0.000000e+00> : vector<16x128xf32>
    %52 = tpu.matmul %49, %51, %cst_34 {dimension_numbers = #tpu.dot_dimension_numbers<[1], [0], [0], [1], [0, 0, 1, 1], [], []>} : vector<16x128xbf16>, vector<128x128xbf16>, vector<16x128xf32> -> vector<16x128xf32>
    %53 = arith.addf %48, %52 : vector<16x128xf32>
    %54 = vector.extract_strided_slice %14 {offsets = [128, 0], sizes = [16, 128], strides = [1, 1]} : vector<144x128xbf16> to vector<16x128xbf16>
    %c8 = arith.constant 8 : index
    %c0_35 = arith.constant 0 : index
    %c0_36 = arith.constant 0 : index
    %55 = vector.load %arg5[%c8, %c0_35, %c0_36] : memref<9x128x128xbf16, #tpu.memory_space<vmem>>, vector<1x128x128xbf16>
    %56 = vector.shape_cast %55 : vector<1x128x128xbf16> to vector<128x128xbf16>
    %cst_37 = arith.constant dense<0.000000e+00> : vector<16x128xf32>
    %57 = tpu.matmul %54, %56, %cst_37 {dimension_numbers = #tpu.dot_dimension_numbers<[1], [0], [0], [1], [0, 0, 1, 1], [], []>} : vector<16x128xbf16>, vector<128x128xbf16>, vector<16x128xf32> -> vector<16x128xf32>
    %58 = arith.addf %53, %57 : vector<16x128xf32>
    %c0_38 = arith.constant 0 : index
    %c0_39 = arith.constant 0 : index
    %59 = vector.load %arg6[%c0_38, %c0_39] : memref<1x128xf32, #tpu.memory_space<vmem>>, vector<1x128xf32>
    %60 = vector.broadcast %59 : vector<1x128xf32> to vector<16x128xf32>
    %61 = arith.addf %58, %60 : vector<16x128xf32>
    %cst_40 = arith.constant 0.000000e+00 : f32
    %62 = vector.broadcast %cst_40 : f32 to vector<16x128xf32>
    %63 = arith.cmpf ogt, %61, %62 : vector<16x128xf32>
    %cst_41 = arith.constant 0.00999999977 : f32
    %64 = vector.broadcast %cst_41 : f32 to vector<16x128xf32>
    %65 = arith.mulf %64, %61 : vector<16x128xf32>
    %66 = arith.select %63, %61, %65 : vector<16x128xi1>, vector<16x128xf32>
    %67 = arith.truncf %66 : vector<16x128xf32> to vector<16x128xbf16>
    %68 = vector.extract_strided_slice %67 {offsets = [0, 0], sizes = [1, 128], strides = [1, 1]} : vector<16x128xbf16> to vector<1x128xbf16>
    %c0_42 = arith.constant 0 : index
    %c0_43 = arith.constant 0 : index
    %c0_44 = arith.constant 0 : index
    %69 = vector.load %arg7[%c0_42, %c0_43, %c0_44] : memref<16x128x128xbf16, #tpu.memory_space<vmem>>, vector<1x128x128xbf16>
    %70 = vector.shape_cast %69 : vector<1x128x128xbf16> to vector<128x128xbf16>
    %cst_45 = arith.constant dense<0.000000e+00> : vector<1x128xf32>
    %71 = tpu.matmul %68, %70, %cst_45 {dimension_numbers = #tpu.dot_dimension_numbers<[1], [0], [0], [1], [0, 0, 1, 1], [], []>} : vector<1x128xbf16>, vector<128x128xbf16>, vector<1x128xf32> -> vector<1x128xf32>
    %72 = vector.extract_strided_slice %67 {offsets = [1, 0], sizes = [1, 128], strides = [1, 1]} : vector<16x128xbf16> to vector<1x128xbf16>
    %c1_46 = arith.constant 1 : index
    %c0_47 = arith.constant 0 : index
    %c0_48 = arith.constant 0 : index
    %73 = vector.load %arg7[%c1_46, %c0_47, %c0_48] : memref<16x128x128xbf16, #tpu.memory_space<vmem>>, vector<1x128x128xbf16>
    %74 = vector.shape_cast %73 : vector<1x128x128xbf16> to vector<128x128xbf16>
    %cst_49 = arith.constant dense<0.000000e+00> : vector<1x128xf32>
    %75 = tpu.matmul %72, %74, %cst_49 {dimension_numbers = #tpu.dot_dimension_numbers<[1], [0], [0], [1], [0, 0, 1, 1], [], []>} : vector<1x128xbf16>, vector<128x128xbf16>, vector<1x128xf32> -> vector<1x128xf32>
    %76 = arith.addf %71, %75 : vector<1x128xf32>
    %77 = vector.extract_strided_slice %67 {offsets = [2, 0], sizes = [1, 128], strides = [1, 1]} : vector<16x128xbf16> to vector<1x128xbf16>
    %c2_50 = arith.constant 2 : index
    %c0_51 = arith.constant 0 : index
    %c0_52 = arith.constant 0 : index
    %78 = vector.load %arg7[%c2_50, %c0_51, %c0_52] : memref<16x128x128xbf16, #tpu.memory_space<vmem>>, vector<1x128x128xbf16>
    %79 = vector.shape_cast %78 : vector<1x128x128xbf16> to vector<128x128xbf16>
    %cst_53 = arith.constant dense<0.000000e+00> : vector<1x128xf32>
    %80 = tpu.matmul %77, %79, %cst_53 {dimension_numbers = #tpu.dot_dimension_numbers<[1], [0], [0], [1], [0, 0, 1, 1], [], []>} : vector<1x128xbf16>, vector<128x128xbf16>, vector<1x128xf32> -> vector<1x128xf32>
    %81 = arith.addf %76, %80 : vector<1x128xf32>
    %82 = vector.extract_strided_slice %67 {offsets = [3, 0], sizes = [1, 128], strides = [1, 1]} : vector<16x128xbf16> to vector<1x128xbf16>
    %c3_54 = arith.constant 3 : index
    %c0_55 = arith.constant 0 : index
    %c0_56 = arith.constant 0 : index
    %83 = vector.load %arg7[%c3_54, %c0_55, %c0_56] : memref<16x128x128xbf16, #tpu.memory_space<vmem>>, vector<1x128x128xbf16>
    %84 = vector.shape_cast %83 : vector<1x128x128xbf16> to vector<128x128xbf16>
    %cst_57 = arith.constant dense<0.000000e+00> : vector<1x128xf32>
    %85 = tpu.matmul %82, %84, %cst_57 {dimension_numbers = #tpu.dot_dimension_numbers<[1], [0], [0], [1], [0, 0, 1, 1], [], []>} : vector<1x128xbf16>, vector<128x128xbf16>, vector<1x128xf32> -> vector<1x128xf32>
    %86 = arith.addf %81, %85 : vector<1x128xf32>
    %87 = vector.extract_strided_slice %67 {offsets = [4, 0], sizes = [1, 128], strides = [1, 1]} : vector<16x128xbf16> to vector<1x128xbf16>
    %c4_58 = arith.constant 4 : index
    %c0_59 = arith.constant 0 : index
    %c0_60 = arith.constant 0 : index
    %88 = vector.load %arg7[%c4_58, %c0_59, %c0_60] : memref<16x128x128xbf16, #tpu.memory_space<vmem>>, vector<1x128x128xbf16>
    %89 = vector.shape_cast %88 : vector<1x128x128xbf16> to vector<128x128xbf16>
    %cst_61 = arith.constant dense<0.000000e+00> : vector<1x128xf32>
    %90 = tpu.matmul %87, %89, %cst_61 {dimension_numbers = #tpu.dot_dimension_numbers<[1], [0], [0], [1], [0, 0, 1, 1], [], []>} : vector<1x128xbf16>, vector<128x128xbf16>, vector<1x128xf32> -> vector<1x128xf32>
    %91 = arith.addf %86, %90 : vector<1x128xf32>
    %92 = vector.extract_strided_slice %67 {offsets = [5, 0], sizes = [1, 128], strides = [1, 1]} : vector<16x128xbf16> to vector<1x128xbf16>
    %c5_62 = arith.constant 5 : index
    %c0_63 = arith.constant 0 : index
    %c0_64 = arith.constant 0 : index
    %93 = vector.load %arg7[%c5_62, %c0_63, %c0_64] : memref<16x128x128xbf16, #tpu.memory_space<vmem>>, vector<1x128x128xbf16>
    %94 = vector.shape_cast %93 : vector<1x128x128xbf16> to vector<128x128xbf16>
    %cst_65 = arith.constant dense<0.000000e+00> : vector<1x128xf32>
    %95 = tpu.matmul %92, %94, %cst_65 {dimension_numbers = #tpu.dot_dimension_numbers<[1], [0], [0], [1], [0, 0, 1, 1], [], []>} : vector<1x128xbf16>, vector<128x128xbf16>, vector<1x128xf32> -> vector<1x128xf32>
    %96 = arith.addf %91, %95 : vector<1x128xf32>
    %97 = vector.extract_strided_slice %67 {offsets = [6, 0], sizes = [1, 128], strides = [1, 1]} : vector<16x128xbf16> to vector<1x128xbf16>
    %c6_66 = arith.constant 6 : index
    %c0_67 = arith.constant 0 : index
    %c0_68 = arith.constant 0 : index
    %98 = vector.load %arg7[%c6_66, %c0_67, %c0_68] : memref<16x128x128xbf16, #tpu.memory_space<vmem>>, vector<1x128x128xbf16>
    %99 = vector.shape_cast %98 : vector<1x128x128xbf16> to vector<128x128xbf16>
    %cst_69 = arith.constant dense<0.000000e+00> : vector<1x128xf32>
    %100 = tpu.matmul %97, %99, %cst_69 {dimension_numbers = #tpu.dot_dimension_numbers<[1], [0], [0], [1], [0, 0, 1, 1], [], []>} : vector<1x128xbf16>, vector<128x128xbf16>, vector<1x128xf32> -> vector<1x128xf32>
    %101 = arith.addf %96, %100 : vector<1x128xf32>
    %102 = vector.extract_strided_slice %67 {offsets = [7, 0], sizes = [1, 128], strides = [1, 1]} : vector<16x128xbf16> to vector<1x128xbf16>
    %c7_70 = arith.constant 7 : index
    %c0_71 = arith.constant 0 : index
    %c0_72 = arith.constant 0 : index
    %103 = vector.load %arg7[%c7_70, %c0_71, %c0_72] : memref<16x128x128xbf16, #tpu.memory_space<vmem>>, vector<1x128x128xbf16>
    %104 = vector.shape_cast %103 : vector<1x128x128xbf16> to vector<128x128xbf16>
    %cst_73 = arith.constant dense<0.000000e+00> : vector<1x128xf32>
    %105 = tpu.matmul %102, %104, %cst_73 {dimension_numbers = #tpu.dot_dimension_numbers<[1], [0], [0], [1], [0, 0, 1, 1], [], []>} : vector<1x128xbf16>, vector<128x128xbf16>, vector<1x128xf32> -> vector<1x128xf32>
    %106 = arith.addf %101, %105 : vector<1x128xf32>
    %107 = vector.extract_strided_slice %67 {offsets = [8, 0], sizes = [1, 128], strides = [1, 1]} : vector<16x128xbf16> to vector<1x128xbf16>
    %c8_74 = arith.constant 8 : index
    %c0_75 = arith.constant 0 : index
    %c0_76 = arith.constant 0 : index
    %108 = vector.load %arg7[%c8_74, %c0_75, %c0_76] : memref<16x128x128xbf16, #tpu.memory_space<vmem>>, vector<1x128x128xbf16>
    %109 = vector.shape_cast %108 : vector<1x128x128xbf16> to vector<128x128xbf16>
    %cst_77 = arith.constant dense<0.000000e+00> : vector<1x128xf32>
    %110 = tpu.matmul %107, %109, %cst_77 {dimension_numbers = #tpu.dot_dimension_numbers<[1], [0], [0], [1], [0, 0, 1, 1], [], []>} : vector<1x128xbf16>, vector<128x128xbf16>, vector<1x128xf32> -> vector<1x128xf32>
    %111 = arith.addf %106, %110 : vector<1x128xf32>
    %112 = vector.extract_strided_slice %67 {offsets = [9, 0], sizes = [1, 128], strides = [1, 1]} : vector<16x128xbf16> to vector<1x128xbf16>
    %c9 = arith.constant 9 : index
    %c0_78 = arith.constant 0 : index
    %c0_79 = arith.constant 0 : index
    %113 = vector.load %arg7[%c9, %c0_78, %c0_79] : memref<16x128x128xbf16, #tpu.memory_space<vmem>>, vector<1x128x128xbf16>
    %114 = vector.shape_cast %113 : vector<1x128x128xbf16> to vector<128x128xbf16>
    %cst_80 = arith.constant dense<0.000000e+00> : vector<1x128xf32>
    %115 = tpu.matmul %112, %114, %cst_80 {dimension_numbers = #tpu.dot_dimension_numbers<[1], [0], [0], [1], [0, 0, 1, 1], [], []>} : vector<1x128xbf16>, vector<128x128xbf16>, vector<1x128xf32> -> vector<1x128xf32>
    %116 = arith.addf %111, %115 : vector<1x128xf32>
    %117 = vector.extract_strided_slice %67 {offsets = [10, 0], sizes = [1, 128], strides = [1, 1]} : vector<16x128xbf16> to vector<1x128xbf16>
    %c10 = arith.constant 10 : index
    %c0_81 = arith.constant 0 : index
    %c0_82 = arith.constant 0 : index
    %118 = vector.load %arg7[%c10, %c0_81, %c0_82] : memref<16x128x128xbf16, #tpu.memory_space<vmem>>, vector<1x128x128xbf16>
    %119 = vector.shape_cast %118 : vector<1x128x128xbf16> to vector<128x128xbf16>
    %cst_83 = arith.constant dense<0.000000e+00> : vector<1x128xf32>
    %120 = tpu.matmul %117, %119, %cst_83 {dimension_numbers = #tpu.dot_dimension_numbers<[1], [0], [0], [1], [0, 0, 1, 1], [], []>} : vector<1x128xbf16>, vector<128x128xbf16>, vector<1x128xf32> -> vector<1x128xf32>
    %121 = arith.addf %116, %120 : vector<1x128xf32>
    %122 = vector.extract_strided_slice %67 {offsets = [11, 0], sizes = [1, 128], strides = [1, 1]} : vector<16x128xbf16> to vector<1x128xbf16>
    %c11 = arith.constant 11 : index
    %c0_84 = arith.constant 0 : index
    %c0_85 = arith.constant 0 : index
    %123 = vector.load %arg7[%c11, %c0_84, %c0_85] : memref<16x128x128xbf16, #tpu.memory_space<vmem>>, vector<1x128x128xbf16>
    %124 = vector.shape_cast %123 : vector<1x128x128xbf16> to vector<128x128xbf16>
    %cst_86 = arith.constant dense<0.000000e+00> : vector<1x128xf32>
    %125 = tpu.matmul %122, %124, %cst_86 {dimension_numbers = #tpu.dot_dimension_numbers<[1], [0], [0], [1], [0, 0, 1, 1], [], []>} : vector<1x128xbf16>, vector<128x128xbf16>, vector<1x128xf32> -> vector<1x128xf32>
    %126 = arith.addf %121, %125 : vector<1x128xf32>
    %127 = vector.extract_strided_slice %67 {offsets = [12, 0], sizes = [1, 128], strides = [1, 1]} : vector<16x128xbf16> to vector<1x128xbf16>
    %c12 = arith.constant 12 : index
    %c0_87 = arith.constant 0 : index
    %c0_88 = arith.constant 0 : index
    %128 = vector.load %arg7[%c12, %c0_87, %c0_88] : memref<16x128x128xbf16, #tpu.memory_space<vmem>>, vector<1x128x128xbf16>
    %129 = vector.shape_cast %128 : vector<1x128x128xbf16> to vector<128x128xbf16>
    %cst_89 = arith.constant dense<0.000000e+00> : vector<1x128xf32>
    %130 = tpu.matmul %127, %129, %cst_89 {dimension_numbers = #tpu.dot_dimension_numbers<[1], [0], [0], [1], [0, 0, 1, 1], [], []>} : vector<1x128xbf16>, vector<128x128xbf16>, vector<1x128xf32> -> vector<1x128xf32>
    %131 = arith.addf %126, %130 : vector<1x128xf32>
    %132 = vector.extract_strided_slice %67 {offsets = [13, 0], sizes = [1, 128], strides = [1, 1]} : vector<16x128xbf16> to vector<1x128xbf16>
    %c13 = arith.constant 13 : index
    %c0_90 = arith.constant 0 : index
    %c0_91 = arith.constant 0 : index
    %133 = vector.load %arg7[%c13, %c0_90, %c0_91] : memref<16x128x128xbf16, #tpu.memory_space<vmem>>, vector<1x128x128xbf16>
    %134 = vector.shape_cast %133 : vector<1x128x128xbf16> to vector<128x128xbf16>
    %cst_92 = arith.constant dense<0.000000e+00> : vector<1x128xf32>
    %135 = tpu.matmul %132, %134, %cst_92 {dimension_numbers = #tpu.dot_dimension_numbers<[1], [0], [0], [1], [0, 0, 1, 1], [], []>} : vector<1x128xbf16>, vector<128x128xbf16>, vector<1x128xf32> -> vector<1x128xf32>
    %136 = arith.addf %131, %135 : vector<1x128xf32>
    %137 = vector.extract_strided_slice %67 {offsets = [14, 0], sizes = [1, 128], strides = [1, 1]} : vector<16x128xbf16> to vector<1x128xbf16>
    %c14 = arith.constant 14 : index
    %c0_93 = arith.constant 0 : index
    %c0_94 = arith.constant 0 : index
    %138 = vector.load %arg7[%c14, %c0_93, %c0_94] : memref<16x128x128xbf16, #tpu.memory_space<vmem>>, vector<1x128x128xbf16>
    %139 = vector.shape_cast %138 : vector<1x128x128xbf16> to vector<128x128xbf16>
    %cst_95 = arith.constant dense<0.000000e+00> : vector<1x128xf32>
    %140 = tpu.matmul %137, %139, %cst_95 {dimension_numbers = #tpu.dot_dimension_numbers<[1], [0], [0], [1], [0, 0, 1, 1], [], []>} : vector<1x128xbf16>, vector<128x128xbf16>, vector<1x128xf32> -> vector<1x128xf32>
    %141 = arith.addf %136, %140 : vector<1x128xf32>
    %142 = vector.extract_strided_slice %67 {offsets = [15, 0], sizes = [1, 128], strides = [1, 1]} : vector<16x128xbf16> to vector<1x128xbf16>
    %c15 = arith.constant 15 : index
    %c0_96 = arith.constant 0 : index
    %c0_97 = arith.constant 0 : index
    %143 = vector.load %arg7[%c15, %c0_96, %c0_97] : memref<16x128x128xbf16, #tpu.memory_space<vmem>>, vector<1x128x128xbf16>
    %144 = vector.shape_cast %143 : vector<1x128x128xbf16> to vector<128x128xbf16>
    %cst_98 = arith.constant dense<0.000000e+00> : vector<1x128xf32>
    %145 = tpu.matmul %142, %144, %cst_98 {dimension_numbers = #tpu.dot_dimension_numbers<[1], [0], [0], [1], [0, 0, 1, 1], [], []>} : vector<1x128xbf16>, vector<128x128xbf16>, vector<1x128xf32> -> vector<1x128xf32>
    %146 = arith.addf %141, %145 : vector<1x128xf32>
    %c0_99 = arith.constant 0 : index
    %c0_100 = arith.constant 0 : index
    %147 = vector.load %arg8[%c0_99, %c0_100] : memref<1x128xf32, #tpu.memory_space<vmem>>, vector<1x128xf32>
    %148 = arith.addf %146, %147 : vector<1x128xf32>
    %c0_101 = arith.constant 0 : index
    %c0_102 = arith.constant 0 : index
    %c0_103 = arith.constant 0 : index
    %149 = vector.load %arg11[%c0_101, %c0_102, %c0_103] : memref<1x1x128xf32, #tpu.memory_space<vmem>>, vector<1x1x128xf32>
    %150 = vector.shape_cast %149 : vector<1x1x128xf32> to vector<1x128xf32>
    %151 = vector.shape_cast %148 : vector<1x128xf32> to vector<1x1x128xf32>
    tpu.vector_store %arg11[%c0_101, %c0_102, %c0_103], %151 {strides = array<i32>} : memref<1x1x128xf32, #tpu.memory_space<vmem>>, vector<1x1x128xf32>,
    %c0_104 = arith.constant 0 : index
    %c0_105 = arith.constant 0 : index
    %152 = vector.load %arg9[%c0_104, %c0_105] : memref<128x128xf32, #tpu.memory_space<vmem>>, vector<128x128xf32>
    %cst_106 = arith.constant dense<0.000000e+00> : vector<1x128xf32>
    %153 = tpu.matmul %148, %152, %cst_106 {dimension_numbers = #tpu.dot_dimension_numbers<[1], [0], [0], [1], [0, 0, 1, 1], [], []>} : vector<1x128xf32>, vector<128x128xf32>, vector<1x128xf32> -> vector<1x128xf32>
    %c0_107 = arith.constant 0 : index
    %c0_108 = arith.constant 0 : index
    %154 = vector.load %arg10[%c0_107, %c0_108] : memref<1x128xf32, #tpu.memory_space<vmem>>, vector<1x128xf32>
    %155 = arith.addf %153, %154 : vector<1x128xf32>
    %c0_109 = arith.constant 0 : index
    %c0_110 = arith.constant 0 : index
    %c0_111 = arith.constant 0 : index
    %156 = vector.load %arg12[%c0_109, %c0_110, %c0_111] : memref<1x1x128xf32, #tpu.memory_space<vmem>>, vector<1x1x128xf32>
    %157 = vector.shape_cast %156 : vector<1x1x128xf32> to vector<1x128xf32>
    %158 = vector.shape_cast %155 : vector<1x128xf32> to vector<1x1x128xf32>
    tpu.vector_store %arg12[%c0_109, %c0_110, %c0_111], %158 {strides = array<i32>} : memref<1x1x128xf32, #tpu.memory_space<vmem>>, vector<1x1x128xf32>,
    return
  }
  func.func @transform_0(%arg0: i32) -> (i32, i32) {
    %c0_i32 = arith.constant 0 : i32
    %c0_i32_0 = arith.constant 0 : i32
    return %arg0, %c0_i32 : i32, i32
  }
  func.func @transform_1(%arg0: i32) -> (i32, i32) {
    %c0_i32 = arith.constant 0 : i32
    %c0_i32_0 = arith.constant 0 : i32
    %c0_i32_1 = arith.constant 0 : i32
    return %c0_i32, %c0_i32_0 : i32, i32
  }
  func.func @transform_2(%arg0: i32) -> (i32, i32) {
    %c0_i32 = arith.constant 0 : i32
    %c0_i32_0 = arith.constant 0 : i32
    %c0_i32_1 = arith.constant 0 : i32
    return %c0_i32, %c0_i32_0 : i32, i32
  }
  func.func @transform_3(%arg0: i32) -> (i32, i32) {
    %c0_i32 = arith.constant 0 : i32
    %c0_i32_0 = arith.constant 0 : i32
    %c0_i32_1 = arith.constant 0 : i32
    return %c0_i32, %c0_i32_0 : i32, i32
  }
  func.func @transform_4(%arg0: i32) -> (i32, i32, i32) {
    %c0_i32 = arith.constant 0 : i32
    %c0_i32_0 = arith.constant 0 : i32
    %c0_i32_1 = arith.constant 0 : i32
    %c0_i32_2 = arith.constant 0 : i32
    return %c0_i32, %c0_i32_0, %c0_i32_1 : i32, i32, i32
  }
  func.func @transform_5(%arg0: i32) -> (i32, i32) {
    %c0_i32 = arith.constant 0 : i32
    %c0_i32_0 = arith.constant 0 : i32
    %c0_i32_1 = arith.constant 0 : i32
    return %c0_i32, %c0_i32_0 : i32, i32
  }
  func.func @transform_6(%arg0: i32) -> (i32, i32, i32) {
    %c0_i32 = arith.constant 0 : i32
    %c0_i32_0 = arith.constant 0 : i32
    %c0_i32_1 = arith.constant 0 : i32
    %c0_i32_2 = arith.constant 0 : i32
    return %c0_i32, %c0_i32_0, %c0_i32_1 : i32, i32, i32
  }
  func.func @transform_7(%arg0: i32) -> (i32, i32) {
    %c0_i32 = arith.constant 0 : i32
    %c0_i32_0 = arith.constant 0 : i32
    %c0_i32_1 = arith.constant 0 : i32
    return %c0_i32, %c0_i32_0 : i32, i32
  }
  func.func @transform_8(%arg0: i32) -> (i32, i32) {
    %c0_i32 = arith.constant 0 : i32
    %c0_i32_0 = arith.constant 0 : i32
    %c0_i32_1 = arith.constant 0 : i32
    return %c0_i32, %c0_i32_0 : i32, i32
  }
  func.func @transform_9(%arg0: i32) -> (i32, i32) {
    %c0_i32 = arith.constant 0 : i32
    %c0_i32_0 = arith.constant 0 : i32
    %c0_i32_1 = arith.constant 0 : i32
    return %c0_i32, %c0_i32_0 : i32, i32
  }
  func.func @transform_10(%arg0: i32) -> (i32, i32, i32) {
    %c0_i32 = arith.constant 0 : i32
    %c0_i32_0 = arith.constant 0 : i32
    %c0_i32_1 = arith.constant 0 : i32
    return %arg0, %c0_i32, %c0_i32_0 : i32, i32, i32
  }
  func.func @transform_11(%arg0: i32) -> (i32, i32, i32) {
    %c0_i32 = arith.constant 0 : i32
    %c0_i32_0 = arith.constant 0 : i32
    %c0_i32_1 = arith.constant 0 : i32
    return %arg0, %c0_i32, %c0_i32_0 : i32, i32, i32
  }
}

</mosaic_0001>

<llo_original>
// kernel: autoencoder_forward.3
$region0: #{autoencoder_forward.3}
  #allocation0 [shape = 'u32[]', space=smem, size = 0x4, offset = 0x4, fixed_abs, tag = 'smem constant byte address 0x4 - core index']
  #allocation1 [shape = 'u32[144,128]{1,0:T(1,128)}', space=vmem, size = 0x12000, scoped, tag = 'internal scratch']
  %s0 = inlined_call_operand.vmem [shape: f32[1024,8], index: 0, kind: input, shape index: {}]
  %s1 = inlined_call_operand.vmem [shape: f32[2,1,128], index: 1, kind: input, shape index: {}]
  %s2 = inlined_call_operand.vmem [shape: f32[8,128], index: 2, kind: input, shape index: {}]
  %s3 = inlined_call_operand.vmem [shape: bf16[128,128], index: 3, kind: input, shape index: {}]
  %s4 = inlined_call_operand.vmem [shape: f32[1,128], index: 4, kind: input, shape index: {}]
  %s5 = inlined_call_operand.vmem [shape: bf16[128,128], index: 5, kind: input, shape index: {}]
  %s6 = inlined_call_operand.vmem [shape: f32[1,128], index: 6, kind: input, shape index: {}]
  %s7 = inlined_call_operand.vmem [shape: bf16[1024,128], index: 7, kind: output, shape index: {}]
  %s8 = sld [smem:[#allocation0]]
  $region61: #{autoencoder_forward.3} parent=0
    _
  %s10 = ssub.s32 1, %s8
  %s11 = scalar_select 0, %s10, %s8
  loop: start=0, step=1, limit=6
  $region2: #{autoencoder_forward.3} parent=0 // loop_pre_header
    _
  $region3: #{autoencoder_forward.3} parent=0 // loop_header
    %s13 = sphi 0, %s17
    %p14 = scmp.ge.s32.totalorder %s13, 6
    %s20 = sphi 0, %s32
    %s21 = sphi 0, %s28
    %s22 = sphi 0, %s20
    %s23 = sphi 0, %s21
    %s24 = sphi 0, %s22
    %s25 = sphi 0, %s23
    %s39 = sphi 0, %s41
    %s42 = sphi 0, %s39
    %s43 = sphi 0, %s42
    %s59 = sphi 0, %s43
    %s65 = sphi 0, %s67
    %s68 = sphi 0, %s65
    %s69 = sphi 0, %s68
    %s85 = sphi 0, %s69
    %s89 = sphi 0, %s89
    %s91 = sphi 0, %s89
    %s92 = sphi 0, %s91
    %s106 = sphi 0, %s92
    %s110 = sphi 0, %s110
    %s112 = sphi 0, %s110
    %s113 = sphi 0, %s112
    %s127 = sphi 0, %s113
    %s131 = sphi 0, %s131
    %s133 = sphi 0, %s131
    %s134 = sphi 0, %s133
    %s148 = sphi 0, %s134
    %s152 = sphi 0, %s152
    %s154 = sphi 0, %s152
    %s155 = sphi 0, %s154
    %s169 = sphi 0, %s155
    %s173 = sphi 0, %s173
    %s175 = sphi 0, %s173
    %s176 = sphi 0, %s175
    %s190 = sphi 0, %s176
    %s200 = sphi 0, %s202
    %s203 = sphi 0, %s200
    %s204 = sphi 0, %s203
    %s220 = sphi 0, %s204
  $region4: #{autoencoder_forward.3} parent=0 // loop_header_branch
    %16 = sbr.rel (%p14) target = $region8
  $region5: #{autoencoder_forward.3} parent=0 // loop_body
    %s18 = ssub.s32 %s13, 1
    %s19 = ssub.s32 %s13, 2
    %s26 = sadd.s32 1, %s21
    %p27 = scmp.ge.s32.totalorder %s26, 2
    %s28 = scalar_select %p27, 0, %s26
    %s29 = sadd.s32 1, %s20
    %s30 = scalar_select %p27, %s29, %s20
    %p31 = scmp.ge.s32.totalorder %s30, 2
    %s32 = scalar_select %p31, 0, %s30
    %s33 = smul.u32 %s20, 2
    %s34 = sadd.s32 %s33, %s21
    %s35 = smul.u32 %s32, 2
    %s36 = sadd.s32 %s35, %s28
    %s37 = ssub.s32 %s34, %s36
    %p38 = scmp.eq.s32.totalorder %s37, 0
    %s40 = sadd.s32 %s39, 1
    %s41 = scalar_select %p38, %s39, %s40
    %p44 = pneg %p38
    %p45 = scmp.eq.s32.totalorder %s13, 3
    %p46 = por %p44, %p45
    %p47 = scmp.ne.s32.totalorder %s39, %s42
    %p48 = scmp.eq.s32.totalorder %s13, 0
    %p49 = por %p47, %p48
    %p50 = scmp.ne.s32.totalorder %s39, %s42
    %p51 = scmp.eq.s32.totalorder %s18, 3
    %p52 = por %p50, %p51
    %p53 = scmp.ne.s32.totalorder %s42, %s43
    %p54 = scmp.eq.s32.totalorder %s18, 0
    %p55 = por %p53, %p54
    %p56 = scmp.ne.s32.totalorder %s42, %s43
    %p57 = scmp.eq.s32.totalorder %s19, 3
    %p58 = por %p56, %p57
    %p60 = scmp.ne.s32.totalorder %s43, %s59
    %p61 = scmp.eq.s32.totalorder %s19, 0
    %p62 = por %p60, %p61
    %s63 = ssub.s32 %s20, %s32
    %p64 = scmp.eq.s32.totalorder %s63, 0
    %s66 = sadd.s32 %s65, 1
    %s67 = scalar_select %p64, %s65, %s66
    %p70 = pneg %p64
    %p71 = scmp.eq.s32.totalorder %s13, 3
    %p72 = por %p70, %p71
    %p73 = scmp.ne.s32.totalorder %s65, %s68
    %p74 = scmp.eq.s32.totalorder %s13, 0
    %p75 = por %p73, %p74
    %p76 = scmp.ne.s32.totalorder %s65, %s68
    %p77 = scmp.eq.s32.totalorder %s18, 3
    %p78 = por %p76, %p77
    %p79 = scmp.ne.s32.totalorder %s68, %s69
    %p80 = scmp.eq.s32.totalorder %s18, 0
    %p81 = por %p79, %p80
    %p82 = scmp.ne.s32.totalorder %s68, %s69
    %p83 = scmp.eq.s32.totalorder %s19, 3
    %p84 = por %p82, %p83
    %p86 = scmp.ne.s32.totalorder %s69, %s85
    %p87 = scmp.eq.s32.totalorder %s19, 0
    %p88 = por %p86, %p87
    %s90 = sadd.s32 %s89, 1
    %p93 = scmp.eq.s32.totalorder %s13, 3
    %p94 = scmp.ne.s32.totalorder %s89, %s91
    %p95 = scmp.eq.s32.totalorder %s13, 0
    %p96 = por %p94, %p95
    %p97 = scmp.ne.s32.totalorder %s89, %s91
    %p98 = scmp.eq.s32.totalorder %s18, 3
    %p99 = por %p97, %p98
    %p100 = scmp.ne.s32.totalorder %s91, %s92
    %p101 = scmp.eq.s32.totalorder %s18, 0
    %p102 = por %p100, %p101
    %p103 = scmp.ne.s32.totalorder %s91, %s92
    %p104 = scmp.eq.s32.totalorder %s19, 3
    %p105 = por %p103, %p104
    %p107 = scmp.ne.s32.totalorder %s92, %s106
    %p108 = scmp.eq.s32.totalorder %s19, 0
    %p109 = por %p107, %p108
    %s111 = sadd.s32 %s110, 1
    %p114 = scmp.eq.s32.totalorder %s13, 3
    %p115 = scmp.ne.s32.totalorder %s110, %s112
    %p116 = scmp.eq.s32.totalorder %s13, 0
    %p117 = por %p115, %p116
    %p118 = scmp.ne.s32.totalorder %s110, %s112
    %p119 = scmp.eq.s32.totalorder %s18, 3
    %p120 = por %p118, %p119
    %p121 = scmp.ne.s32.totalorder %s112, %s113
    %p122 = scmp.eq.s32.totalorder %s18, 0
    %p123 = por %p121, %p122
    %p124 = scmp.ne.s32.totalorder %s112, %s113
    %p125 = scmp.eq.s32.totalorder %s19, 3
    %p126 = por %p124, %p125
    %p128 = scmp.ne.s32.totalorder %s113, %s127
    %p129 = scmp.eq.s32.totalorder %s19, 0
    %p130 = por %p128, %p129
    %s132 = sadd.s32 %s131, 1
    %p135 = scmp.eq.s32.totalorder %s13, 3
    %p136 = scmp.ne.s32.totalorder %s131, %s133
    %p137 = scmp.eq.s32.totalorder %s13, 0
    %p138 = por %p136, %p137
    %p139 = scmp.ne.s32.totalorder %s131, %s133
    %p140 = scmp.eq.s32.totalorder %s18, 3
    %p141 = por %p139, %p140
    %p142 = scmp.ne.s32.totalorder %s133, %s134
    %p143 = scmp.eq.s32.totalorder %s18, 0
    %p144 = por %p142, %p143
    %p145 = scmp.ne.s32.totalorder %s133, %s134
    %p146 = scmp.eq.s32.totalorder %s19, 3
    %p147 = por %p145, %p146
    %p149 = scmp.ne.s32.totalorder %s134, %s148
    %p150 = scmp.eq.s32.totalorder %s19, 0
    %p151 = por %p149, %p150
    %s153 = sadd.s32 %s152, 1
    %p156 = scmp.eq.s32.totalorder %s13, 3
    %p157 = scmp.ne.s32.totalorder %s152, %s154
    %p158 = scmp.eq.s32.totalorder %s13, 0
    %p159 = por %p157, %p158
    %p160 = scmp.ne.s32.totalorder %s152, %s154
    %p161 = scmp.eq.s32.totalorder %s18, 3
    %p162 = por %p160, %p161
    %p163 = scmp.ne.s32.totalorder %s154, %s155
    %p164 = scmp.eq.s32.totalorder %s18, 0
    %p165 = por %p163, %p164
    %p166 = scmp.ne.s32.totalorder %s154, %s155
    %p167 = scmp.eq.s32.totalorder %s19, 3
    %p168 = por %p166, %p167
    %p170 = scmp.ne.s32.totalorder %s155, %s169
    %p171 = scmp.eq.s32.totalorder %s19, 0
    %p172 = por %p170, %p171
    %s174 = sadd.s32 %s173, 1
    %p177 = scmp.eq.s32.totalorder %s13, 3
    %p178 = scmp.ne.s32.totalorder %s173, %s175
    %p179 = scmp.eq.s32.totalorder %s13, 0
    %p180 = por %p178, %p179
    %p181 = scmp.ne.s32.totalorder %s173, %s175
    %p182 = scmp.eq.s32.totalorder %s18, 3
    %p183 = por %p181, %p182
    %p184 = scmp.ne.s32.totalorder %s175, %s176
    %p185 = scmp.eq.s32.totalorder %s18, 0
    %p186 = por %p184, %p185
    %p187 = scmp.ne.s32.totalorder %s175, %s176
    %p188 = scmp.eq.s32.totalorder %s19, 3
    %p189 = por %p187, %p188
    %p191 = scmp.ne.s32.totalorder %s176, %s190
    %p192 = scmp.eq.s32.totalorder %s19, 0
    %p193 = por %p191, %p192
    %s194 = smul.u32 %s20, 2
    %s195 = sadd.s32 %s194, %s21
    %s196 = smul.u32 %s32, 2
    %s197 = sadd.s32 %s196, %s28
    %s198 = ssub.s32 %s195, %s197
    %p199 = scmp.eq.s32.totalorder %s198, 0
    %s201 = sadd.s32 %s200, 1
    %s202 = scalar_select %p199, %s200, %s201
    %p205 = pneg %p199
    %p206 = scmp.eq.s32.totalorder %s13, 3
    %p207 = por %p205, %p206
    %p208 = scmp.ne.s32.totalorder %s200, %s203
    %p209 = scmp.eq.s32.totalorder %s13, 0
    %p210 = por %p208, %p209
    %p211 = scmp.ne.s32.totalorder %s200, %s203
    %p212 = scmp.eq.s32.totalorder %s18, 3
    %p213 = por %p211, %p212
    %p214 = scmp.ne.s32.totalorder %s203, %s204
    %p215 = scmp.eq.s32.totalorder %s18, 0
    %p216 = por %p214, %p215
    %p217 = scmp.ne.s32.totalorder %s203, %s204
    %p218 = scmp.eq.s32.totalorder %s19, 3
    %p219 = por %p217, %p218
    %p221 = scmp.ne.s32.totalorder %s204, %s220
    %p222 = scmp.eq.s32.totalorder %s19, 0
    %p223 = por %p221, %p222
    %p224 = scmp.le.s32.totalorder 1, %s13
    %p225 = scmp.lt.s32.totalorder %s13, 5
    %p226 = pnand %p224, %p225
    %p227 = pneg %p226
    // Predicated region
    $region9: #{autoencoder_forward.3} parent=5 // pred_check
      _
    $region10: #{autoencoder_forward.3} parent=5 // pred_check_branch
      %229 = sbr.rel (%p226) target = $region12
    $region11: #{autoencoder_forward.3} parent=5 // pred_region
      %s230 = ssub.s32 %s13, 1
      // Predicated region
      $region13: #{autoencoder_forward.3} parent=11 // pred_check
        %p231 = pneg %p102
      $region14: #{autoencoder_forward.3} parent=11 // pred_check_branch
        %233 = sbr.rel (%p231) target = $region16
      $region15: #{autoencoder_forward.3} parent=11 // pred_region
        _
      $region16: #{autoencoder_forward.3} parent=11 // pred_fallthru
        _
      // Predicated region
      $region17: #{autoencoder_forward.3} parent=11 // pred_check
        %p234 = pneg %p123
      $region18: #{autoencoder_forward.3} parent=11 // pred_check_branch
        %236 = sbr.rel (%p234) target = $region20
      $region19: #{autoencoder_forward.3} parent=11 // pred_region
        _
      $region20: #{autoencoder_forward.3} parent=11 // pred_fallthru
        _
      // Predicated region
      $region21: #{autoencoder_forward.3} parent=11 // pred_check
        %p237 = pneg %p144
      $region22: #{autoencoder_forward.3} parent=11 // pred_check_branch
        %239 = sbr.rel (%p237) target = $region24
      $region23: #{autoencoder_forward.3} parent=11 // pred_region
        _
      $region24: #{autoencoder_forward.3} parent=11 // pred_fallthru
        _
      // Predicated region
      $region25: #{autoencoder_forward.3} parent=11 // pred_check
        %p240 = pneg %p165
      $region26: #{autoencoder_forward.3} parent=11 // pred_check_branch
        %242 = sbr.rel (%p240) target = $region28
      $region27: #{autoencoder_forward.3} parent=11 // pred_region
        _
      $region28: #{autoencoder_forward.3} parent=11 // pred_fallthru
        _
      // Predicated region
      $region29: #{autoencoder_forward.3} parent=11 // pred_check
        %p243 = pneg %p186
      $region30: #{autoencoder_forward.3} parent=11 // pred_check_branch
        %245 = sbr.rel (%p243) target = $region32
      $region31: #{autoencoder_forward.3} parent=11 // pred_region
        _
      $region32: #{autoencoder_forward.3} parent=11 // pred_fallthru
        _
    $region12: #{autoencoder_forward.3} parent=5 // pred_fallthru
      _
    %p246 = scmp.lt.s32.totalorder %s13, 4
    // Predicated region
    $region33: #{autoencoder_forward.3} parent=5 // pred_check
      %p247 = pneg %p246
    $region34: #{autoencoder_forward.3} parent=5 // pred_check_branch
      %249 = sbr.rel (%p247) target = $region36
    $region35: #{autoencoder_forward.3} parent=5 // pred_region
      // Predicated region
      $region37: #{autoencoder_forward.3} parent=35 // pred_check
        %p250 = pneg %p49
      $region38: #{autoencoder_forward.3} parent=35 // pred_check_branch
        %252 = sbr.rel (%p250) target = $region40
      $region39: #{autoencoder_forward.3} parent=35 // pred_region
        %s253 = smul.u32 %s20, 2
        %s254 = sadd.s32 %s253, %s21
        %s255 = smul.u32 32, %s254
        %p256 = scmp.lt.s32.totalorder %s255, 127
        %s257 = scalar_select %p256, %s255, 127
        %s258 = smul.addr %s257, 8
        %s259 = scalar_lea.vmem %s0, %s258
        %s260 = smul.u32 %s20, 2
        %s261 = sadd.s32 %s260, %s21
        %s262 = smul.u32 32, %s261
      $region40: #{autoencoder_forward.3} parent=35 // pred_fallthru
        _
      // Predicated region
      $region41: #{autoencoder_forward.3} parent=35 // pred_check
        %p263 = pneg %p75
      $region42: #{autoencoder_forward.3} parent=35 // pred_check_branch
        %265 = sbr.rel (%p263) target = $region44
      $region43: #{autoencoder_forward.3} parent=35 // pred_region
        %p266 = scmp.lt.s32.totalorder %s20, 1
        %s267 = scalar_select %p266, %s20, 1
        %s268 = scalar_lea.vmem %s1, %s267
      $region44: #{autoencoder_forward.3} parent=35 // pred_fallthru
        _
    $region36: #{autoencoder_forward.3} parent=5 // pred_fallthru
      _
    %p269 = scmp.le.s32.totalorder 1, %s13
    %p270 = scmp.lt.s32.totalorder %s13, 5
    %p271 = pnand %p269, %p270
    %p272 = pneg %p271
    // Predicated region
    $region45: #{autoencoder_forward.3} parent=5 // pred_check
      _
    $region46: #{autoencoder_forward.3} parent=5 // pred_check_branch
      %274 = sbr.rel (%p271) target = $region48
    $region47: #{autoencoder_forward.3} parent=5 // pred_region
      %s275 = ssub.s32 %s13, 1
      %s276 = smul.u32 %s22, 2
      %s277 = sadd.s32 %s276, %s23
      %s278 = smul.u32 32, %s277
      %p279 = scmp.lt.s32.totalorder %s278, 127
      %s280 = scalar_select %p279, %s278, 127
      %s281 = smul.addr %s280, 8
      %s282 = scalar_lea.vmem %s0, %s281
      %p283 = pneg %p55
      %p284 = pneg %p52
      %p285 = scmp.lt.s32.totalorder %s22, 1
      %s286 = scalar_select %p285, %s22, 1
      %s287 = scalar_lea.vmem %s1, %s286
      %p288 = pneg %p81
      %p289 = pneg %p78
      %p290 = pneg %p102
      %p291 = pneg %p99
      %p292 = pneg %p123
      %p293 = pneg %p120
      %p294 = pneg %p144
      %p295 = pneg %p141
      %p296 = pneg %p165
      %p297 = pneg %p162
      %p298 = pneg %p186
      %p299 = pneg %p183
      %p300 = pneg %p216
      %p301 = pneg %p213
      %s302 = smul.u32 %s22, 2
      %s303 = sadd.s32 %s302, %s23
      %s304 = smul.u32 32, %s303
      %p305 = scmp.lt.s32.totalorder %s304, 127
      %s306 = scalar_select %p305, %s304, 127
      %s307 = smul.addr %s306, 4
      %s308 = scalar_lea.vmem %s7, %s307
      %s309 = smul.u32 %s22, 2
      %s310 = sadd.s32 %s309, %s23
      %s311 = smul.u32 32, %s310
      %p312 = scmp.lt.s32.totalorder %s311, 127
      %s313 = scalar_select %p312, %s311, 127
      %s314 = smul.addr %s313, 8
      %s315 = scalar_lea.vmem %s0, %s314
      %s316 = smul.u32 %s22, 2
      %s317 = sadd.s32 %s316, %s23
      %s318 = smul.u32 32, %s317
      %p319 = scmp.lt.s32.totalorder %s22, 1
      %s320 = scalar_select %p319, %s22, 1
      %s321 = scalar_lea.vmem %s1, %s320
      %s322 = smul.u32 %s22, 2
      %s323 = sadd.s32 %s322, %s23
      %s324 = smul.u32 32, %s323
      %p325 = scmp.lt.s32.totalorder %s324, 127
      %s326 = scalar_select %p325, %s324, 127
      %s327 = smul.addr %s326, 4
      %s328 = scalar_lea.vmem %s7, %s327
      %s329 = smul.u32 %s22, 2
      %s330 = sadd.s32 %s329, %s23
      %s331 = smul.u32 32, %s330
      %v333 = vld [vmem:[%s315] sm:$0xff]
      %v334 = vld [vmem:[%s315 + $0x8] sm:$0xff]
      %v335 = vld [vmem:[%s315 + $0x10] sm:$0xff]
      %v336 = vld [vmem:[%s315 + $0x18] sm:$0xff]
      %v337 = vld [vmem:[%s315 + $0x20] sm:$0xff]
      %v338 = vld [vmem:[%s315 + $0x28] sm:$0xff]
      %v339 = vld [vmem:[%s315 + $0x30] sm:$0xff]
      %v340 = vld [vmem:[%s315 + $0x38] sm:$0xff]
      %v341 = vld [vmem:[%s315 + $0x40] sm:$0xff]
      %v342 = vld [vmem:[%s315 + $0x48] sm:$0xff]
      %v343 = vld [vmem:[%s315 + $0x50] sm:$0xff]
      %v344 = vld [vmem:[%s315 + $0x58] sm:$0xff]
      %v345 = vld [vmem:[%s315 + $0x60] sm:$0xff]
      %v346 = vld [vmem:[%s315 + $0x68] sm:$0xff]
      %v347 = vld [vmem:[%s315 + $0x70] sm:$0xff]
      %v348 = vld [vmem:[%s315 + $0x78] sm:$0xff]
      %v349 = vld [vmem:[%s315 + $0x80] sm:$0xff]
      %v350 = vld [vmem:[%s315 + $0x88] sm:$0xff]
      %v351 = vld [vmem:[%s315 + $0x90] sm:$0xff]
      %v352 = vld [vmem:[%s315 + $0x98] sm:$0xff]
      %v353 = vld [vmem:[%s315 + $0xa0] sm:$0xff]
      %v354 = vld [vmem:[%s315 + $0xa8] sm:$0xff]
      %v355 = vld [vmem:[%s315 + $0xb0] sm:$0xff]
      %v356 = vld [vmem:[%s315 + $0xb8] sm:$0xff]
      %v357 = vld [vmem:[%s315 + $0xc0] sm:$0xff]
      %v358 = vld [vmem:[%s315 + $0xc8] sm:$0xff]
      %v359 = vld [vmem:[%s315 + $0xd0] sm:$0xff]
      %v360 = vld [vmem:[%s315 + $0xd8] sm:$0xff]
      %v361 = vld [vmem:[%s315 + $0xe0] sm:$0xff]
      %v362 = vld [vmem:[%s315 + $0xe8] sm:$0xff]
      %v363 = vld [vmem:[%s315 + $0xf0] sm:$0xff]
      %v364 = vld [vmem:[%s315 + $0xf8] sm:$0xff]
      %v365 = vld [vmem:[%s2] sm:$0xff]
      %v366 = vld [vmem:[%s321] sm:$0x1]
      %v368 = vlaneseq
      %v369 = vshrl.u32 %v368, 7
      %v370 = vsub.s32 0, %v369
      %v371 = vrot.slane %v366, %v370
      %vm373 = vcmask 64512
      %v375 = vsel %vm373, %v333, 0
      %v378 = vsel %vm373, %v334, 0
      %v381 = vsel %vm373, %v335, 0
      %v384 = vsel %vm373, %v336, 0
      %v387 = vsel %vm373, %v337, 0
      %v390 = vsel %vm373, %v338, 0
      %v393 = vsel %vm373, %v339, 0
      %v396 = vsel %vm373, %v340, 0
      %v399 = vsel %vm373, %v341, 0
      %v402 = vsel %vm373, %v342, 0
      %v405 = vsel %vm373, %v343, 0
      %v408 = vsel %vm373, %v344, 0
      %v411 = vsel %vm373, %v345, 0
      %v414 = vsel %vm373, %v346, 0
      %v417 = vsel %vm373, %v347, 0
      %v420 = vsel %vm373, %v348, 0
      %v423 = vsel %vm373, %v349, 0
      %v426 = vsel %vm373, %v350, 0
      %v429 = vsel %vm373, %v351, 0
      %v432 = vsel %vm373, %v352, 0
      %v435 = vsel %vm373, %v353, 0
      %v438 = vsel %vm373, %v354, 0
      %v441 = vsel %vm373, %v355, 0
      %v444 = vsel %vm373, %v356, 0
      %v447 = vsel %vm373, %v357, 0
      %v450 = vsel %vm373, %v358, 0
      %v453 = vsel %vm373, %v359, 0
      %v456 = vsel %vm373, %v360, 0
      %v459 = vsel %vm373, %v361, 0
      %v462 = vsel %vm373, %v362, 0
      %v465 = vsel %vm373, %v363, 0
      %v468 = vsel %vm373, %v364, 0
      %470 = vmatprep.subr.mxu0 0.0
      %471 = vmatpush1.msra.mxu0 0.0
      %472 = vmatprep.subr.mxu0 0.0
      %473 = vmatpush1.msra.mxu0 0.0
      %474 = vmatprep.subr.mxu0 0.0
      %475 = vmatpush1.msra.mxu0 0.0
      %476 = vmatprep.subr.mxu0 0.0
      %477 = vmatpush1.msra.mxu0 0.0
      %478 = vmatprep.subr.mxu0 0.0
      %479 = vmatpush1.msra.mxu0 0.0
      %480 = vmatprep.subr.mxu0 0.0
      %481 = vmatpush1.msra.mxu0 0.0
      %482 = vmatprep.subr.mxu0 0.0
      %483 = vmatpush1.msra.mxu0 0.0
      %484 = vmatprep.subr.mxu0 0.0
      %485 = vmatpush1.msra.mxu0 0.0
      %486 = vmatprep.subr.mxu0 0.0
      %487 = vmatpush1.msra.mxu0 0.0
      %488 = vmatprep.subr.mxu0 0.0
      %489 = vmatpush1.msra.mxu0 0.0
      %490 = vmatprep.subr.mxu0 0.0
      %491 = vmatpush1.msra.mxu0 0.0
      %492 = vmatprep.subr.mxu0 0.0
      %493 = vmatpush1.msra.mxu0 0.0
      %494 = vmatprep.subr.mxu0 0.0
      %495 = vmatpush1.msra.mxu0 0.0
      %496 = vmatprep.subr.mxu0 0.0
      %497 = vmatpush1.msra.mxu0 0.0
      %498 = vmatprep.subr.mxu0 0.0
      %499 = vmatpush1.msra.mxu0 0.0
      %500 = vmatprep.subr.mxu0 0.0
      %501 = vmatpush1.msra.mxu0 %v365
      %502 = vmatprep.subr.mxu0 0.0
      %503 = vmatpush2.msra.mxu0 0.0
      %504 = vmatprep.subr.mxu0 0.0
      %505 = vmatpush2.msra.mxu0 0.0
      %506 = vmatprep.subr.mxu0 0.0
      %507 = vmatpush2.msra.mxu0 0.0
      %508 = vmatprep.subr.mxu0 0.0
      %509 = vmatpush2.msra.mxu0 0.0
      %510 = vmatprep.subr.mxu0 0.0
      %511 = vmatpush2.msra.mxu0 0.0
      %512 = vmatprep.subr.mxu0 0.0
      %513 = vmatpush2.msra.mxu0 0.0
      %514 = vmatprep.subr.mxu0 0.0
      %515 = vmatpush2.msra.mxu0 0.0
      %516 = vmatprep.subr.mxu0 0.0
      %517 = vmatpush2.msra.mxu0 0.0
      %518 = vmatprep.subr.mxu0 0.0
      %519 = vmatpush2.msra.mxu0 0.0
      %520 = vmatprep.subr.mxu0 0.0
      %521 = vmatpush2.msra.mxu0 0.0
      %522 = vmatprep.subr.mxu0 0.0
      %523 = vmatpush2.msra.mxu0 0.0
      %524 = vmatprep.subr.mxu0 0.0
      %525 = vmatpush2.msra.mxu0 0.0
      %526 = vmatprep.subr.mxu0 0.0
      %527 = vmatpush2.msra.mxu0 0.0
      %528 = vmatprep.subr.mxu0 0.0
      %529 = vmatpush2.msra.mxu0 0.0
      %530 = vmatprep.subr.mxu0 0.0
      %531 = vmatpush2.msra.mxu0 0.0
      %532 = vmatprep.subr.mxu0 0.0
      %533 = vmatpush2.msra.mxu0 0.0
      %534 = vmatprep.mubr.f32.mxu0 0.0
      %535 = vmatmul.mubr.f32.gmra.mxu0 %v375
      %v536 = vpop.f32.mrf.mxu0
      %v537 = vadd.f32 %v371, %v536
      %v538 = vpop.f32.mrf.mxu0
      %539 = vmatprep.mubr.f32.mxu0 0.0
      %540 = vmatmul.mubr.f32.gmra.mxu0 %v378
      %v541 = vpop.f32.mrf.mxu0
      %v542 = vadd.f32 %v371, %v541
      %v543 = vpop.f32.mrf.mxu0
      %544 = vmatprep.mubr.f32.mxu0 0.0
      %545 = vmatmul.mubr.f32.gmra.mxu0 %v381
      %v546 = vpop.f32.mrf.mxu0
      %v547 = vadd.f32 %v371, %v546
      %v548 = vpop.f32.mrf.mxu0
      %549 = vmatprep.mubr.f32.mxu0 0.0
      %550 = vmatmul.mubr.f32.gmra.mxu0 %v384
      %v551 = vpop.f32.mrf.mxu0
      %v552 = vadd.f32 %v371, %v551
      %v553 = vpop.f32.mrf.mxu0
      %554 = vmatprep.mubr.f32.mxu0 0.0
      %555 = vmatmul.mubr.f32.gmra.mxu0 %v387
      %v556 = vpop.f32.mrf.mxu0
      %v557 = vadd.f32 %v371, %v556
      %v558 = vpop.f32.mrf.mxu0
      %559 = vmatprep.mubr.f32.mxu0 0.0
      %560 = vmatmul.mubr.f32.gmra.mxu0 %v390
      %v561 = vpop.f32.mrf.mxu0
      %v562 = vadd.f32 %v371, %v561
      %v563 = vpop.f32.mrf.mxu0
      %564 = vmatprep.mubr.f32.mxu0 0.0
      %565 = vmatmul.mubr.f32.gmra.mxu0 %v393
      %v566 = vpop.f32.mrf.mxu0
      %v567 = vadd.f32 %v371, %v566
      %v568 = vpop.f32.mrf.mxu0
      %569 = vmatprep.mubr.f32.mxu0 0.0
      %570 = vmatmul.mubr.f32.gmra.mxu0 %v396
      %v571 = vpop.f32.mrf.mxu0
      %v572 = vadd.f32 %v371, %v571
      %v573 = vpop.f32.mrf.mxu0
      %574 = vmatprep.mubr.f32.mxu0 0.0
      %575 = vmatmul.mubr.f32.gmra.mxu0 %v399
      %v576 = vpop.f32.mrf.mxu0
      %v577 = vadd.f32 %v371, %v576
      %v578 = vpop.f32.mrf.mxu0
      %579 = vmatprep.mubr.f32.mxu0 0.0
      %580 = vmatmul.mubr.f32.gmra.mxu0 %v402
      %v581 = vpop.f32.mrf.mxu0
      %v582 = vadd.f32 %v371, %v581
      %v583 = vpop.f32.mrf.mxu0
      %584 = vmatprep.mubr.f32.mxu0 0.0
      %585 = vmatmul.mubr.f32.gmra.mxu0 %v405
      %v586 = vpop.f32.mrf.mxu0
      %v587 = vadd.f32 %v371, %v586
      %v588 = vpop.f32.mrf.mxu0
      %589 = vmatprep.mubr.f32.mxu0 0.0
      %590 = vmatmul.mubr.f32.gmra.mxu0 %v408
      %v591 = vpop.f32.mrf.mxu0
      %v592 = vadd.f32 %v371, %v591
      %v593 = vpop.f32.mrf.mxu0
      %594 = vmatprep.mubr.f32.mxu0 0.0
      %595 = vmatmul.mubr.f32.gmra.mxu0 %v411
      %v596 = vpop.f32.mrf.mxu0
      %v597 = vadd.f32 %v371, %v596
      %v598 = vpop.f32.mrf.mxu0
      %599 = vmatprep.mubr.f32.mxu0 0.0
      %600 = vmatmul.mubr.f32.gmra.mxu0 %v414
      %v601 = vpop.f32.mrf.mxu0
      %v602 = vadd.f32 %v371, %v601
      %v603 = vpop.f32.mrf.mxu0
      %604 = vmatprep.mubr.f32.mxu0 0.0
      %605 = vmatmul.mubr.f32.gmra.mxu0 %v417
      %v606 = vpop.f32.mrf.mxu0
      %v607 = vadd.f32 %v371, %v606
      %v608 = vpop.f32.mrf.mxu0
      %609 = vmatprep.mubr.f32.mxu0 0.0
      %610 = vmatmul.mubr.f32.gmra.mxu0 %v420
      %v611 = vpop.f32.mrf.mxu0
      %v612 = vadd.f32 %v371, %v611
      %v613 = vpop.f32.mrf.mxu0
      %614 = vmatprep.mubr.f32.mxu0 0.0
      %615 = vmatmul.mubr.f32.gmra.mxu0 %v423
      %v616 = vpop.f32.mrf.mxu0
      %v617 = vadd.f32 %v371, %v616
      %v618 = vpop.f32.mrf.mxu0
      %619 = vmatprep.mubr.f32.mxu0 0.0
      %620 = vmatmul.mubr.f32.gmra.mxu0 %v426
      %v621 = vpop.f32.mrf.mxu0
      %v622 = vadd.f32 %v371, %v621
      %v623 = vpop.f32.mrf.mxu0
      %624 = vmatprep.mubr.f32.mxu0 0.0
      %625 = vmatmul.mubr.f32.gmra.mxu0 %v429
      %v626 = vpop.f32.mrf.mxu0
      %v627 = vadd.f32 %v371, %v626
      %v628 = vpop.f32.mrf.mxu0
      %629 = vmatprep.mubr.f32.mxu0 0.0
      %630 = vmatmul.mubr.f32.gmra.mxu0 %v432
      %v631 = vpop.f32.mrf.mxu0
      %v632 = vadd.f32 %v371, %v631
      %v633 = vpop.f32.mrf.mxu0
      %634 = vmatprep.mubr.f32.mxu0 0.0
      %635 = vmatmul.mubr.f32.gmra.mxu0 %v435
      %v636 = vpop.f32.mrf.mxu0
      %v637 = vadd.f32 %v371, %v636
      %v638 = vpop.f32.mrf.mxu0
      %639 = vmatprep.mubr.f32.mxu0 0.0
      %640 = vmatmul.mubr.f32.gmra.mxu0 %v438
      %v641 = vpop.f32.mrf.mxu0
      %v642 = vadd.f32 %v371, %v641
      %v643 = vpop.f32.mrf.mxu0
      %644 = vmatprep.mubr.f32.mxu0 0.0
      %645 = vmatmul.mubr.f32.gmra.mxu0 %v441
      %v646 = vpop.f32.mrf.mxu0
      %v647 = vadd.f32 %v371, %v646
      %v648 = vpop.f32.mrf.mxu0
      %649 = vmatprep.mubr.f32.mxu0 0.0
      %650 = vmatmul.mubr.f32.gmra.mxu0 %v444
      %v651 = vpop.f32.mrf.mxu0
      %v652 = vadd.f32 %v371, %v651
      %v653 = vpop.f32.mrf.mxu0
      %654 = vmatprep.mubr.f32.mxu0 0.0
      %655 = vmatmul.mubr.f32.gmra.mxu0 %v447
      %v656 = vpop.f32.mrf.mxu0
      %v657 = vadd.f32 %v371, %v656
      %v658 = vpop.f32.mrf.mxu0
      %659 = vmatprep.mubr.f32.mxu0 0.0
      %660 = vmatmul.mubr.f32.gmra.mxu0 %v450
      %v661 = vpop.f32.mrf.mxu0
      %v662 = vadd.f32 %v371, %v661
      %v663 = vpop.f32.mrf.mxu0
      %664 = vmatprep.mubr.f32.mxu0 0.0
      %665 = vmatmul.mubr.f32.gmra.mxu0 %v453
      %v666 = vpop.f32.mrf.mxu0
      %v667 = vadd.f32 %v371, %v666
      %v668 = vpop.f32.mrf.mxu0
      %669 = vmatprep.mubr.f32.mxu0 0.0
      %670 = vmatmul.mubr.f32.gmra.mxu0 %v456
      %v671 = vpop.f32.mrf.mxu0
      %v672 = vadd.f32 %v371, %v671
      %v673 = vpop.f32.mrf.mxu0
      %674 = vmatprep.mubr.f32.mxu0 0.0
      %675 = vmatmul.mubr.f32.gmra.mxu0 %v459
      %v676 = vpop.f32.mrf.mxu0
      %v677 = vadd.f32 %v371, %v676
      %v678 = vpop.f32.mrf.mxu0
      %679 = vmatprep.mubr.f32.mxu0 0.0
      %680 = vmatmul.mubr.f32.gmra.mxu0 %v462
      %v681 = vpop.f32.mrf.mxu0
      %v682 = vadd.f32 %v371, %v681
      %v683 = vpop.f32.mrf.mxu0
      %684 = vmatprep.mubr.f32.mxu0 0.0
      %685 = vmatmul.mubr.f32.gmra.mxu0 %v465
      %v686 = vpop.f32.mrf.mxu0
      %v687 = vadd.f32 %v371, %v686
      %v688 = vpop.f32.mrf.mxu0
      %689 = vmatprep.mubr.f32.mxu0 0.0
      %690 = vmatmul.mubr.f32.gmra.mxu0 %v468
      %v691 = vpop.f32.mrf.mxu0
      %v692 = vadd.f32 %v371, %v691
      %v693 = vpop.f32.mrf.mxu0
      %694 = vdwg.mxu0
      %vm695 = vcmp.gt.f32.partialorder %v537, 0.0
      %vm696 = vcmp.gt.f32.partialorder %v542, 0.0
      %vm697 = vcmp.gt.f32.partialorder %v547, 0.0
      %vm698 = vcmp.gt.f32.partialorder %v552, 0.0
      %vm699 = vcmp.gt.f32.partialorder %v557, 0.0
      %vm700 = vcmp.gt.f32.partialorder %v562, 0.0
      %vm701 = vcmp.gt.f32.partialorder %v567, 0.0
      %vm702 = vcmp.gt.f32.partialorder %v572, 0.0
      %vm703 = vcmp.gt.f32.partialorder %v577, 0.0
      %vm704 = vcmp.gt.f32.partialorder %v582, 0.0
      %vm705 = vcmp.gt.f32.partialorder %v587, 0.0
      %vm706 = vcmp.gt.f32.partialorder %v592, 0.0
      %vm707 = vcmp.gt.f32.partialorder %v597, 0.0
      %vm708 = vcmp.gt.f32.partialorder %v602, 0.0
      %vm709 = vcmp.gt.f32.partialorder %v607, 0.0
      %vm710 = vcmp.gt.f32.partialorder %v612, 0.0
      %vm711 = vcmp.gt.f32.partialorder %v617, 0.0
      %vm712 = vcmp.gt.f32.partialorder %v622, 0.0
      %vm713 = vcmp.gt.f32.partialorder %v627, 0.0
      %vm714 = vcmp.gt.f32.partialorder %v632, 0.0
      %vm715 = vcmp.gt.f32.partialorder %v637, 0.0
      %vm716 = vcmp.gt.f32.partialorder %v642, 0.0
      %vm717 = vcmp.gt.f32.partialorder %v647, 0.0
      %vm718 = vcmp.gt.f32.partialorder %v652, 0.0
      %vm719 = vcmp.gt.f32.partialorder %v657, 0.0
      %vm720 = vcmp.gt.f32.partialorder %v662, 0.0
      %vm721 = vcmp.gt.f32.partialorder %v667, 0.0
      %vm722 = vcmp.gt.f32.partialorder %v672, 0.0
      %vm723 = vcmp.gt.f32.partialorder %v677, 0.0
      %vm724 = vcmp.gt.f32.partialorder %v682, 0.0
      %vm725 = vcmp.gt.f32.partialorder %v687, 0.0
      %vm726 = vcmp.gt.f32.partialorder %v692, 0.0
      %v727 = vmul.f32 %v537, 0.01
      %v728 = vmul.f32 %v542, 0.01
      %v729 = vmul.f32 %v547, 0.01
      %v730 = vmul.f32 %v552, 0.01
      %v731 = vmul.f32 %v557, 0.01
      %v732 = vmul.f32 %v562, 0.01
      %v733 = vmul.f32 %v567, 0.01
      %v734 = vmul.f32 %v572, 0.01
      %v735 = vmul.f32 %v577, 0.01
      %v736 = vmul.f32 %v582, 0.01
      %v737 = vmul.f32 %v587, 0.01
      %v738 = vmul.f32 %v592, 0.01
      %v739 = vmul.f32 %v597, 0.01
      %v740 = vmul.f32 %v602, 0.01
      %v741 = vmul.f32 %v607, 0.01
      %v742 = vmul.f32 %v612, 0.01
      %v743 = vmul.f32 %v617, 0.01
      %v744 = vmul.f32 %v622, 0.01
      %v745 = vmul.f32 %v627, 0.01
      %v746 = vmul.f32 %v632, 0.01
      %v747 = vmul.f32 %v637, 0.01
      %v748 = vmul.f32 %v642, 0.01
      %v749 = vmul.f32 %v647, 0.01
      %v750 = vmul.f32 %v652, 0.01
      %v751 = vmul.f32 %v657, 0.01
      %v752 = vmul.f32 %v662, 0.01
      %v753 = vmul.f32 %v667, 0.01
      %v754 = vmul.f32 %v672, 0.01
      %v755 = vmul.f32 %v677, 0.01
      %v756 = vmul.f32 %v682, 0.01
      %v757 = vmul.f32 %v687, 0.01
      %v758 = vmul.f32 %v692, 0.01
      %v759 = vsel %vm695, %v537, %v727
      %v760 = vsel %vm696, %v542, %v728
      %v761 = vsel %vm697, %v547, %v729
      %v762 = vsel %vm698, %v552, %v730
      %v763 = vsel %vm699, %v557, %v731
      %v764 = vsel %vm700, %v562, %v732
      %v765 = vsel %vm701, %v567, %v733
      %v766 = vsel %vm702, %v572, %v734
      %v767 = vsel %vm703, %v577, %v735
      %v768 = vsel %vm704, %v582, %v736
      %v769 = vsel %vm705, %v587, %v737
      %v770 = vsel %vm706, %v592, %v738
      %v771 = vsel %vm707, %v597, %v739
      %v772 = vsel %vm708, %v602, %v740
      %v773 = vsel %vm709, %v607, %v741
      %v774 = vsel %vm710, %v612, %v742
      %v775 = vsel %vm711, %v617, %v743
      %v776 = vsel %vm712, %v622, %v744
      %v777 = vsel %vm713, %v627, %v745
      %v778 = vsel %vm714, %v632, %v746
      %v779 = vsel %vm715, %v637, %v747
      %v780 = vsel %vm716, %v642, %v748
      %v781 = vsel %vm717, %v647, %v749
      %v782 = vsel %vm718, %v652, %v750
      %v783 = vsel %vm719, %v657, %v751
      %v784 = vsel %vm720, %v662, %v752
      %v785 = vsel %vm721, %v667, %v753
      %v786 = vsel %vm722, %v672, %v754
      %v787 = vsel %vm723, %v677, %v755
      %v788 = vsel %vm724, %v682, %v756
      %v789 = vsel %vm725, %v687, %v757
      %v790 = vsel %vm726, %v692, %v758
      %v791 = vpack.c.bf16 %v760, %v759
      %v792 = vpack.c.bf16 %v762, %v761
      %v793 = vpack.c.bf16 %v764, %v763
      %v794 = vpack.c.bf16 %v766, %v765
      %v795 = vpack.c.bf16 %v768, %v767
      %v796 = vpack.c.bf16 %v770, %v769
      %v797 = vpack.c.bf16 %v772, %v771
      %v798 = vpack.c.bf16 %v774, %v773
      %v799 = vpack.c.bf16 %v776, %v775
      %v800 = vpack.c.bf16 %v778, %v777
      %v801 = vpack.c.bf16 %v780, %v779
      %v802 = vpack.c.bf16 %v782, %v781
      %v803 = vpack.c.bf16 %v784, %v783
      %v804 = vpack.c.bf16 %v786, %v785
      %v805 = vpack.c.bf16 %v788, %v787
      %v806 = vpack.c.bf16 %v790, %v789
      %v807 = vld [vmem:[%s3] sm:$0xf]
      %v808 = vld [vmem:[%s3 + $0x4] sm:$0xf]
      %v809 = vld [vmem:[%s3 + $0x8] sm:$0xf]
      %v810 = vld [vmem:[%s3 + $0xc] sm:$0xf]
      %v811 = vld [vmem:[%s3 + $0x10] sm:$0xf]
      %v812 = vld [vmem:[%s3 + $0x14] sm:$0xf]
      %v813 = vld [vmem:[%s3 + $0x18] sm:$0xf]
      %v814 = vld [vmem:[%s3 + $0x1c] sm:$0xf]
      %v815 = vld [vmem:[%s3 + $0x20] sm:$0xf]
      %v816 = vld [vmem:[%s3 + $0x24] sm:$0xf]
      %v817 = vld [vmem:[%s3 + $0x28] sm:$0xf]
      %v818 = vld [vmem:[%s3 + $0x2c] sm:$0xf]
      %v819 = vld [vmem:[%s3 + $0x30] sm:$0xf]
      %v820 = vld [vmem:[%s3 + $0x34] sm:$0xf]
      %v821 = vld [vmem:[%s3 + $0x38] sm:$0xf]
      %v822 = vld [vmem:[%s3 + $0x3c] sm:$0xf]
      %v823 = vld [vmem:[%s4] sm:$0x1]
      %v825 = vlaneseq
      %v826 = vshrl.u32 %v825, 7
      %v827 = vsub.s32 0, %v826
      %v828 = vrot.slane %v823, %v827
      %v846 = vunpack.c.l.b16 %v807
      %v847 = vunpack.c.l.b16 %v808
      %v848 = vunpack.c.l.b16 %v809
      %v849 = vunpack.c.l.b16 %v810
      %v850 = vunpack.c.l.b16 %v811
      %v851 = vunpack.c.l.b16 %v812
      %v852 = vunpack.c.l.b16 %v813
      %v853 = vunpack.c.l.b16 %v814
      %v854 = vunpack.c.l.b16 %v815
      %v855 = vunpack.c.l.b16 %v816
      %v856 = vunpack.c.l.b16 %v817
      %v857 = vunpack.c.l.b16 %v818
      %v858 = vunpack.c.l.b16 %v819
      %v859 = vunpack.c.l.b16 %v820
      %v860 = vunpack.c.l.b16 %v821
      %v861 = vunpack.c.l.b16 %v822
      %v862 = vpack.c.b16 %v847, %v846
      %v863 = vpack.c.b16 %v849, %v848
      %v864 = vpack.c.b16 %v851, %v850
      %v865 = vpack.c.b16 %v853, %v852
      %v866 = vpack.c.b16 %v855, %v854
      %v867 = vpack.c.b16 %v857, %v856
      %v868 = vpack.c.b16 %v859, %v858
      %v869 = vpack.c.b16 %v861, %v860
      %878 = vmatprep.subr.bf16.mxu0 0
      %879 = vmatpush1.bf16.msra.mxu0 %v869
      %880 = vmatprep.subr.bf16.mxu0 0
      %881 = vmatpush1.bf16.msra.mxu0 %v868
      %882 = vmatprep.subr.bf16.mxu0 0
      %883 = vmatpush1.bf16.msra.mxu0 %v867
      %884 = vmatprep.subr.bf16.mxu0 0
      %885 = vmatpush1.bf16.msra.mxu0 %v866
      %886 = vmatprep.subr.bf16.mxu0 0
      %887 = vmatpush1.bf16.msra.mxu0 %v865
      %888 = vmatprep.subr.bf16.mxu0 0
      %889 = vmatpush1.bf16.msra.mxu0 %v864
      %890 = vmatprep.subr.bf16.mxu0 0
      %891 = vmatpush1.bf16.msra.mxu0 %v863
      %892 = vmatprep.subr.bf16.mxu0 0
      %893 = vmatpush1.bf16.msra.mxu0 %v862
      %894 = vmatprep.subr.bf16.mxu0 0
      %895 = vmatpush2.bf16.msra.mxu0 0
      %896 = vmatprep.subr.bf16.mxu0 0
      %897 = vmatpush2.bf16.msra.mxu0 0
      %898 = vmatprep.subr.bf16.mxu0 0
      %899 = vmatpush2.bf16.msra.mxu0 0
      %900 = vmatprep.subr.bf16.mxu0 0
      %901 = vmatpush2.bf16.msra.mxu0 0
      %902 = vmatprep.subr.bf16.mxu0 0
      %903 = vmatpush2.bf16.msra.mxu0 0
      %904 = vmatprep.subr.bf16.mxu0 0
      %905 = vmatpush2.bf16.msra.mxu0 0
      %906 = vmatprep.subr.bf16.mxu0 0
      %907 = vmatpush2.bf16.msra.mxu0 0
      %908 = vmatprep.subr.bf16.mxu0 0
      %909 = vmatpush2.bf16.msra.mxu0 0
      %910 = vmatprep.mubr.bf16.mxu0 0
      %911 = vmatmul.mubr.bf16.gmra.mxu0 %v791
      %v912 = vpop.f32.mrf.mxu0
      %v913 = vadd.f32 %v828, %v912
      %v914 = vpop.f32.mrf.mxu0
      %v915 = vpop.f32.mrf.mxu0
      %v916 = vadd.f32 %v828, %v915
      %v917 = vpop.f32.mrf.mxu0
      %918 = vmatprep.mubr.bf16.mxu0 0
      %919 = vmatmul.mubr.bf16.gmra.mxu0 %v792
      %v920 = vpop.f32.mrf.mxu0
      %v921 = vadd.f32 %v828, %v920
      %v922 = vpop.f32.mrf.mxu0
      %v923 = vpop.f32.mrf.mxu0
      %v924 = vadd.f32 %v828, %v923
      %v925 = vpop.f32.mrf.mxu0
      %926 = vmatprep.mubr.bf16.mxu0 0
      %927 = vmatmul.mubr.bf16.gmra.mxu0 %v793
      %v928 = vpop.f32.mrf.mxu0
      %v929 = vadd.f32 %v828, %v928
      %v930 = vpop.f32.mrf.mxu0
      %v931 = vpop.f32.mrf.mxu0
      %v932 = vadd.f32 %v828, %v931
      %v933 = vpop.f32.mrf.mxu0
      %934 = vmatprep.mubr.bf16.mxu0 0
      %935 = vmatmul.mubr.bf16.gmra.mxu0 %v794
      %v936 = vpop.f32.mrf.mxu0
      %v937 = vadd.f32 %v828, %v936
      %v938 = vpop.f32.mrf.mxu0
      %v939 = vpop.f32.mrf.mxu0
      %v940 = vadd.f32 %v828, %v939
      %v941 = vpop.f32.mrf.mxu0
      %942 = vmatprep.mubr.bf16.mxu0 0
      %943 = vmatmul.mubr.bf16.gmra.mxu0 %v795
      %v944 = vpop.f32.mrf.mxu0
      %v945 = vadd.f32 %v828, %v944
      %v946 = vpop.f32.mrf.mxu0
      %v947 = vpop.f32.mrf.mxu0
      %v948 = vadd.f32 %v828, %v947
      %v949 = vpop.f32.mrf.mxu0
      %950 = vmatprep.mubr.bf16.mxu0 0
      %951 = vmatmul.mubr.bf16.gmra.mxu0 %v796
      %v952 = vpop.f32.mrf.mxu0
      %v953 = vadd.f32 %v828, %v952
      %v954 = vpop.f32.mrf.mxu0
      %v955 = vpop.f32.mrf.mxu0
      %v956 = vadd.f32 %v828, %v955
      %v957 = vpop.f32.mrf.mxu0
      %958 = vmatprep.mubr.bf16.mxu0 0
      %959 = vmatmul.mubr.bf16.gmra.mxu0 %v797
      %v960 = vpop.f32.mrf.mxu0
      %v961 = vadd.f32 %v828, %v960
      %v962 = vpop.f32.mrf.mxu0
      %v963 = vpop.f32.mrf.mxu0
      %v964 = vadd.f32 %v828, %v963
      %v965 = vpop.f32.mrf.mxu0
      %966 = vmatprep.mubr.bf16.mxu0 0
      %967 = vmatmul.mubr.bf16.gmra.mxu0 %v798
      %v968 = vpop.f32.mrf.mxu0
      %v969 = vadd.f32 %v828, %v968
      %v970 = vpop.f32.mrf.mxu0
      %v971 = vpop.f32.mrf.mxu0
      %v972 = vadd.f32 %v828, %v971
      %v973 = vpop.f32.mrf.mxu0
      %974 = vmatprep.mubr.bf16.mxu0 0
      %975 = vmatmul.mubr.bf16.gmra.mxu0 %v799
      %v976 = vpop.f32.mrf.mxu0
      %v977 = vadd.f32 %v828, %v976
      %v978 = vpop.f32.mrf.mxu0
      %v979 = vpop.f32.mrf.mxu0
      %v980 = vadd.f32 %v828, %v979
      %v981 = vpop.f32.mrf.mxu0
      %982 = vmatprep.mubr.bf16.mxu0 0
      %983 = vmatmul.mubr.bf16.gmra.mxu0 %v800
      %v984 = vpop.f32.mrf.mxu0
      %v985 = vadd.f32 %v828, %v984
      %v986 = vpop.f32.mrf.mxu0
      %v987 = vpop.f32.mrf.mxu0
      %v988 = vadd.f32 %v828, %v987
      %v989 = vpop.f32.mrf.mxu0
      %990 = vmatprep.mubr.bf16.mxu0 0
      %991 = vmatmul.mubr.bf16.gmra.mxu0 %v801
      %v992 = vpop.f32.mrf.mxu0
      %v993 = vadd.f32 %v828, %v992
      %v994 = vpop.f32.mrf.mxu0
      %v995 = vpop.f32.mrf.mxu0
      %v996 = vadd.f32 %v828, %v995
      %v997 = vpop.f32.mrf.mxu0
      %998 = vmatprep.mubr.bf16.mxu0 0
      %999 = vmatmul.mubr.bf16.gmra.mxu0 %v802
      %v1000 = vpop.f32.mrf.mxu0
      %v1001 = vadd.f32 %v828, %v1000
      %v1002 = vpop.f32.mrf.mxu0
      %v1003 = vpop.f32.mrf.mxu0
      %v1004 = vadd.f32 %v828, %v1003
      %v1005 = vpop.f32.mrf.mxu0
      %1006 = vmatprep.mubr.bf16.mxu0 0
      %1007 = vmatmul.mubr.bf16.gmra.mxu0 %v803
      %v1008 = vpop.f32.mrf.mxu0
      %v1009 = vadd.f32 %v828, %v1008
      %v1010 = vpop.f32.mrf.mxu0
      %v1011 = vpop.f32.mrf.mxu0
      %v1012 = vadd.f32 %v828, %v1011
      %v1013 = vpop.f32.mrf.mxu0
      %1014 = vmatprep.mubr.bf16.mxu0 0
      %1015 = vmatmul.mubr.bf16.gmra.mxu0 %v804
      %v1016 = vpop.f32.mrf.mxu0
      %v1017 = vadd.f32 %v828, %v1016
      %v1018 = vpop.f32.mrf.mxu0
      %v1019 = vpop.f32.mrf.mxu0
      %v1020 = vadd.f32 %v828, %v1019
      %v1021 = vpop.f32.mrf.mxu0
      %1022 = vmatprep.mubr.bf16.mxu0 0
      %1023 = vmatmul.mubr.bf16.gmra.mxu0 %v805
      %v1024 = vpop.f32.mrf.mxu0
      %v1025 = vadd.f32 %v828, %v1024
      %v1026 = vpop.f32.mrf.mxu0
      %v1027 = vpop.f32.mrf.mxu0
      %v1028 = vadd.f32 %v828, %v1027
      %v1029 = vpop.f32.mrf.mxu0
      %1030 = vmatprep.mubr.bf16.mxu0 0
      %1031 = vmatmul.mubr.bf16.gmra.mxu0 %v806
      %v1032 = vpop.f32.mrf.mxu0
      %v1033 = vadd.f32 %v828, %v1032
      %v1034 = vpop.f32.mrf.mxu0
      %v1035 = vpop.f32.mrf.mxu0
      %v1036 = vadd.f32 %v828, %v1035
      %v1037 = vpop.f32.mrf.mxu0
      %1038 = vdwg.mxu0
      %vm1039 = vcmp.gt.f32.partialorder %v913, 0.0
      %vm1040 = vcmp.gt.f32.partialorder %v916, 0.0
      %vm1041 = vcmp.gt.f32.partialorder %v921, 0.0
      %vm1042 = vcmp.gt.f32.partialorder %v924, 0.0
      %vm1043 = vcmp.gt.f32.partialorder %v929, 0.0
      %vm1044 = vcmp.gt.f32.partialorder %v932, 0.0
      %vm1045 = vcmp.gt.f32.partialorder %v937, 0.0
      %vm1046 = vcmp.gt.f32.partialorder %v940, 0.0
      %vm1047 = vcmp.gt.f32.partialorder %v945, 0.0
      %vm1048 = vcmp.gt.f32.partialorder %v948, 0.0
      %vm1049 = vcmp.gt.f32.partialorder %v953, 0.0
      %vm1050 = vcmp.gt.f32.partialorder %v956, 0.0
      %vm1051 = vcmp.gt.f32.partialorder %v961, 0.0
      %vm1052 = vcmp.gt.f32.partialorder %v964, 0.0
      %vm1053 = vcmp.gt.f32.partialorder %v969, 0.0
      %vm1054 = vcmp.gt.f32.partialorder %v972, 0.0
      %vm1055 = vcmp.gt.f32.partialorder %v977, 0.0
      %vm1056 = vcmp.gt.f32.partialorder %v980, 0.0
      %vm1057 = vcmp.gt.f32.partialorder %v985, 0.0
      %vm1058 = vcmp.gt.f32.partialorder %v988, 0.0
      %vm1059 = vcmp.gt.f32.partialorder %v993, 0.0
      %vm1060 = vcmp.gt.f32.partialorder %v996, 0.0
      %vm1061 = vcmp.gt.f32.partialorder %v1001, 0.0
      %vm1062 = vcmp.gt.f32.partialorder %v1004, 0.0
      %vm1063 = vcmp.gt.f32.partialorder %v1009, 0.0
      %vm1064 = vcmp.gt.f32.partialorder %v1012, 0.0
      %vm1065 = vcmp.gt.f32.partialorder %v1017, 0.0
      %vm1066 = vcmp.gt.f32.partialorder %v1020, 0.0
      %vm1067 = vcmp.gt.f32.partialorder %v1025, 0.0
      %vm1068 = vcmp.gt.f32.partialorder %v1028, 0.0
      %vm1069 = vcmp.gt.f32.partialorder %v1033, 0.0
      %vm1070 = vcmp.gt.f32.partialorder %v1036, 0.0
      %v1071 = vmul.f32 %v913, 0.01
      %v1072 = vmul.f32 %v916, 0.01
      %v1073 = vmul.f32 %v921, 0.01
      %v1074 = vmul.f32 %v924, 0.01
      %v1075 = vmul.f32 %v929, 0.01
      %v1076 = vmul.f32 %v932, 0.01
      %v1077 = vmul.f32 %v937, 0.01
      %v1078 = vmul.f32 %v940, 0.01
      %v1079 = vmul.f32 %v945, 0.01
      %v1080 = vmul.f32 %v948, 0.01
      %v1081 = vmul.f32 %v953, 0.01
      %v1082 = vmul.f32 %v956, 0.01
      %v1083 = vmul.f32 %v961, 0.01
      %v1084 = vmul.f32 %v964, 0.01
      %v1085 = vmul.f32 %v969, 0.01
      %v1086 = vmul.f32 %v972, 0.01
      %v1087 = vmul.f32 %v977, 0.01
      %v1088 = vmul.f32 %v980, 0.01
      %v1089 = vmul.f32 %v985, 0.01
      %v1090 = vmul.f32 %v988, 0.01
      %v1091 = vmul.f32 %v993, 0.01
      %v1092 = vmul.f32 %v996, 0.01
      %v1093 = vmul.f32 %v1001, 0.01
      %v1094 = vmul.f32 %v1004, 0.01
      %v1095 = vmul.f32 %v1009, 0.01
      %v1096 = vmul.f32 %v1012, 0.01
      %v1097 = vmul.f32 %v1017, 0.01
      %v1098 = vmul.f32 %v1020, 0.01
      %v1099 = vmul.f32 %v1025, 0.01
      %v1100 = vmul.f32 %v1028, 0.01
      %v1101 = vmul.f32 %v1033, 0.01
      %v1102 = vmul.f32 %v1036, 0.01
      %v1103 = vsel %vm1039, %v913, %v1071
      %v1104 = vsel %vm1040, %v916, %v1072
      %v1105 = vsel %vm1041, %v921, %v1073
      %v1106 = vsel %vm1042, %v924, %v1074
      %v1107 = vsel %vm1043, %v929, %v1075
      %v1108 = vsel %vm1044, %v932, %v1076
      %v1109 = vsel %vm1045, %v937, %v1077
      %v1110 = vsel %vm1046, %v940, %v1078
      %v1111 = vsel %vm1047, %v945, %v1079
      %v1112 = vsel %vm1048, %v948, %v1080
      %v1113 = vsel %vm1049, %v953, %v1081
      %v1114 = vsel %vm1050, %v956, %v1082
      %v1115 = vsel %vm1051, %v961, %v1083
      %v1116 = vsel %vm1052, %v964, %v1084
      %v1117 = vsel %vm1053, %v969, %v1085
      %v1118 = vsel %vm1054, %v972, %v1086
      %v1119 = vsel %vm1055, %v977, %v1087
      %v1120 = vsel %vm1056, %v980, %v1088
      %v1121 = vsel %vm1057, %v985, %v1089
      %v1122 = vsel %vm1058, %v988, %v1090
      %v1123 = vsel %vm1059, %v993, %v1091
      %v1124 = vsel %vm1060, %v996, %v1092
      %v1125 = vsel %vm1061, %v1001, %v1093
      %v1126 = vsel %vm1062, %v1004, %v1094
      %v1127 = vsel %vm1063, %v1009, %v1095
      %v1128 = vsel %vm1064, %v1012, %v1096
      %v1129 = vsel %vm1065, %v1017, %v1097
      %v1130 = vsel %vm1066, %v1020, %v1098
      %v1131 = vsel %vm1067, %v1025, %v1099
      %v1132 = vsel %vm1068, %v1028, %v1100
      %v1133 = vsel %vm1069, %v1033, %v1101
      %v1134 = vsel %vm1070, %v1036, %v1102
      %v1135 = vpack.c.bf16 %v1104, %v1103
      %v1136 = vpack.c.bf16 %v1106, %v1105
      %v1137 = vpack.c.bf16 %v1108, %v1107
      %v1138 = vpack.c.bf16 %v1110, %v1109
      %v1139 = vpack.c.bf16 %v1112, %v1111
      %v1140 = vpack.c.bf16 %v1114, %v1113
      %v1141 = vpack.c.bf16 %v1116, %v1115
      %v1142 = vpack.c.bf16 %v1118, %v1117
      %v1143 = vpack.c.bf16 %v1120, %v1119
      %v1144 = vpack.c.bf16 %v1122, %v1121
      %v1145 = vpack.c.bf16 %v1124, %v1123
      %v1146 = vpack.c.bf16 %v1126, %v1125
      %v1147 = vpack.c.bf16 %v1128, %v1127
      %v1148 = vpack.c.bf16 %v1130, %v1129
      %v1149 = vpack.c.bf16 %v1132, %v1131
      %v1150 = vpack.c.bf16 %v1134, %v1133
      %v1151 = vld [vmem:[%s5] sm:$0xf]
      %v1152 = vld [vmem:[%s5 + $0x4] sm:$0xf]
      %v1153 = vld [vmem:[%s5 + $0x8] sm:$0xf]
      %v1154 = vld [vmem:[%s5 + $0xc] sm:$0xf]
      %v1155 = vld [vmem:[%s5 + $0x10] sm:$0xf]
      %v1156 = vld [vmem:[%s5 + $0x14] sm:$0xf]
      %v1157 = vld [vmem:[%s5 + $0x18] sm:$0xf]
      %v1158 = vld [vmem:[%s5 + $0x1c] sm:$0xf]
      %v1159 = vld [vmem:[%s5 + $0x20] sm:$0xf]
      %v1160 = vld [vmem:[%s5 + $0x24] sm:$0xf]
      %v1161 = vld [vmem:[%s5 + $0x28] sm:$0xf]
      %v1162 = vld [vmem:[%s5 + $0x2c] sm:$0xf]
      %v1163 = vld [vmem:[%s5 + $0x30] sm:$0xf]
      %v1164 = vld [vmem:[%s5 + $0x34] sm:$0xf]
      %v1165 = vld [vmem:[%s5 + $0x38] sm:$0xf]
      %v1166 = vld [vmem:[%s5 + $0x3c] sm:$0xf]
      %v1167 = vld [vmem:[%s6] sm:$0x1]
      %v1169 = vlaneseq
      %v1170 = vshrl.u32 %v1169, 7
      %v1171 = vsub.s32 0, %v1170
      %v1172 = vrot.slane %v1167, %v1171
      %v1190 = vunpack.c.l.b16 %v1151
      %v1191 = vunpack.c.l.b16 %v1152
      %v1192 = vunpack.c.l.b16 %v1153
      %v1193 = vunpack.c.l.b16 %v1154
      %v1194 = vunpack.c.l.b16 %v1155
      %v1195 = vunpack.c.l.b16 %v1156
      %v1196 = vunpack.c.l.b16 %v1157
      %v1197 = vunpack.c.l.b16 %v1158
      %v1198 = vunpack.c.l.b16 %v1159
      %v1199 = vunpack.c.l.b16 %v1160
      %v1200 = vunpack.c.l.b16 %v1161
      %v1201 = vunpack.c.l.b16 %v1162
      %v1202 = vunpack.c.l.b16 %v1163
      %v1203 = vunpack.c.l.b16 %v1164
      %v1204 = vunpack.c.l.b16 %v1165
      %v1205 = vunpack.c.l.b16 %v1166
      %v1206 = vpack.c.b16 %v1191, %v1190
      %v1207 = vpack.c.b16 %v1193, %v1192
      %v1208 = vpack.c.b16 %v1195, %v1194
      %v1209 = vpack.c.b16 %v1197, %v1196
      %v1210 = vpack.c.b16 %v1199, %v1198
      %v1211 = vpack.c.b16 %v1201, %v1200
      %v1212 = vpack.c.b16 %v1203, %v1202
      %v1213 = vpack.c.b16 %v1205, %v1204
      %1222 = vmatprep.subr.bf16.mxu0 0
      %1223 = vmatpush1.bf16.msra.mxu0 %v1213
      %1224 = vmatprep.subr.bf16.mxu0 0
      %1225 = vmatpush1.bf16.msra.mxu0 %v1212
      %1226 = vmatprep.subr.bf16.mxu0 0
      %1227 = vmatpush1.bf16.msra.mxu0 %v1211
      %1228 = vmatprep.subr.bf16.mxu0 0
      %1229 = vmatpush1.bf16.msra.mxu0 %v1210
      %1230 = vmatprep.subr.bf16.mxu0 0
      %1231 = vmatpush1.bf16.msra.mxu0 %v1209
      %1232 = vmatprep.subr.bf16.mxu0 0
      %1233 = vmatpush1.bf16.msra.mxu0 %v1208
      %1234 = vmatprep.subr.bf16.mxu0 0
      %1235 = vmatpush1.bf16.msra.mxu0 %v1207
      %1236 = vmatprep.subr.bf16.mxu0 0
      %1237 = vmatpush1.bf16.msra.mxu0 %v1206
      %1238 = vmatprep.subr.bf16.mxu0 0
      %1239 = vmatpush2.bf16.msra.mxu0 0
      %1240 = vmatprep.subr.bf16.mxu0 0
      %1241 = vmatpush2.bf16.msra.mxu0 0
      %1242 = vmatprep.subr.bf16.mxu0 0
      %1243 = vmatpush2.bf16.msra.mxu0 0
      %1244 = vmatprep.subr.bf16.mxu0 0
      %1245 = vmatpush2.bf16.msra.mxu0 0
      %1246 = vmatprep.subr.bf16.mxu0 0
      %1247 = vmatpush2.bf16.msra.mxu0 0
      %1248 = vmatprep.subr.bf16.mxu0 0
      %1249 = vmatpush2.bf16.msra.mxu0 0
      %1250 = vmatprep.subr.bf16.mxu0 0
      %1251 = vmatpush2.bf16.msra.mxu0 0
      %1252 = vmatprep.subr.bf16.mxu0 0
      %1253 = vmatpush2.bf16.msra.mxu0 0
      %1254 = vmatprep.mubr.bf16.mxu0 0
      %1255 = vmatmul.mubr.bf16.gmra.mxu0 %v1135
      %v1256 = vpop.f32.mrf.mxu0
      %v1257 = vadd.f32 %v1172, %v1256
      %v1258 = vpop.f32.mrf.mxu0
      %v1259 = vpop.f32.mrf.mxu0
      %v1260 = vadd.f32 %v1172, %v1259
      %v1261 = vpop.f32.mrf.mxu0
      %1262 = vmatprep.mubr.bf16.mxu0 0
      %1263 = vmatmul.mubr.bf16.gmra.mxu0 %v1136
      %v1264 = vpop.f32.mrf.mxu0
      %v1265 = vadd.f32 %v1172, %v1264
      %v1266 = vpop.f32.mrf.mxu0
      %v1267 = vpop.f32.mrf.mxu0
      %v1268 = vadd.f32 %v1172, %v1267
      %v1269 = vpop.f32.mrf.mxu0
      %1270 = vmatprep.mubr.bf16.mxu0 0
      %1271 = vmatmul.mubr.bf16.gmra.mxu0 %v1137
      %v1272 = vpop.f32.mrf.mxu0
      %v1273 = vadd.f32 %v1172, %v1272
      %v1274 = vpop.f32.mrf.mxu0
      %v1275 = vpop.f32.mrf.mxu0
      %v1276 = vadd.f32 %v1172, %v1275
      %v1277 = vpop.f32.mrf.mxu0
      %1278 = vmatprep.mubr.bf16.mxu0 0
      %1279 = vmatmul.mubr.bf16.gmra.mxu0 %v1138
      %v1280 = vpop.f32.mrf.mxu0
      %v1281 = vadd.f32 %v1172, %v1280
      %v1282 = vpop.f32.mrf.mxu0
      %v1283 = vpop.f32.mrf.mxu0
      %v1284 = vadd.f32 %v1172, %v1283
      %v1285 = vpop.f32.mrf.mxu0
      %1286 = vmatprep.mubr.bf16.mxu0 0
      %1287 = vmatmul.mubr.bf16.gmra.mxu0 %v1139
      %v1288 = vpop.f32.mrf.mxu0
      %v1289 = vadd.f32 %v1172, %v1288
      %v1290 = vpop.f32.mrf.mxu0
      %v1291 = vpop.f32.mrf.mxu0
      %v1292 = vadd.f32 %v1172, %v1291
      %v1293 = vpop.f32.mrf.mxu0
      %1294 = vmatprep.mubr.bf16.mxu0 0
      %1295 = vmatmul.mubr.bf16.gmra.mxu0 %v1140
      %v1296 = vpop.f32.mrf.mxu0
      %v1297 = vadd.f32 %v1172, %v1296
      %v1298 = vpop.f32.mrf.mxu0
      %v1299 = vpop.f32.mrf.mxu0
      %v1300 = vadd.f32 %v1172, %v1299
      %v1301 = vpop.f32.mrf.mxu0
      %1302 = vmatprep.mubr.bf16.mxu0 0
      %1303 = vmatmul.mubr.bf16.gmra.mxu0 %v1141
      %v1304 = vpop.f32.mrf.mxu0
      %v1305 = vadd.f32 %v1172, %v1304
      %v1306 = vpop.f32.mrf.mxu0
      %v1307 = vpop.f32.mrf.mxu0
      %v1308 = vadd.f32 %v1172, %v1307
      %v1309 = vpop.f32.mrf.mxu0
      %1310 = vmatprep.mubr.bf16.mxu0 0
      %1311 = vmatmul.mubr.bf16.gmra.mxu0 %v1142
      %v1312 = vpop.f32.mrf.mxu0
      %v1313 = vadd.f32 %v1172, %v1312
      %v1314 = vpop.f32.mrf.mxu0
      %v1315 = vpop.f32.mrf.mxu0
      %v1316 = vadd.f32 %v1172, %v1315
      %v1317 = vpop.f32.mrf.mxu0
      %1318 = vmatprep.mubr.bf16.mxu0 0
      %1319 = vmatmul.mubr.bf16.gmra.mxu0 %v1143
      %v1320 = vpop.f32.mrf.mxu0
      %v1321 = vadd.f32 %v1172, %v1320
      %v1322 = vpop.f32.mrf.mxu0
      %v1323 = vpop.f32.mrf.mxu0
      %v1324 = vadd.f32 %v1172, %v1323
      %v1325 = vpop.f32.mrf.mxu0
      %1326 = vmatprep.mubr.bf16.mxu0 0
      %1327 = vmatmul.mubr.bf16.gmra.mxu0 %v1144
      %v1328 = vpop.f32.mrf.mxu0
      %v1329 = vadd.f32 %v1172, %v1328
      %v1330 = vpop.f32.mrf.mxu0
      %v1331 = vpop.f32.mrf.mxu0
      %v1332 = vadd.f32 %v1172, %v1331
      %v1333 = vpop.f32.mrf.mxu0
      %1334 = vmatprep.mubr.bf16.mxu0 0
      %1335 = vmatmul.mubr.bf16.gmra.mxu0 %v1145
      %v1336 = vpop.f32.mrf.mxu0
      %v1337 = vadd.f32 %v1172, %v1336
      %v1338 = vpop.f32.mrf.mxu0
      %v1339 = vpop.f32.mrf.mxu0
      %v1340 = vadd.f32 %v1172, %v1339
      %v1341 = vpop.f32.mrf.mxu0
      %1342 = vmatprep.mubr.bf16.mxu0 0
      %1343 = vmatmul.mubr.bf16.gmra.mxu0 %v1146
      %v1344 = vpop.f32.mrf.mxu0
      %v1345 = vadd.f32 %v1172, %v1344
      %v1346 = vpop.f32.mrf.mxu0
      %v1347 = vpop.f32.mrf.mxu0
      %v1348 = vadd.f32 %v1172, %v1347
      %v1349 = vpop.f32.mrf.mxu0
      %1350 = vmatprep.mubr.bf16.mxu0 0
      %1351 = vmatmul.mubr.bf16.gmra.mxu0 %v1147
      %v1352 = vpop.f32.mrf.mxu0
      %v1353 = vadd.f32 %v1172, %v1352
      %v1354 = vpop.f32.mrf.mxu0
      %v1355 = vpop.f32.mrf.mxu0
      %v1356 = vadd.f32 %v1172, %v1355
      %v1357 = vpop.f32.mrf.mxu0
      %1358 = vmatprep.mubr.bf16.mxu0 0
      %1359 = vmatmul.mubr.bf16.gmra.mxu0 %v1148
      %v1360 = vpop.f32.mrf.mxu0
      %v1361 = vadd.f32 %v1172, %v1360
      %v1362 = vpop.f32.mrf.mxu0
      %v1363 = vpop.f32.mrf.mxu0
      %v1364 = vadd.f32 %v1172, %v1363
      %v1365 = vpop.f32.mrf.mxu0
      %1366 = vmatprep.mubr.bf16.mxu0 0
      %1367 = vmatmul.mubr.bf16.gmra.mxu0 %v1149
      %v1368 = vpop.f32.mrf.mxu0
      %v1369 = vadd.f32 %v1172, %v1368
      %v1370 = vpop.f32.mrf.mxu0
      %v1371 = vpop.f32.mrf.mxu0
      %v1372 = vadd.f32 %v1172, %v1371
      %v1373 = vpop.f32.mrf.mxu0
      %1374 = vmatprep.mubr.bf16.mxu0 0
      %1375 = vmatmul.mubr.bf16.gmra.mxu0 %v1150
      %v1376 = vpop.f32.mrf.mxu0
      %v1377 = vadd.f32 %v1172, %v1376
      %v1378 = vpop.f32.mrf.mxu0
      %v1379 = vpop.f32.mrf.mxu0
      %v1380 = vadd.f32 %v1172, %v1379
      %v1381 = vpop.f32.mrf.mxu0
      %1382 = vdwg.mxu0
      %v1383 = vpack.c.bf16 %v1260, %v1257
      %v1384 = vpack.c.bf16 %v1268, %v1265
      %v1385 = vpack.c.bf16 %v1276, %v1273
      %v1386 = vpack.c.bf16 %v1284, %v1281
      %v1387 = vpack.c.bf16 %v1292, %v1289
      %v1388 = vpack.c.bf16 %v1300, %v1297
      %v1389 = vpack.c.bf16 %v1308, %v1305
      %v1390 = vpack.c.bf16 %v1316, %v1313
      %v1391 = vpack.c.bf16 %v1324, %v1321
      %v1392 = vpack.c.bf16 %v1332, %v1329
      %v1393 = vpack.c.bf16 %v1340, %v1337
      %v1394 = vpack.c.bf16 %v1348, %v1345
      %v1395 = vpack.c.bf16 %v1356, %v1353
      %v1396 = vpack.c.bf16 %v1364, %v1361
      %v1397 = vpack.c.bf16 %v1372, %v1369
      %v1398 = vpack.c.bf16 %v1380, %v1377
      %v1415 = vunpack.c.l.b16 %v1383
      %v1416 = vunpack.c.h.b16 %v1383
      %v1417 = vunpack.c.l.b16 %v1384
      %v1418 = vunpack.c.h.b16 %v1384
      %v1419 = vunpack.c.l.b16 %v1385
      %v1420 = vunpack.c.h.b16 %v1385
      %v1421 = vunpack.c.l.b16 %v1386
      %v1422 = vunpack.c.h.b16 %v1386
      %v1423 = vunpack.c.l.b16 %v1387
      %v1424 = vunpack.c.h.b16 %v1387
      %v1425 = vunpack.c.l.b16 %v1388
      %v1426 = vunpack.c.h.b16 %v1388
      %v1427 = vunpack.c.l.b16 %v1389
      %v1428 = vunpack.c.h.b16 %v1389
      %v1429 = vunpack.c.l.b16 %v1390
      %v1430 = vunpack.c.h.b16 %v1390
      %v1431 = vunpack.c.l.b16 %v1391
      %v1432 = vunpack.c.h.b16 %v1391
      %v1433 = vunpack.c.l.b16 %v1392
      %v1434 = vunpack.c.h.b16 %v1392
      %v1435 = vunpack.c.l.b16 %v1393
      %v1436 = vunpack.c.h.b16 %v1393
      %v1437 = vunpack.c.l.b16 %v1394
      %v1438 = vunpack.c.h.b16 %v1394
      %v1439 = vunpack.c.l.b16 %v1395
      %v1440 = vunpack.c.h.b16 %v1395
      %v1441 = vunpack.c.l.b16 %v1396
      %v1442 = vunpack.c.h.b16 %v1396
      %v1443 = vunpack.c.l.b16 %v1397
      %v1444 = vunpack.c.h.b16 %v1397
      %v1445 = vunpack.c.l.b16 %v1398
      %v1446 = vunpack.c.h.b16 %v1398
      %v1447 = vpack.c.b16 %v1415, %v1415
      %v1448 = vpack.c.b16 %v1416, %v1416
      %v1449 = vpack.c.b16 %v1417, %v1417
      %v1450 = vpack.c.b16 %v1418, %v1418
      %v1451 = vpack.c.b16 %v1419, %v1419
      %v1452 = vpack.c.b16 %v1420, %v1420
      %v1453 = vpack.c.b16 %v1421, %v1421
      %v1454 = vpack.c.b16 %v1422, %v1422
      %v1455 = vpack.c.b16 %v1423, %v1423
      %v1456 = vpack.c.b16 %v1424, %v1424
      %v1457 = vpack.c.b16 %v1425, %v1425
      %v1458 = vpack.c.b16 %v1426, %v1426
      %v1459 = vpack.c.b16 %v1427, %v1427
      %v1460 = vpack.c.b16 %v1428, %v1428
      %v1461 = vpack.c.b16 %v1429, %v1429
      %v1462 = vpack.c.b16 %v1430, %v1430
      %v1463 = vpack.c.b16 %v1431, %v1431
      %v1464 = vpack.c.b16 %v1432, %v1432
      %v1465 = vpack.c.b16 %v1433, %v1433
      %v1466 = vpack.c.b16 %v1434, %v1434
      %v1467 = vpack.c.b16 %v1435, %v1435
      %v1468 = vpack.c.b16 %v1436, %v1436
      %v1469 = vpack.c.b16 %v1437, %v1437
      %v1470 = vpack.c.b16 %v1438, %v1438
      %v1471 = vpack.c.b16 %v1439, %v1439
      %v1472 = vpack.c.b16 %v1440, %v1440
      %v1473 = vpack.c.b16 %v1441, %v1441
      %v1474 = vpack.c.b16 %v1442, %v1442
      %v1475 = vpack.c.b16 %v1443, %v1443
      %v1476 = vpack.c.b16 %v1444, %v1444
      %v1477 = vpack.c.b16 %v1445, %v1445
      %v1478 = vpack.c.b16 %v1446, %v1446
      %1511 = vst [vmem:[%s328] sm:$0xf] %v1447
      %1512 = vst [vmem:[%s328 + $0x4] sm:$0xf] %v1448
      %1513 = vst [vmem:[%s328 + $0x8] sm:$0xf] %v1449
      %1514 = vst [vmem:[%s328 + $0xc] sm:$0xf] %v1450
      %1515 = vst [vmem:[%s328 + $0x10] sm:$0xf] %v1451
      %1516 = vst [vmem:[%s328 + $0x14] sm:$0xf] %v1452
      %1517 = vst [vmem:[%s328 + $0x18] sm:$0xf] %v1453
      %1518 = vst [vmem:[%s328 + $0x1c] sm:$0xf] %v1454
      %1519 = vst [vmem:[%s328 + $0x20] sm:$0xf] %v1455
      %1520 = vst [vmem:[%s328 + $0x24] sm:$0xf] %v1456
      %1521 = vst [vmem:[%s328 + $0x28] sm:$0xf] %v1457
      %1522 = vst [vmem:[%s328 + $0x2c] sm:$0xf] %v1458
      %1523 = vst [vmem:[%s328 + $0x30] sm:$0xf] %v1459
      %1524 = vst [vmem:[%s328 + $0x34] sm:$0xf] %v1460
      %1525 = vst [vmem:[%s328 + $0x38] sm:$0xf] %v1461
      %1526 = vst [vmem:[%s328 + $0x3c] sm:$0xf] %v1462
      %1527 = vst [vmem:[%s328 + $0x40] sm:$0xf] %v1463
      %1528 = vst [vmem:[%s328 + $0x44] sm:$0xf] %v1464
      %1529 = vst [vmem:[%s328 + $0x48] sm:$0xf] %v1465
      %1530 = vst [vmem:[%s328 + $0x4c] sm:$0xf] %v1466
      %1531 = vst [vmem:[%s328 + $0x50] sm:$0xf] %v1467
      %1532 = vst [vmem:[%s328 + $0x54] sm:$0xf] %v1468
      %1533 = vst [vmem:[%s328 + $0x58] sm:$0xf] %v1469
      %1534 = vst [vmem:[%s328 + $0x5c] sm:$0xf] %v1470
      %1535 = vst [vmem:[%s328 + $0x60] sm:$0xf] %v1471
      %1536 = vst [vmem:[%s328 + $0x64] sm:$0xf] %v1472
      %1537 = vst [vmem:[%s328 + $0x68] sm:$0xf] %v1473
      %1538 = vst [vmem:[%s328 + $0x6c] sm:$0xf] %v1474
      %1539 = vst [vmem:[%s328 + $0x70] sm:$0xf] %v1475
      %1540 = vst [vmem:[%s328 + $0x74] sm:$0xf] %v1476
      %1541 = vst [vmem:[%s328 + $0x78] sm:$0xf] %v1477
      %1542 = vst [vmem:[%s328 + $0x7c] sm:$0xf] %v1478
      %s1543 = smul.u32 %s22, 2
      %s1544 = sadd.s32 %s1543, %s23
      %s1545 = smul.u32 32, %s1544
      %p1546 = scmp.lt.s32.totalorder %s1545, 127
      %s1547 = scalar_select %p1546, %s1545, 127
      %s1548 = smul.addr %s1547, 4
      %s1549 = scalar_lea.vmem %s7, %s1548
      // Predicated region
      $region49: #{autoencoder_forward.3} parent=47 // pred_check
        %p1550 = pneg %p213
      $region50: #{autoencoder_forward.3} parent=47 // pred_check_branch
        %1552 = sbr.rel (%p1550) target = $region52
      $region51: #{autoencoder_forward.3} parent=47 // pred_region
        %s1553 = smul.u32 %s22, 2
        %s1554 = sadd.s32 %s1553, %s23
        %s1555 = smul.u32 32, %s1554
      $region52: #{autoencoder_forward.3} parent=47 // pred_fallthru
        _
    $region48: #{autoencoder_forward.3} parent=5 // pred_fallthru
      _
    %p1556 = scmp.le.s32.totalorder 2, %s13
    // Predicated region
    $region53: #{autoencoder_forward.3} parent=5 // pred_check
      %p1557 = pneg %p1556
    $region54: #{autoencoder_forward.3} parent=5 // pred_check_branch
      %1559 = sbr.rel (%p1557) target = $region56
    $region55: #{autoencoder_forward.3} parent=5 // pred_region
      %s1560 = ssub.s32 %s13, 2
      // Predicated region
      $region57: #{autoencoder_forward.3} parent=55 // pred_check
        %p1561 = pneg %p219
      $region58: #{autoencoder_forward.3} parent=55 // pred_check_branch
        %1563 = sbr.rel (%p1561) target = $region60
      $region59: #{autoencoder_forward.3} parent=55 // pred_region
        %s1564 = smul.u32 %s24, 2
        %s1565 = sadd.s32 %s1564, %s25
        %s1566 = smul.u32 32, %s1565
        %p1567 = scmp.lt.s32.totalorder %s1566, 127
        %s1568 = scalar_select %p1567, %s1566, 127
        %s1569 = smul.addr %s1568, 4
        %s1570 = scalar_lea.vmem %s7, %s1569
      $region60: #{autoencoder_forward.3} parent=55 // pred_fallthru
        _
    $region56: #{autoencoder_forward.3} parent=5 // pred_fallthru
      _
  $region6: #{autoencoder_forward.3} parent=0 // loop_footer
    %s17 = sadd.s32 1, %s13
  $region7: #{autoencoder_forward.3} parent=0 // loop_footer_branch
    %12 = sbr.rel target = $region3
  $region8: #{autoencoder_forward.3} parent=0 // loop_exit
    _

// kernel: autoencoder_forward.2
$region0: #{autoencoder_forward.2}
  #allocation0 [shape = 'u32[]', space=smem, size = 0x4, offset = 0x4, fixed_abs, tag = 'smem constant byte address 0x4 - core index']
  #allocation1 [shape = 'u32[144,128]{1,0:T(1,128)}', space=vmem, size = 0x12000, scoped, tag = 'internal scratch']
  %s0 = inlined_call_operand.vmem [shape: bf16[128,128], index: 0, kind: input, shape index: {}]
  %s1 = inlined_call_operand.vmem [shape: bf16[144,64], index: 1, kind: input, shape index: {}]
  %s2 = inlined_call_operand.vmem [shape: bf16[128,128], index: 2, kind: input, shape index: {}]
  %s3 = inlined_call_operand.vmem [shape: f32[1,128], index: 3, kind: input, shape index: {}]
  %s4 = inlined_call_operand.vmem [shape: bf16[9,128,128], index: 4, kind: input, shape index: {}]
  %s5 = inlined_call_operand.vmem [shape: f32[1,128], index: 5, kind: input, shape index: {}]
  %s6 = inlined_call_operand.vmem [shape: bf16[16,128,128], index: 6, kind: input, shape index: {}]
  %s7 = inlined_call_operand.vmem [shape: f32[1,128], index: 7, kind: input, shape index: {}]
  %s8 = inlined_call_operand.vmem [shape: f32[128,128], index: 8, kind: input, shape index: {}]
  %s9 = inlined_call_operand.vmem [shape: f32[1,128], index: 9, kind: input, shape index: {}]
  %s10 = inlined_call_operand.hbm [shape: f32[2,1,128], index: 10, kind: output, shape index: {0}]
  %s11 = inlined_call_operand.vmem [shape: f32[2,1,128], index: 11, kind: output, shape index: {1}]
  %12 = xla_tuple %s10, %s11
  %s13 = sld [smem:[#allocation0]]
  $region81: #{autoencoder_forward.2} parent=0
    _
  %s15 = ssub.s32 1, %s13
  %s16 = scalar_select 0, %s15, %s13
  $region1: #{autoencoder_forward.2} parent=0
    #allocation2 [shape = 'u8[1024]{0}', space=vmem, size = 0x400, scoped, tag = 'output window, operand 0']
    #allocation3 [shape = 's32[2]{0}', space=sflag, size = 0x8, scoped, tag = 'scoped memory for autoencoder_forward.2']
    %17 = vsyncpa [#allocation3], 0
    %s18 = scalar_lea.sflag [#allocation3], 1
    %19 = vsyncpa %s18, 0
    loop: start=0, step=1, limit=4
    $region2: #{autoencoder_forward.2} parent=1 // loop_pre_header
      _
    $region3: #{autoencoder_forward.2} parent=1 // loop_header
      %s21 = sphi 0, %s25
      %p22 = scmp.ge.s32.totalorder %s21, 4
      %s31 = sphi 0, %s33
      %s34 = sphi 0, %s31
      %s35 = sphi 0, %s34
      %s51 = sphi 0, %s35
      %s55 = sphi 0, %s55
      %s57 = sphi 0, %s55
      %s58 = sphi 0, %s57
      %s72 = sphi 0, %s58
      %s76 = sphi 0, %s76
      %s78 = sphi 0, %s76
      %s79 = sphi 0, %s78
      %s93 = sphi 0, %s79
      %s97 = sphi 0, %s97
      %s99 = sphi 0, %s97
      %s100 = sphi 0, %s99
      %s114 = sphi 0, %s100
      %s118 = sphi 0, %s118
      %s120 = sphi 0, %s118
      %s121 = sphi 0, %s120
      %s135 = sphi 0, %s121
      %s139 = sphi 0, %s139
      %s141 = sphi 0, %s139
      %s142 = sphi 0, %s141
      %s156 = sphi 0, %s142
      %s160 = sphi 0, %s160
      %s162 = sphi 0, %s160
      %s163 = sphi 0, %s162
      %s177 = sphi 0, %s163
      %s181 = sphi 0, %s181
      %s183 = sphi 0, %s181
      %s184 = sphi 0, %s183
      %s198 = sphi 0, %s184
      %s202 = sphi 0, %s202
      %s204 = sphi 0, %s202
      %s205 = sphi 0, %s204
      %s219 = sphi 0, %s205
      %s223 = sphi 0, %s223
      %s225 = sphi 0, %s223
      %s226 = sphi 0, %s225
      %s240 = sphi 0, %s226
      %s246 = sphi 0, %s248
      %s249 = sphi 0, %s246
      %s250 = sphi 0, %s249
      %s266 = sphi 0, %s250
      %s272 = sphi 0, %s274
      %s275 = sphi 0, %s272
      %s276 = sphi 0, %s275
      %s292 = sphi 0, %s276
    $region4: #{autoencoder_forward.2} parent=1 // loop_header_branch
      %24 = sbr.rel (%p22) target = $region8
    $region5: #{autoencoder_forward.2} parent=1 // loop_body
      %s26 = ssub.s32 %s21, 1
      %s27 = ssub.s32 %s21, 2
      %s28 = sadd.s32 %s21, 1
      %s29 = ssub.s32 %s21, %s28
      %p30 = scmp.eq.s32.totalorder %s29, 0
      %s32 = sadd.s32 %s31, 1
      %s33 = scalar_select %p30, %s31, %s32
      %p36 = pneg %p30
      %p37 = scmp.eq.s32.totalorder %s21, 1
      %p38 = por %p36, %p37
      %p39 = scmp.ne.s32.totalorder %s31, %s34
      %p40 = scmp.eq.s32.totalorder %s21, 0
      %p41 = por %p39, %p40
      %p42 = scmp.ne.s32.totalorder %s31, %s34
      %p43 = scmp.eq.s32.totalorder %s26, 1
      %p44 = por %p42, %p43
      %p45 = scmp.ne.s32.totalorder %s34, %s35
      %p46 = scmp.eq.s32.totalorder %s26, 0
      %p47 = por %p45, %p46
      %p48 = scmp.ne.s32.totalorder %s34, %s35
      %p49 = scmp.eq.s32.totalorder %s27, 1
      %p50 = por %p48, %p49
      %p52 = scmp.ne.s32.totalorder %s35, %s51
      %p53 = scmp.eq.s32.totalorder %s27, 0
      %p54 = por %p52, %p53
      %s56 = sadd.s32 %s55, 1
      %p59 = scmp.eq.s32.totalorder %s21, 1
      %p60 = scmp.ne.s32.totalorder %s55, %s57
      %p61 = scmp.eq.s32.totalorder %s21, 0
      %p62 = por %p60, %p61
      %p63 = scmp.ne.s32.totalorder %s55, %s57
      %p64 = scmp.eq.s32.totalorder %s26, 1
      %p65 = por %p63, %p64
      %p66 = scmp.ne.s32.totalorder %s57, %s58
      %p67 = scmp.eq.s32.totalorder %s26, 0
      %p68 = por %p66, %p67
      %p69 = scmp.ne.s32.totalorder %s57, %s58
      %p70 = scmp.eq.s32.totalorder %s27, 1
      %p71 = por %p69, %p70
      %p73 = scmp.ne.s32.totalorder %s58, %s72
      %p74 = scmp.eq.s32.totalorder %s27, 0
      %p75 = por %p73, %p74
      %s77 = sadd.s32 %s76, 1
      %p80 = scmp.eq.s32.totalorder %s21, 1
      %p81 = scmp.ne.s32.totalorder %s76, %s78
      %p82 = scmp.eq.s32.totalorder %s21, 0
      %p83 = por %p81, %p82
      %p84 = scmp.ne.s32.totalorder %s76, %s78
      %p85 = scmp.eq.s32.totalorder %s26, 1
      %p86 = por %p84, %p85
      %p87 = scmp.ne.s32.totalorder %s78, %s79
      %p88 = scmp.eq.s32.totalorder %s26, 0
      %p89 = por %p87, %p88
      %p90 = scmp.ne.s32.totalorder %s78, %s79
      %p91 = scmp.eq.s32.totalorder %s27, 1
      %p92 = por %p90, %p91
      %p94 = scmp.ne.s32.totalorder %s79, %s93
      %p95 = scmp.eq.s32.totalorder %s27, 0
      %p96 = por %p94, %p95
      %s98 = sadd.s32 %s97, 1
      %p101 = scmp.eq.s32.totalorder %s21, 1
      %p102 = scmp.ne.s32.totalorder %s97, %s99
      %p103 = scmp.eq.s32.totalorder %s21, 0
      %p104 = por %p102, %p103
      %p105 = scmp.ne.s32.totalorder %s97, %s99
      %p106 = scmp.eq.s32.totalorder %s26, 1
      %p107 = por %p105, %p106
      %p108 = scmp.ne.s32.totalorder %s99, %s100
      %p109 = scmp.eq.s32.totalorder %s26, 0
      %p110 = por %p108, %p109
      %p111 = scmp.ne.s32.totalorder %s99, %s100
      %p112 = scmp.eq.s32.totalorder %s27, 1
      %p113 = por %p111, %p112
      %p115 = scmp.ne.s32.totalorder %s100, %s114
      %p116 = scmp.eq.s32.totalorder %s27, 0
      %p117 = por %p115, %p116
      %s119 = sadd.s32 %s118, 1
      %p122 = scmp.eq.s32.totalorder %s21, 1
      %p123 = scmp.ne.s32.totalorder %s118, %s120
      %p124 = scmp.eq.s32.totalorder %s21, 0
      %p125 = por %p123, %p124
      %p126 = scmp.ne.s32.totalorder %s118, %s120
      %p127 = scmp.eq.s32.totalorder %s26, 1
      %p128 = por %p126, %p127
      %p129 = scmp.ne.s32.totalorder %s120, %s121
      %p130 = scmp.eq.s32.totalorder %s26, 0
      %p131 = por %p129, %p130
      %p132 = scmp.ne.s32.totalorder %s120, %s121
      %p133 = scmp.eq.s32.totalorder %s27, 1
      %p134 = por %p132, %p133
      %p136 = scmp.ne.s32.totalorder %s121, %s135
      %p137 = scmp.eq.s32.totalorder %s27, 0
      %p138 = por %p136, %p137
      %s140 = sadd.s32 %s139, 1
      %p143 = scmp.eq.s32.totalorder %s21, 1
      %p144 = scmp.ne.s32.totalorder %s139, %s141
      %p145 = scmp.eq.s32.totalorder %s21, 0
      %p146 = por %p144, %p145
      %p147 = scmp.ne.s32.totalorder %s139, %s141
      %p148 = scmp.eq.s32.totalorder %s26, 1
      %p149 = por %p147, %p148
      %p150 = scmp.ne.s32.totalorder %s141, %s142
      %p151 = scmp.eq.s32.totalorder %s26, 0
      %p152 = por %p150, %p151
      %p153 = scmp.ne.s32.totalorder %s141, %s142
      %p154 = scmp.eq.s32.totalorder %s27, 1
      %p155 = por %p153, %p154
      %p157 = scmp.ne.s32.totalorder %s142, %s156
      %p158 = scmp.eq.s32.totalorder %s27, 0
      %p159 = por %p157, %p158
      %s161 = sadd.s32 %s160, 1
      %p164 = scmp.eq.s32.totalorder %s21, 1
      %p165 = scmp.ne.s32.totalorder %s160, %s162
      %p166 = scmp.eq.s32.totalorder %s21, 0
      %p167 = por %p165, %p166
      %p168 = scmp.ne.s32.totalorder %s160, %s162
      %p169 = scmp.eq.s32.totalorder %s26, 1
      %p170 = por %p168, %p169
      %p171 = scmp.ne.s32.totalorder %s162, %s163
      %p172 = scmp.eq.s32.totalorder %s26, 0
      %p173 = por %p171, %p172
      %p174 = scmp.ne.s32.totalorder %s162, %s163
      %p175 = scmp.eq.s32.totalorder %s27, 1
      %p176 = por %p174, %p175
      %p178 = scmp.ne.s32.totalorder %s163, %s177
      %p179 = scmp.eq.s32.totalorder %s27, 0
      %p180 = por %p178, %p179
      %s182 = sadd.s32 %s181, 1
      %p185 = scmp.eq.s32.totalorder %s21, 1
      %p186 = scmp.ne.s32.totalorder %s181, %s183
      %p187 = scmp.eq.s32.totalorder %s21, 0
      %p188 = por %p186, %p187
      %p189 = scmp.ne.s32.totalorder %s181, %s183
      %p190 = scmp.eq.s32.totalorder %s26, 1
      %p191 = por %p189, %p190
      %p192 = scmp.ne.s32.totalorder %s183, %s184
      %p193 = scmp.eq.s32.totalorder %s26, 0
      %p194 = por %p192, %p193
      %p195 = scmp.ne.s32.totalorder %s183, %s184
      %p196 = scmp.eq.s32.totalorder %s27, 1
      %p197 = por %p195, %p196
      %p199 = scmp.ne.s32.totalorder %s184, %s198
      %p200 = scmp.eq.s32.totalorder %s27, 0
      %p201 = por %p199, %p200
      %s203 = sadd.s32 %s202, 1
      %p206 = scmp.eq.s32.totalorder %s21, 1
      %p207 = scmp.ne.s32.totalorder %s202, %s204
      %p208 = scmp.eq.s32.totalorder %s21, 0
      %p209 = por %p207, %p208
      %p210 = scmp.ne.s32.totalorder %s202, %s204
      %p211 = scmp.eq.s32.totalorder %s26, 1
      %p212 = por %p210, %p211
      %p213 = scmp.ne.s32.totalorder %s204, %s205
      %p214 = scmp.eq.s32.totalorder %s26, 0
      %p215 = por %p213, %p214
      %p216 = scmp.ne.s32.totalorder %s204, %s205
      %p217 = scmp.eq.s32.totalorder %s27, 1
      %p218 = por %p216, %p217
      %p220 = scmp.ne.s32.totalorder %s205, %s219
      %p221 = scmp.eq.s32.totalorder %s27, 0
      %p222 = por %p220, %p221
      %s224 = sadd.s32 %s223, 1
      %p227 = scmp.eq.s32.totalorder %s21, 1
      %p228 = scmp.ne.s32.totalorder %s223, %s225
      %p229 = scmp.eq.s32.totalorder %s21, 0
      %p230 = por %p228, %p229
      %p231 = scmp.ne.s32.totalorder %s223, %s225
      %p232 = scmp.eq.s32.totalorder %s26, 1
      %p233 = por %p231, %p232
      %p234 = scmp.ne.s32.totalorder %s225, %s226
      %p235 = scmp.eq.s32.totalorder %s26, 0
      %p236 = por %p234, %p235
      %p237 = scmp.ne.s32.totalorder %s225, %s226
      %p238 = scmp.eq.s32.totalorder %s27, 1
      %p239 = por %p237, %p238
      %p241 = scmp.ne.s32.totalorder %s226, %s240
      %p242 = scmp.eq.s32.totalorder %s27, 0
      %p243 = por %p241, %p242
      %s244 = ssub.s32 %s21, %s28
      %p245 = scmp.eq.s32.totalorder %s244, 0
      %s247 = sadd.s32 %s246, 1
      %s248 = scalar_select %p245, %s246, %s247
      %p251 = pneg %p245
      %p252 = scmp.eq.s32.totalorder %s21, 1
      %p253 = por %p251, %p252
      %p254 = scmp.ne.s32.totalorder %s246, %s249
      %p255 = scmp.eq.s32.totalorder %s21, 0
      %p256 = por %p254, %p255
      %p257 = scmp.ne.s32.totalorder %s246, %s249
      %p258 = scmp.eq.s32.totalorder %s26, 1
      %p259 = por %p257, %p258
      %p260 = scmp.ne.s32.totalorder %s249, %s250
      %p261 = scmp.eq.s32.totalorder %s26, 0
      %p262 = por %p260, %p261
      %p263 = scmp.ne.s32.totalorder %s249, %s250
      %p264 = scmp.eq.s32.totalorder %s27, 1
      %p265 = por %p263, %p264
      %p267 = scmp.ne.s32.totalorder %s250, %s266
      %p268 = scmp.eq.s32.totalorder %s27, 0
      %p269 = por %p267, %p268
      %s270 = ssub.s32 %s21, %s28
      %p271 = scmp.eq.s32.totalorder %s270, 0
      %s273 = sadd.s32 %s272, 1
      %s274 = scalar_select %p271, %s272, %s273
      %p277 = pneg %p271
      %p278 = scmp.eq.s32.totalorder %s21, 1
      %p279 = por %p277, %p278
      %p280 = scmp.ne.s32.totalorder %s272, %s275
      %p281 = scmp.eq.s32.totalorder %s21, 0
      %p282 = por %p280, %p281
      %p283 = scmp.ne.s32.totalorder %s272, %s275
      %p284 = scmp.eq.s32.totalorder %s26, 1
      %p285 = por %p283, %p284
      %p286 = scmp.ne.s32.totalorder %s275, %s276
      %p287 = scmp.eq.s32.totalorder %s26, 0
      %p288 = por %p286, %p287
      %p289 = scmp.ne.s32.totalorder %s275, %s276
      %p290 = scmp.eq.s32.totalorder %s27, 1
      %p291 = por %p289, %p290
      %p293 = scmp.ne.s32.totalorder %s276, %s292
      %p294 = scmp.eq.s32.totalorder %s27, 0
      %p295 = por %p293, %p294
      %p296 = scmp.le.s32.totalorder 1, %s21
      %p297 = scmp.lt.s32.totalorder %s21, 3
      %p298 = pnand %p296, %p297
      %p299 = pneg %p298
      // Predicated region
      $region9: #{autoencoder_forward.2} parent=5 // pred_check
        _
      $region10: #{autoencoder_forward.2} parent=5 // pred_check_branch
        %301 = sbr.rel (%p298) target = $region12
      $region11: #{autoencoder_forward.2} parent=5 // pred_region
        %s302 = ssub.s32 %s21, 1
        // Predicated region
        $region13: #{autoencoder_forward.2} parent=11 // pred_check
          %p303 = pneg %p68
        $region14: #{autoencoder_forward.2} parent=11 // pred_check_branch
          %305 = sbr.rel (%p303) target = $region16
        $region15: #{autoencoder_forward.2} parent=11 // pred_region
          _
        $region16: #{autoencoder_forward.2} parent=11 // pred_fallthru
          _
        // Predicated region
        $region17: #{autoencoder_forward.2} parent=11 // pred_check
          %p306 = pneg %p89
        $region18: #{autoencoder_forward.2} parent=11 // pred_check_branch
          %308 = sbr.rel (%p306) target = $region20
        $region19: #{autoencoder_forward.2} parent=11 // pred_region
          _
        $region20: #{autoencoder_forward.2} parent=11 // pred_fallthru
          _
        // Predicated region
        $region21: #{autoencoder_forward.2} parent=11 // pred_check
          %p309 = pneg %p110
        $region22: #{autoencoder_forward.2} parent=11 // pred_check_branch
          %311 = sbr.rel (%p309) target = $region24
        $region23: #{autoencoder_forward.2} parent=11 // pred_region
          _
        $region24: #{autoencoder_forward.2} parent=11 // pred_fallthru
          _
        // Predicated region
        $region25: #{autoencoder_forward.2} parent=11 // pred_check
          %p312 = pneg %p131
        $region26: #{autoencoder_forward.2} parent=11 // pred_check_branch
          %314 = sbr.rel (%p312) target = $region28
        $region27: #{autoencoder_forward.2} parent=11 // pred_region
          _
        $region28: #{autoencoder_forward.2} parent=11 // pred_fallthru
          _
        // Predicated region
        $region29: #{autoencoder_forward.2} parent=11 // pred_check
          %p315 = pneg %p152
        $region30: #{autoencoder_forward.2} parent=11 // pred_check_branch
          %317 = sbr.rel (%p315) target = $region32
        $region31: #{autoencoder_forward.2} parent=11 // pred_region
          _
        $region32: #{autoencoder_forward.2} parent=11 // pred_fallthru
          _
        // Predicated region
        $region33: #{autoencoder_forward.2} parent=11 // pred_check
          %p318 = pneg %p173
        $region34: #{autoencoder_forward.2} parent=11 // pred_check_branch
          %320 = sbr.rel (%p318) target = $region36
        $region35: #{autoencoder_forward.2} parent=11 // pred_region
          _
        $region36: #{autoencoder_forward.2} parent=11 // pred_fallthru
          _
        // Predicated region
        $region37: #{autoencoder_forward.2} parent=11 // pred_check
          %p321 = pneg %p194
        $region38: #{autoencoder_forward.2} parent=11 // pred_check_branch
          %323 = sbr.rel (%p321) target = $region40
        $region39: #{autoencoder_forward.2} parent=11 // pred_region
          _
        $region40: #{autoencoder_forward.2} parent=11 // pred_fallthru
          _
        // Predicated region
        $region41: #{autoencoder_forward.2} parent=11 // pred_check
          %p324 = pneg %p215
        $region42: #{autoencoder_forward.2} parent=11 // pred_check_branch
          %326 = sbr.rel (%p324) target = $region44
        $region43: #{autoencoder_forward.2} parent=11 // pred_region
          _
        $region44: #{autoencoder_forward.2} parent=11 // pred_fallthru
          _
        // Predicated region
        $region45: #{autoencoder_forward.2} parent=11 // pred_check
          %p327 = pneg %p236
        $region46: #{autoencoder_forward.2} parent=11 // pred_check_branch
          %329 = sbr.rel (%p327) target = $region48
        $region47: #{autoencoder_forward.2} parent=11 // pred_region
          _
        $region48: #{autoencoder_forward.2} parent=11 // pred_fallthru
          _
      $region12: #{autoencoder_forward.2} parent=5 // pred_fallthru
        _
      %p330 = scmp.lt.s32.totalorder %s21, 2
      // Predicated region
      $region49: #{autoencoder_forward.2} parent=5 // pred_check
        %p331 = pneg %p330
      $region50: #{autoencoder_forward.2} parent=5 // pred_check_branch
        %333 = sbr.rel (%p331) target = $region52
      $region51: #{autoencoder_forward.2} parent=5 // pred_region
        // Predicated region
        $region53: #{autoencoder_forward.2} parent=51 // pred_check
          %p334 = pneg %p41
        $region54: #{autoencoder_forward.2} parent=51 // pred_check_branch
          %336 = sbr.rel (%p334) target = $region56
        $region55: #{autoencoder_forward.2} parent=51 // pred_region
          %s337 = smul.u32 8, %s21
          %p338 = scmp.lt.s32.totalorder %s337, 15
          %s339 = scalar_select %p338, %s337, 15
          %s340 = smul.addr %s339, 4
          %s341 = scalar_lea.vmem %s0, %s340
          %s342 = smul.u32 8, %s21
        $region56: #{autoencoder_forward.2} parent=51 // pred_fallthru
          _
      $region52: #{autoencoder_forward.2} parent=5 // pred_fallthru
        _
      %p343 = scmp.le.s32.totalorder 1, %s21
      %p344 = scmp.lt.s32.totalorder %s21, 3
      %p345 = pnand %p343, %p344
      %p346 = pneg %p345
      // Predicated region
      $region57: #{autoencoder_forward.2} parent=5 // pred_check
        _
      $region58: #{autoencoder_forward.2} parent=5 // pred_check_branch
        %348 = sbr.rel (%p345) target = $region60
      $region59: #{autoencoder_forward.2} parent=5 // pred_region
        %s349 = ssub.s32 %s21, 1
        %s350 = smul.u32 8, %s26
        %p351 = scmp.lt.s32.totalorder %s350, 15
        %s352 = scalar_select %p351, %s350, 15
        %s353 = smul.addr %s352, 4
        %s354 = scalar_lea.vmem %s0, %s353
        %p355 = pneg %p47
        %p356 = pneg %p44
        %p357 = pneg %p68
        %p358 = pneg %p65
        %p359 = pneg %p89
        %p360 = pneg %p86
        %p361 = pneg %p110
        %p362 = pneg %p107
        %p363 = pneg %p131
        %p364 = pneg %p128
        %p365 = pneg %p152
        %p366 = pneg %p149
        %p367 = pneg %p173
        %p368 = pneg %p170
        %p369 = pneg %p194
        %p370 = pneg %p191
        %p371 = pneg %p215
        %p372 = pneg %p212
        %p373 = pneg %p236
        %p374 = pneg %p233
        %p375 = pneg %p262
        %p376 = pneg %p259
        %s377 = sand.u32 %s249, 1
        %s378 = scalar_lea.sflag [#allocation3], %s377
        %s379 = sand.u32 %s249, 1
        %s380 = scalar_lea.vmem [#allocation2], %s379
        %p381 = pneg %p288
        %p382 = pneg %p285
        %p383 = scmp.lt.s32.totalorder %s26, 1
        %s384 = scalar_select %p383, %s26, 1
        %s385 = scalar_lea.vmem %s11, %s384
        %s386 = smul.u32 8, %s26
        %p387 = scmp.lt.s32.totalorder %s386, 15
        %s388 = scalar_select %p387, %s386, 15
        %s389 = smul.addr %s388, 4
        %s390 = scalar_lea.vmem %s0, %s389
        %s391 = smul.u32 8, %s26
        %p392 = scmp.lt.s32.totalorder %s26, 1
        %s393 = scalar_select %p392, %s26, 1
        %s394 = scalar_lea.vmem %s11, %s393
        %v396 = vld [vmem:[%s390] sm:$0xf]
        %v397 = vld [vmem:[%s390 + $0x4] sm:$0xf]
        %v398 = vld [vmem:[%s390 + $0x8] sm:$0xf]
        %v399 = vld [vmem:[%s390 + $0xc] sm:$0xf]
        %v400 = vld [vmem:[%s390 + $0x10] sm:$0xf]
        %v401 = vld [vmem:[%s390 + $0x14] sm:$0xf]
        %v402 = vld [vmem:[%s390 + $0x18] sm:$0xf]
        %v403 = vld [vmem:[%s390 + $0x1c] sm:$0xf]
        %v404 = vld [vmem:[%s2] sm:$0xf]
        %v405 = vld [vmem:[%s2 + $0x4] sm:$0xf]
        %v406 = vld [vmem:[%s2 + $0x8] sm:$0xf]
        %v407 = vld [vmem:[%s2 + $0xc] sm:$0xf]
        %v408 = vld [vmem:[%s2 + $0x10] sm:$0xf]
        %v409 = vld [vmem:[%s2 + $0x14] sm:$0xf]
        %v410 = vld [vmem:[%s2 + $0x18] sm:$0xf]
        %v411 = vld [vmem:[%s2 + $0x1c] sm:$0xf]
        %v412 = vld [vmem:[%s2 + $0x20] sm:$0xf]
        %v413 = vld [vmem:[%s2 + $0x24] sm:$0xf]
        %v414 = vld [vmem:[%s2 + $0x28] sm:$0xf]
        %v415 = vld [vmem:[%s2 + $0x2c] sm:$0xf]
        %v416 = vld [vmem:[%s2 + $0x30] sm:$0xf]
        %v417 = vld [vmem:[%s2 + $0x34] sm:$0xf]
        %v418 = vld [vmem:[%s2 + $0x38] sm:$0xf]
        %v419 = vld [vmem:[%s2 + $0x3c] sm:$0xf]
        %v420 = vld [vmem:[%s3] sm:$0x1]
        %v422 = vlaneseq
        %v423 = vshrl.u32 %v422, 7
        %v424 = vsub.s32 0, %v423
        %v425 = vrot.slane %v420, %v424
        %v435 = vunpack.c.l.b16 %v396
        %v436 = vunpack.c.l.b16 %v397
        %v437 = vunpack.c.l.b16 %v398
        %v438 = vunpack.c.l.b16 %v399
        %v439 = vunpack.c.l.b16 %v400
        %v440 = vunpack.c.l.b16 %v401
        %v441 = vunpack.c.l.b16 %v402
        %v442 = vunpack.c.l.b16 %v403
        %v443 = vpack.c.b16 %v436, %v435
        %v444 = vpack.c.b16 %v438, %v437
        %v445 = vpack.c.b16 %v440, %v439
        %v446 = vpack.c.b16 %v442, %v441
        %v467 = vunpack.c.l.b16 %v404
        %v468 = vunpack.c.l.b16 %v405
        %v469 = vunpack.c.l.b16 %v406
        %v470 = vunpack.c.l.b16 %v407
        %v471 = vunpack.c.l.b16 %v408
        %v472 = vunpack.c.l.b16 %v409
        %v473 = vunpack.c.l.b16 %v410
        %v474 = vunpack.c.l.b16 %v411
        %v475 = vunpack.c.l.b16 %v412
        %v476 = vunpack.c.l.b16 %v413
        %v477 = vunpack.c.l.b16 %v414
        %v478 = vunpack.c.l.b16 %v415
        %v479 = vunpack.c.l.b16 %v416
        %v480 = vunpack.c.l.b16 %v417
        %v481 = vunpack.c.l.b16 %v418
        %v482 = vunpack.c.l.b16 %v419
        %v483 = vpack.c.b16 %v468, %v467
        %v484 = vpack.c.b16 %v470, %v469
        %v485 = vpack.c.b16 %v472, %v471
        %v486 = vpack.c.b16 %v474, %v473
        %v487 = vpack.c.b16 %v476, %v475
        %v488 = vpack.c.b16 %v478, %v477
        %v489 = vpack.c.b16 %v480, %v479
        %v490 = vpack.c.b16 %v482, %v481
        %499 = vmatprep.subr.bf16.mxu0 0
        %500 = vmatpush1.bf16.msra.mxu0 %v490
        %501 = vmatprep.subr.bf16.mxu0 0
        %502 = vmatpush1.bf16.msra.mxu0 %v489
        %503 = vmatprep.subr.bf16.mxu0 0
        %504 = vmatpush1.bf16.msra.mxu0 %v488
        %505 = vmatprep.subr.bf16.mxu0 0
        %506 = vmatpush1.bf16.msra.mxu0 %v487
        %507 = vmatprep.subr.bf16.mxu0 0
        %508 = vmatpush1.bf16.msra.mxu0 %v486
        %509 = vmatprep.subr.bf16.mxu0 0
        %510 = vmatpush1.bf16.msra.mxu0 %v485
        %511 = vmatprep.subr.bf16.mxu0 0
        %512 = vmatpush1.bf16.msra.mxu0 %v484
        %513 = vmatprep.subr.bf16.mxu0 0
        %514 = vmatpush1.bf16.msra.mxu0 %v483
        %515 = vmatprep.subr.bf16.mxu0 0
        %516 = vmatpush2.bf16.msra.mxu0 0
        %517 = vmatprep.subr.bf16.mxu0 0
        %518 = vmatpush2.bf16.msra.mxu0 0
        %519 = vmatprep.subr.bf16.mxu0 0
        %520 = vmatpush2.bf16.msra.mxu0 0
        %521 = vmatprep.subr.bf16.mxu0 0
        %522 = vmatpush2.bf16.msra.mxu0 0
        %523 = vmatprep.subr.bf16.mxu0 0
        %524 = vmatpush2.bf16.msra.mxu0 0
        %525 = vmatprep.subr.bf16.mxu0 0
        %526 = vmatpush2.bf16.msra.mxu0 0
        %527 = vmatprep.subr.bf16.mxu0 0
        %528 = vmatpush2.bf16.msra.mxu0 0
        %529 = vmatprep.subr.bf16.mxu0 0
        %530 = vmatpush2.bf16.msra.mxu0 0
        %531 = vmatprep.mubr.bf16.mxu0 0
        %532 = vmatmul.mubr.bf16.gmra.mxu0 %v443
        %v533 = vpop.f32.mrf.mxu0
        %v534 = vadd.f32 %v425, %v533
        %v535 = vpop.f32.mrf.mxu0
        %v536 = vpop.f32.mrf.mxu0
        %v537 = vadd.f32 %v425, %v536
        %v538 = vpop.f32.mrf.mxu0
        %539 = vmatprep.mubr.bf16.mxu0 0
        %540 = vmatmul.mubr.bf16.gmra.mxu0 %v444
        %v541 = vpop.f32.mrf.mxu0
        %v542 = vadd.f32 %v425, %v541
        %v543 = vpop.f32.mrf.mxu0
        %v544 = vpop.f32.mrf.mxu0
        %v545 = vadd.f32 %v425, %v544
        %v546 = vpop.f32.mrf.mxu0
        %547 = vmatprep.mubr.bf16.mxu0 0
        %548 = vmatmul.mubr.bf16.gmra.mxu0 %v445
        %v549 = vpop.f32.mrf.mxu0
        %v550 = vadd.f32 %v425, %v549
        %v551 = vpop.f32.mrf.mxu0
        %v552 = vpop.f32.mrf.mxu0
        %v553 = vadd.f32 %v425, %v552
        %v554 = vpop.f32.mrf.mxu0
        %555 = vmatprep.mubr.bf16.mxu0 0
        %556 = vmatmul.mubr.bf16.gmra.mxu0 %v446
        %v557 = vpop.f32.mrf.mxu0
        %v558 = vadd.f32 %v425, %v557
        %v559 = vpop.f32.mrf.mxu0
        %v560 = vpop.f32.mrf.mxu0
        %v561 = vadd.f32 %v425, %v560
        %v562 = vpop.f32.mrf.mxu0
        %563 = vdwg.mxu0
        %vm564 = vcmp.gt.f32.partialorder %v534, 0.0
        %vm565 = vcmp.gt.f32.partialorder %v537, 0.0
        %vm566 = vcmp.gt.f32.partialorder %v542, 0.0
        %vm567 = vcmp.gt.f32.partialorder %v545, 0.0
        %vm568 = vcmp.gt.f32.partialorder %v550, 0.0
        %vm569 = vcmp.gt.f32.partialorder %v553, 0.0
        %vm570 = vcmp.gt.f32.partialorder %v558, 0.0
        %vm571 = vcmp.gt.f32.partialorder %v561, 0.0
        %v572 = vmul.f32 %v534, 0.01
        %v573 = vmul.f32 %v537, 0.01
        %v574 = vmul.f32 %v542, 0.01
        %v575 = vmul.f32 %v545, 0.01
        %v576 = vmul.f32 %v550, 0.01
        %v577 = vmul.f32 %v553, 0.01
        %v578 = vmul.f32 %v558, 0.01
        %v579 = vmul.f32 %v561, 0.01
        %v580 = vsel %vm564, %v534, %v572
        %v581 = vsel %vm565, %v537, %v573
        %v582 = vsel %vm566, %v542, %v574
        %v583 = vsel %vm567, %v545, %v575
        %v584 = vsel %vm568, %v550, %v576
        %v585 = vsel %vm569, %v553, %v577
        %v586 = vsel %vm570, %v558, %v578
        %v587 = vsel %vm571, %v561, %v579
        %v588 = vpack.c.bf16 %v581, %v580
        %v589 = vpack.c.bf16 %v583, %v582
        %v590 = vpack.c.bf16 %v585, %v584
        %v591 = vpack.c.bf16 %v587, %v586
        %v592 = vld [vmem:[%s1] sm:$0xf]
        %v593 = vld [vmem:[%s1 + $0x4] sm:$0xf]
        %v594 = vld [vmem:[%s1 + $0x8] sm:$0xf]
        %v595 = vld [vmem:[%s1 + $0xc] sm:$0xf]
        %v596 = vld [vmem:[%s1 + $0x10] sm:$0xf]
        %v597 = vld [vmem:[%s1 + $0x14] sm:$0xf]
        %v598 = vld [vmem:[%s1 + $0x18] sm:$0xf]
        %v599 = vld [vmem:[%s1 + $0x1c] sm:$0xf]
        %v600 = vld [vmem:[%s1 + $0x20] sm:$0xf]
        %v601 = vld [vmem:[%s1 + $0x24] sm:$0xf]
        %v602 = vld [vmem:[%s1 + $0x28] sm:$0xf]
        %v603 = vld [vmem:[%s1 + $0x2c] sm:$0xf]
        %v604 = vld [vmem:[%s1 + $0x30] sm:$0xf]
        %v605 = vld [vmem:[%s1 + $0x34] sm:$0xf]
        %v606 = vld [vmem:[%s1 + $0x38] sm:$0xf]
        %v607 = vld [vmem:[%s1 + $0x3c] sm:$0xf]
        %v608 = vld [vmem:[%s1 + $0x40] sm:$0xf]
        %v609 = vld [vmem:[%s1 + $0x44] sm:$0xf]
        %v628 = vunpack.c.l.b16 %v592
        %v629 = vunpack.c.l.b16 %v593
        %v630 = vunpack.c.l.b16 %v594
        %v631 = vunpack.c.l.b16 %v595
        %v632 = vunpack.c.l.b16 %v596
        %v633 = vunpack.c.l.b16 %v597
        %v634 = vunpack.c.l.b16 %v598
        %v635 = vunpack.c.l.b16 %v599
        %v636 = vunpack.c.l.b16 %v600
        %v637 = vunpack.c.l.b16 %v601
        %v638 = vunpack.c.l.b16 %v602
        %v639 = vunpack.c.l.b16 %v603
        %v640 = vunpack.c.l.b16 %v604
        %v641 = vunpack.c.l.b16 %v605
        %v642 = vunpack.c.l.b16 %v606
        %v643 = vunpack.c.l.b16 %v607
        %v644 = vunpack.c.l.b16 %v608
        %v645 = vunpack.c.l.b16 %v609
        %v646 = vpack.c.b16 %v629, %v628
        %v647 = vpack.c.b16 %v631, %v630
        %v648 = vpack.c.b16 %v633, %v632
        %v649 = vpack.c.b16 %v635, %v634
        %v650 = vpack.c.b16 %v637, %v636
        %v651 = vpack.c.b16 %v639, %v638
        %v652 = vpack.c.b16 %v641, %v640
        %v653 = vpack.c.b16 %v643, %v642
        %v654 = vpack.c.b16 %v645, %v644
        %vm655 = vcmask 523264
        %v657 = vsel %vm655, %v646, 0
        %v660 = vsel %vm655, %v647, 0
        %v663 = vsel %vm655, %v648, 0
        %v666 = vsel %vm655, %v649, 0
        %v669 = vsel %vm655, %v650, 0
        %v672 = vsel %vm655, %v651, 0
        %v675 = vsel %vm655, %v652, 0
        %v678 = vsel %vm655, %v653, 0
        %v681 = vsel %vm655, %v654, 0
        %683 = vmatprep.subr.bf16.mxu0 0
        %684 = vmatpush1.bf16.msra.mxu0 0
        %685 = vmatprep.subr.bf16.mxu0 0
        %686 = vmatpush1.bf16.msra.mxu0 0
        %687 = vmatprep.subr.bf16.mxu0 0
        %688 = vmatpush1.bf16.msra.mxu0 0
        %689 = vmatprep.subr.bf16.mxu0 0
        %690 = vmatpush1.bf16.msra.mxu0 0
        %691 = vmatprep.subr.bf16.mxu0 0
        %692 = vmatpush1.bf16.msra.mxu0 %v591
        %693 = vmatprep.subr.bf16.mxu0 0
        %694 = vmatpush1.bf16.msra.mxu0 %v590
        %695 = vmatprep.subr.bf16.mxu0 0
        %696 = vmatpush1.bf16.msra.mxu0 %v589
        %697 = vmatprep.subr.bf16.mxu0 0
        %698 = vmatpush1.bf16.msra.mxu0 %v588
        %699 = vmatprep.subr.bf16.mxu0 0
        %700 = vmatpush2.bf16.msra.mxu0 0
        %701 = vmatprep.subr.bf16.mxu0 0
        %702 = vmatpush2.bf16.msra.mxu0 0
        %703 = vmatprep.subr.bf16.mxu0 0
        %704 = vmatpush2.bf16.msra.mxu0 0
        %705 = vmatprep.subr.bf16.mxu0 0
        %706 = vmatpush2.bf16.msra.mxu0 0
        %707 = vmatprep.subr.bf16.mxu0 0
        %708 = vmatpush2.bf16.msra.mxu0 0
        %709 = vmatprep.subr.bf16.mxu0 0
        %710 = vmatpush2.bf16.msra.mxu0 0
        %711 = vmatprep.subr.bf16.mxu0 0
        %712 = vmatpush2.bf16.msra.mxu0 0
        %713 = vmatprep.subr.bf16.mxu0 0
        %714 = vmatpush2.bf16.msra.mxu0 0
        %715 = vmatprep.mubr.bf16.mxu0 0
        %716 = vmatmul.mubr.bf16.gmra.mxu0 %v657
        %v717 = vpop.f32.mrf.mxu0
        %v718 = vadd.f32 0.0, %v717
        %v719 = vpop.f32.mrf.mxu0
        %v720 = vpop.f32.mrf.mxu0
        %v721 = vadd.f32 0.0, %v720
        %v722 = vpop.f32.mrf.mxu0
        %723 = vmatprep.mubr.bf16.mxu0 0
        %724 = vmatmul.mubr.bf16.gmra.mxu0 %v660
        %v725 = vpop.f32.mrf.mxu0
        %v726 = vadd.f32 0.0, %v725
        %v727 = vpop.f32.mrf.mxu0
        %v728 = vpop.f32.mrf.mxu0
        %v729 = vadd.f32 0.0, %v728
        %v730 = vpop.f32.mrf.mxu0
        %731 = vmatprep.mubr.bf16.mxu0 0
        %732 = vmatmul.mubr.bf16.gmra.mxu0 %v663
        %v733 = vpop.f32.mrf.mxu0
        %v734 = vadd.f32 0.0, %v733
        %v735 = vpop.f32.mrf.mxu0
        %v736 = vpop.f32.mrf.mxu0
        %v737 = vadd.f32 0.0, %v736
        %v738 = vpop.f32.mrf.mxu0
        %739 = vmatprep.mubr.bf16.mxu0 0
        %740 = vmatmul.mubr.bf16.gmra.mxu0 %v666
        %v741 = vpop.f32.mrf.mxu0
        %v742 = vadd.f32 0.0, %v741
        %v743 = vpop.f32.mrf.mxu0
        %v744 = vpop.f32.mrf.mxu0
        %v745 = vadd.f32 0.0, %v744
        %v746 = vpop.f32.mrf.mxu0
        %747 = vmatprep.mubr.bf16.mxu0 0
        %748 = vmatmul.mubr.bf16.gmra.mxu0 %v669
        %v749 = vpop.f32.mrf.mxu0
        %v750 = vadd.f32 0.0, %v749
        %v751 = vpop.f32.mrf.mxu0
        %v752 = vpop.f32.mrf.mxu0
        %v753 = vadd.f32 0.0, %v752
        %v754 = vpop.f32.mrf.mxu0
        %755 = vmatprep.mubr.bf16.mxu0 0
        %756 = vmatmul.mubr.bf16.gmra.mxu0 %v672
        %v757 = vpop.f32.mrf.mxu0
        %v758 = vadd.f32 0.0, %v757
        %v759 = vpop.f32.mrf.mxu0
        %v760 = vpop.f32.mrf.mxu0
        %v761 = vadd.f32 0.0, %v760
        %v762 = vpop.f32.mrf.mxu0
        %763 = vmatprep.mubr.bf16.mxu0 0
        %764 = vmatmul.mubr.bf16.gmra.mxu0 %v675
        %v765 = vpop.f32.mrf.mxu0
        %v766 = vadd.f32 0.0, %v765
        %v767 = vpop.f32.mrf.mxu0
        %v768 = vpop.f32.mrf.mxu0
        %v769 = vadd.f32 0.0, %v768
        %v770 = vpop.f32.mrf.mxu0
        %771 = vmatprep.mubr.bf16.mxu0 0
        %772 = vmatmul.mubr.bf16.gmra.mxu0 %v678
        %v773 = vpop.f32.mrf.mxu0
        %v774 = vadd.f32 0.0, %v773
        %v775 = vpop.f32.mrf.mxu0
        %v776 = vpop.f32.mrf.mxu0
        %v777 = vadd.f32 0.0, %v776
        %v778 = vpop.f32.mrf.mxu0
        %779 = vmatprep.mubr.bf16.mxu0 0
        %780 = vmatmul.mubr.bf16.gmra.mxu0 %v681
        %v781 = vpop.f32.mrf.mxu0
        %v782 = vadd.f32 0.0, %v781
        %v783 = vpop.f32.mrf.mxu0
        %v784 = vpop.f32.mrf.mxu0
        %v785 = vadd.f32 0.0, %v784
        %v786 = vpop.f32.mrf.mxu0
        %787 = vdwg.mxu0
        %v788 = vpack.c.bf16 %v721, %v718
        %v789 = vpack.c.bf16 %v729, %v726
        %v790 = vpack.c.bf16 %v737, %v734
        %v791 = vpack.c.bf16 %v745, %v742
        %v792 = vpack.c.bf16 %v753, %v750
        %v793 = vpack.c.bf16 %v761, %v758
        %v794 = vpack.c.bf16 %v769, %v766
        %v795 = vpack.c.bf16 %v777, %v774
        %v796 = vpack.c.bf16 %v785, %v782
        %v797 = vld [vmem:[%s4] sm:$0xf]
        %v798 = vld [vmem:[%s4 + $0x4] sm:$0xf]
        %v799 = vld [vmem:[%s4 + $0x8] sm:$0xf]
        %v800 = vld [vmem:[%s4 + $0xc] sm:$0xf]
        %v801 = vld [vmem:[%s4 + $0x10] sm:$0xf]
        %v802 = vld [vmem:[%s4 + $0x14] sm:$0xf]
        %v803 = vld [vmem:[%s4 + $0x18] sm:$0xf]
        %v804 = vld [vmem:[%s4 + $0x1c] sm:$0xf]
        %v805 = vld [vmem:[%s4 + $0x20] sm:$0xf]
        %v806 = vld [vmem:[%s4 + $0x24] sm:$0xf]
        %v807 = vld [vmem:[%s4 + $0x28] sm:$0xf]
        %v808 = vld [vmem:[%s4 + $0x2c] sm:$0xf]
        %v809 = vld [vmem:[%s4 + $0x30] sm:$0xf]
        %v810 = vld [vmem:[%s4 + $0x34] sm:$0xf]
        %v811 = vld [vmem:[%s4 + $0x38] sm:$0xf]
        %v812 = vld [vmem:[%s4 + $0x3c] sm:$0xf]
        %s813 = scalar_lea.vmem %s4, 64
        %v814 = vld [vmem:[%s813] sm:$0xf]
        %v815 = vld [vmem:[%s813 + $0x4] sm:$0xf]
        %v816 = vld [vmem:[%s813 + $0x8] sm:$0xf]
        %v817 = vld [vmem:[%s813 + $0xc] sm:$0xf]
        %v818 = vld [vmem:[%s813 + $0x10] sm:$0xf]
        %v819 = vld [vmem:[%s813 + $0x14] sm:$0xf]
        %v820 = vld [vmem:[%s813 + $0x18] sm:$0xf]
        %v821 = vld [vmem:[%s813 + $0x1c] sm:$0xf]
        %v822 = vld [vmem:[%s813 + $0x20] sm:$0xf]
        %v823 = vld [vmem:[%s813 + $0x24] sm:$0xf]
        %v824 = vld [vmem:[%s813 + $0x28] sm:$0xf]
        %v825 = vld [vmem:[%s813 + $0x2c] sm:$0xf]
        %v826 = vld [vmem:[%s813 + $0x30] sm:$0xf]
        %v827 = vld [vmem:[%s813 + $0x34] sm:$0xf]
        %v828 = vld [vmem:[%s813 + $0x38] sm:$0xf]
        %v829 = vld [vmem:[%s813 + $0x3c] sm:$0xf]
        %v846 = vunpack.c.l.b16 %v814
        %v847 = vunpack.c.l.b16 %v815
        %v848 = vunpack.c.l.b16 %v816
        %v849 = vunpack.c.l.b16 %v817
        %v850 = vunpack.c.l.b16 %v818
        %v851 = vunpack.c.l.b16 %v819
        %v852 = vunpack.c.l.b16 %v820
        %v853 = vunpack.c.l.b16 %v821
        %v854 = vunpack.c.l.b16 %v822
        %v855 = vunpack.c.l.b16 %v823
        %v856 = vunpack.c.l.b16 %v824
        %v857 = vunpack.c.l.b16 %v825
        %v858 = vunpack.c.l.b16 %v826
        %v859 = vunpack.c.l.b16 %v827
        %v860 = vunpack.c.l.b16 %v828
        %v861 = vunpack.c.l.b16 %v829
        %v862 = vpack.c.b16 %v847, %v846
        %v863 = vpack.c.b16 %v849, %v848
        %v864 = vpack.c.b16 %v851, %v850
        %v865 = vpack.c.b16 %v853, %v852
        %v866 = vpack.c.b16 %v855, %v854
        %v867 = vpack.c.b16 %v857, %v856
        %v868 = vpack.c.b16 %v859, %v858
        %v869 = vpack.c.b16 %v861, %v860
        %878 = vmatprep.subr.bf16.mxu0 0
        %879 = vmatpush1.bf16.msra.mxu0 %v869
        %880 = vmatprep.subr.bf16.mxu0 0
        %881 = vmatpush1.bf16.msra.mxu0 %v868
        %882 = vmatprep.subr.bf16.mxu0 0
        %883 = vmatpush1.bf16.msra.mxu0 %v867
        %884 = vmatprep.subr.bf16.mxu0 0
        %885 = vmatpush1.bf16.msra.mxu0 %v866
        %886 = vmatprep.subr.bf16.mxu0 0
        %887 = vmatpush1.bf16.msra.mxu0 %v865
        %888 = vmatprep.subr.bf16.mxu0 0
        %889 = vmatpush1.bf16.msra.mxu0 %v864
        %890 = vmatprep.subr.bf16.mxu0 0
        %891 = vmatpush1.bf16.msra.mxu0 %v863
        %892 = vmatprep.subr.bf16.mxu0 0
        %893 = vmatpush1.bf16.msra.mxu0 %v862
        %894 = vmatprep.subr.bf16.mxu0 0
        %895 = vmatpush2.bf16.msra.mxu0 0
        %896 = vmatprep.subr.bf16.mxu0 0
        %897 = vmatpush2.bf16.msra.mxu0 0
        %898 = vmatprep.subr.bf16.mxu0 0
        %899 = vmatpush2.bf16.msra.mxu0 0
        %900 = vmatprep.subr.bf16.mxu0 0
        %901 = vmatpush2.bf16.msra.mxu0 0
        %902 = vmatprep.subr.bf16.mxu0 0
        %903 = vmatpush2.bf16.msra.mxu0 0
        %904 = vmatprep.subr.bf16.mxu0 0
        %905 = vmatpush2.bf16.msra.mxu0 0
        %906 = vmatprep.subr.bf16.mxu0 0
        %907 = vmatpush2.bf16.msra.mxu0 0
        %908 = vmatprep.subr.bf16.mxu0 0
        %909 = vmatpush2.bf16.msra.mxu0 0
        %910 = vmatprep.mubr.bf16.mxu0 0
        %911 = vmatmul.mubr.bf16.gmra.mxu0 %v789
        %v912 = vpop.f32.mrf.mxu0
        %v913 = vadd.f32 0.0, %v912
        %v914 = vpop.f32.mrf.mxu0
        %v915 = vpop.f32.mrf.mxu0
        %v916 = vadd.f32 0.0, %v915
        %v917 = vpop.f32.mrf.mxu0
        %918 = vdwg.mxu0
        %v935 = vunpack.c.l.b16 %v797
        %v936 = vunpack.c.l.b16 %v798
        %v937 = vunpack.c.l.b16 %v799
        %v938 = vunpack.c.l.b16 %v800
        %v939 = vunpack.c.l.b16 %v801
        %v940 = vunpack.c.l.b16 %v802
        %v941 = vunpack.c.l.b16 %v803
        %v942 = vunpack.c.l.b16 %v804
        %v943 = vunpack.c.l.b16 %v805
        %v944 = vunpack.c.l.b16 %v806
        %v945 = vunpack.c.l.b16 %v807
        %v946 = vunpack.c.l.b16 %v808
        %v947 = vunpack.c.l.b16 %v809
        %v948 = vunpack.c.l.b16 %v810
        %v949 = vunpack.c.l.b16 %v811
        %v950 = vunpack.c.l.b16 %v812
        %v951 = vpack.c.b16 %v936, %v935
        %v952 = vpack.c.b16 %v938, %v937
        %v953 = vpack.c.b16 %v940, %v939
        %v954 = vpack.c.b16 %v942, %v941
        %v955 = vpack.c.b16 %v944, %v943
        %v956 = vpack.c.b16 %v946, %v945
        %v957 = vpack.c.b16 %v948, %v947
        %v958 = vpack.c.b16 %v950, %v949
        %967 = vmatprep.subr.bf16.mxu0 0
        %968 = vmatpush1.bf16.msra.mxu0 %v958
        %969 = vmatprep.subr.bf16.mxu0 0
        %970 = vmatpush1.bf16.msra.mxu0 %v957
        %971 = vmatprep.subr.bf16.mxu0 0
        %972 = vmatpush1.bf16.msra.mxu0 %v956
        %973 = vmatprep.subr.bf16.mxu0 0
        %974 = vmatpush1.bf16.msra.mxu0 %v955
        %975 = vmatprep.subr.bf16.mxu0 0
        %976 = vmatpush1.bf16.msra.mxu0 %v954
        %977 = vmatprep.subr.bf16.mxu0 0
        %978 = vmatpush1.bf16.msra.mxu0 %v953
        %979 = vmatprep.subr.bf16.mxu0 0
        %980 = vmatpush1.bf16.msra.mxu0 %v952
        %981 = vmatprep.subr.bf16.mxu0 0
        %982 = vmatpush1.bf16.msra.mxu0 %v951
        %983 = vmatprep.subr.bf16.mxu0 0
        %984 = vmatpush2.bf16.msra.mxu0 0
        %985 = vmatprep.subr.bf16.mxu0 0
        %986 = vmatpush2.bf16.msra.mxu0 0
        %987 = vmatprep.subr.bf16.mxu0 0
        %988 = vmatpush2.bf16.msra.mxu0 0
        %989 = vmatprep.subr.bf16.mxu0 0
        %990 = vmatpush2.bf16.msra.mxu0 0
        %991 = vmatprep.subr.bf16.mxu0 0
        %992 = vmatpush2.bf16.msra.mxu0 0
        %993 = vmatprep.subr.bf16.mxu0 0
        %994 = vmatpush2.bf16.msra.mxu0 0
        %995 = vmatprep.subr.bf16.mxu0 0
        %996 = vmatpush2.bf16.msra.mxu0 0
        %997 = vmatprep.subr.bf16.mxu0 0
        %998 = vmatpush2.bf16.msra.mxu0 0
        %999 = vmatprep.mubr.bf16.mxu0 0
        %1000 = vmatmul.mubr.bf16.gmra.mxu0 %v788
        %v1001 = vpop.f32.mrf.mxu0
        %v1002 = vadd.f32 %v913, %v1001
        %v1003 = vpop.f32.mrf.mxu0
        %v1004 = vpop.f32.mrf.mxu0
        %v1005 = vadd.f32 %v916, %v1004
        %v1006 = vpop.f32.mrf.mxu0
        %1007 = vdwg.mxu0
        %s1008 = scalar_lea.vmem %s4, 128
        %v1009 = vld [vmem:[%s1008] sm:$0xf]
        %v1010 = vld [vmem:[%s1008 + $0x4] sm:$0xf]
        %v1011 = vld [vmem:[%s1008 + $0x8] sm:$0xf]
        %v1012 = vld [vmem:[%s1008 + $0xc] sm:$0xf]
        %v1013 = vld [vmem:[%s1008 + $0x10] sm:$0xf]
        %v1014 = vld [vmem:[%s1008 + $0x14] sm:$0xf]
        %v1015 = vld [vmem:[%s1008 + $0x18] sm:$0xf]
        %v1016 = vld [vmem:[%s1008 + $0x1c] sm:$0xf]
        %v1017 = vld [vmem:[%s1008 + $0x20] sm:$0xf]
        %v1018 = vld [vmem:[%s1008 + $0x24] sm:$0xf]
        %v1019 = vld [vmem:[%s1008 + $0x28] sm:$0xf]
        %v1020 = vld [vmem:[%s1008 + $0x2c] sm:$0xf]
        %v1021 = vld [vmem:[%s1008 + $0x30] sm:$0xf]
        %v1022 = vld [vmem:[%s1008 + $0x34] sm:$0xf]
        %v1023 = vld [vmem:[%s1008 + $0x38] sm:$0xf]
        %v1024 = vld [vmem:[%s1008 + $0x3c] sm:$0xf]
        %v1041 = vunpack.c.l.b16 %v1009
        %v1042 = vunpack.c.l.b16 %v1010
        %v1043 = vunpack.c.l.b16 %v1011
        %v1044 = vunpack.c.l.b16 %v1012
        %v1045 = vunpack.c.l.b16 %v1013
        %v1046 = vunpack.c.l.b16 %v1014
        %v1047 = vunpack.c.l.b16 %v1015
        %v1048 = vunpack.c.l.b16 %v1016
        %v1049 = vunpack.c.l.b16 %v1017
        %v1050 = vunpack.c.l.b16 %v1018
        %v1051 = vunpack.c.l.b16 %v1019
        %v1052 = vunpack.c.l.b16 %v1020
        %v1053 = vunpack.c.l.b16 %v1021
        %v1054 = vunpack.c.l.b16 %v1022
        %v1055 = vunpack.c.l.b16 %v1023
        %v1056 = vunpack.c.l.b16 %v1024
        %v1057 = vpack.c.b16 %v1042, %v1041
        %v1058 = vpack.c.b16 %v1044, %v1043
        %v1059 = vpack.c.b16 %v1046, %v1045
        %v1060 = vpack.c.b16 %v1048, %v1047
        %v1061 = vpack.c.b16 %v1050, %v1049
        %v1062 = vpack.c.b16 %v1052, %v1051
        %v1063 = vpack.c.b16 %v1054, %v1053
        %v1064 = vpack.c.b16 %v1056, %v1055
        %1073 = vmatprep.subr.bf16.mxu0 0
        %1074 = vmatpush1.bf16.msra.mxu0 %v1064
        %1075 = vmatprep.subr.bf16.mxu0 0
        %1076 = vmatpush1.bf16.msra.mxu0 %v1063
        %1077 = vmatprep.subr.bf16.mxu0 0
        %1078 = vmatpush1.bf16.msra.mxu0 %v1062
        %1079 = vmatprep.subr.bf16.mxu0 0
        %1080 = vmatpush1.bf16.msra.mxu0 %v1061
        %1081 = vmatprep.subr.bf16.mxu0 0
        %1082 = vmatpush1.bf16.msra.mxu0 %v1060
        %1083 = vmatprep.subr.bf16.mxu0 0
        %1084 = vmatpush1.bf16.msra.mxu0 %v1059
        %1085 = vmatprep.subr.bf16.mxu0 0
        %1086 = vmatpush1.bf16.msra.mxu0 %v1058
        %1087 = vmatprep.subr.bf16.mxu0 0
        %1088 = vmatpush1.bf16.msra.mxu0 %v1057
        %1089 = vmatprep.subr.bf16.mxu0 0
        %1090 = vmatpush2.bf16.msra.mxu0 0
        %1091 = vmatprep.subr.bf16.mxu0 0
        %1092 = vmatpush2.bf16.msra.mxu0 0
        %1093 = vmatprep.subr.bf16.mxu0 0
        %1094 = vmatpush2.bf16.msra.mxu0 0
        %1095 = vmatprep.subr.bf16.mxu0 0
        %1096 = vmatpush2.bf16.msra.mxu0 0
        %1097 = vmatprep.subr.bf16.mxu0 0
        %1098 = vmatpush2.bf16.msra.mxu0 0
        %1099 = vmatprep.subr.bf16.mxu0 0
        %1100 = vmatpush2.bf16.msra.mxu0 0
        %1101 = vmatprep.subr.bf16.mxu0 0
        %1102 = vmatpush2.bf16.msra.mxu0 0
        %1103 = vmatprep.subr.bf16.mxu0 0
        %1104 = vmatpush2.bf16.msra.mxu0 0
        %1105 = vmatprep.mubr.bf16.mxu0 0
        %1106 = vmatmul.mubr.bf16.gmra.mxu0 %v790
        %v1107 = vpop.f32.mrf.mxu0
        %v1108 = vadd.f32 0.0, %v1107
        %v1109 = vpop.f32.mrf.mxu0
        %v1110 = vpop.f32.mrf.mxu0
        %v1111 = vadd.f32 0.0, %v1110
        %v1112 = vpop.f32.mrf.mxu0
        %1113 = vdwg.mxu0
        %v1114 = vadd.f32 %v1002, %v1108
        %v1115 = vadd.f32 %v1005, %v1111
        %s1116 = scalar_lea.vmem %s4, 192
        %v1117 = vld [vmem:[%s1116] sm:$0xf]
        %v1118 = vld [vmem:[%s1116 + $0x4] sm:$0xf]
        %v1119 = vld [vmem:[%s1116 + $0x8] sm:$0xf]
        %v1120 = vld [vmem:[%s1116 + $0xc] sm:$0xf]
        %v1121 = vld [vmem:[%s1116 + $0x10] sm:$0xf]
        %v1122 = vld [vmem:[%s1116 + $0x14] sm:$0xf]
        %v1123 = vld [vmem:[%s1116 + $0x18] sm:$0xf]
        %v1124 = vld [vmem:[%s1116 + $0x1c] sm:$0xf]
        %v1125 = vld [vmem:[%s1116 + $0x20] sm:$0xf]
        %v1126 = vld [vmem:[%s1116 + $0x24] sm:$0xf]
        %v1127 = vld [vmem:[%s1116 + $0x28] sm:$0xf]
        %v1128 = vld [vmem:[%s1116 + $0x2c] sm:$0xf]
        %v1129 = vld [vmem:[%s1116 + $0x30] sm:$0xf]
        %v1130 = vld [vmem:[%s1116 + $0x34] sm:$0xf]
        %v1131 = vld [vmem:[%s1116 + $0x38] sm:$0xf]
        %v1132 = vld [vmem:[%s1116 + $0x3c] sm:$0xf]
        %v1149 = vunpack.c.l.b16 %v1117
        %v1150 = vunpack.c.l.b16 %v1118
        %v1151 = vunpack.c.l.b16 %v1119
        %v1152 = vunpack.c.l.b16 %v1120
        %v1153 = vunpack.c.l.b16 %v1121
        %v1154 = vunpack.c.l.b16 %v1122
        %v1155 = vunpack.c.l.b16 %v1123
        %v1156 = vunpack.c.l.b16 %v1124
        %v1157 = vunpack.c.l.b16 %v1125
        %v1158 = vunpack.c.l.b16 %v1126
        %v1159 = vunpack.c.l.b16 %v1127
        %v1160 = vunpack.c.l.b16 %v1128
        %v1161 = vunpack.c.l.b16 %v1129
        %v1162 = vunpack.c.l.b16 %v1130
        %v1163 = vunpack.c.l.b16 %v1131
        %v1164 = vunpack.c.l.b16 %v1132
        %v1165 = vpack.c.b16 %v1150, %v1149
        %v1166 = vpack.c.b16 %v1152, %v1151
        %v1167 = vpack.c.b16 %v1154, %v1153
        %v1168 = vpack.c.b16 %v1156, %v1155
        %v1169 = vpack.c.b16 %v1158, %v1157
        %v1170 = vpack.c.b16 %v1160, %v1159
        %v1171 = vpack.c.b16 %v1162, %v1161
        %v1172 = vpack.c.b16 %v1164, %v1163
        %1181 = vmatprep.subr.bf16.mxu0 0
        %1182 = vmatpush1.bf16.msra.mxu0 %v1172
        %1183 = vmatprep.subr.bf16.mxu0 0
        %1184 = vmatpush1.bf16.msra.mxu0 %v1171
        %1185 = vmatprep.subr.bf16.mxu0 0
        %1186 = vmatpush1.bf16.msra.mxu0 %v1170
        %1187 = vmatprep.subr.bf16.mxu0 0
        %1188 = vmatpush1.bf16.msra.mxu0 %v1169
        %1189 = vmatprep.subr.bf16.mxu0 0
        %1190 = vmatpush1.bf16.msra.mxu0 %v1168
        %1191 = vmatprep.subr.bf16.mxu0 0
        %1192 = vmatpush1.bf16.msra.mxu0 %v1167
        %1193 = vmatprep.subr.bf16.mxu0 0
        %1194 = vmatpush1.bf16.msra.mxu0 %v1166
        %1195 = vmatprep.subr.bf16.mxu0 0
        %1196 = vmatpush1.bf16.msra.mxu0 %v1165
        %1197 = vmatprep.subr.bf16.mxu0 0
        %1198 = vmatpush2.bf16.msra.mxu0 0
        %1199 = vmatprep.subr.bf16.mxu0 0
        %1200 = vmatpush2.bf16.msra.mxu0 0
        %1201 = vmatprep.subr.bf16.mxu0 0
        %1202 = vmatpush2.bf16.msra.mxu0 0
        %1203 = vmatprep.subr.bf16.mxu0 0
        %1204 = vmatpush2.bf16.msra.mxu0 0
        %1205 = vmatprep.subr.bf16.mxu0 0
        %1206 = vmatpush2.bf16.msra.mxu0 0
        %1207 = vmatprep.subr.bf16.mxu0 0
        %1208 = vmatpush2.bf16.msra.mxu0 0
        %1209 = vmatprep.subr.bf16.mxu0 0
        %1210 = vmatpush2.bf16.msra.mxu0 0
        %1211 = vmatprep.subr.bf16.mxu0 0
        %1212 = vmatpush2.bf16.msra.mxu0 0
        %1213 = vmatprep.mubr.bf16.mxu0 0
        %1214 = vmatmul.mubr.bf16.gmra.mxu0 %v791
        %v1215 = vpop.f32.mrf.mxu0
        %v1216 = vadd.f32 0.0, %v1215
        %v1217 = vpop.f32.mrf.mxu0
        %v1218 = vpop.f32.mrf.mxu0
        %v1219 = vadd.f32 0.0, %v1218
        %v1220 = vpop.f32.mrf.mxu0
        %1221 = vdwg.mxu0
        %v1222 = vadd.f32 %v1114, %v1216
        %v1223 = vadd.f32 %v1115, %v1219
        %s1224 = scalar_lea.vmem %s4, 256
        %v1225 = vld [vmem:[%s1224] sm:$0xf]
        %v1226 = vld [vmem:[%s1224 + $0x4] sm:$0xf]
        %v1227 = vld [vmem:[%s1224 + $0x8] sm:$0xf]
        %v1228 = vld [vmem:[%s1224 + $0xc] sm:$0xf]
        %v1229 = vld [vmem:[%s1224 + $0x10] sm:$0xf]
        %v1230 = vld [vmem:[%s1224 + $0x14] sm:$0xf]
        %v1231 = vld [vmem:[%s1224 + $0x18] sm:$0xf]
        %v1232 = vld [vmem:[%s1224 + $0x1c] sm:$0xf]
        %v1233 = vld [vmem:[%s1224 + $0x20] sm:$0xf]
        %v1234 = vld [vmem:[%s1224 + $0x24] sm:$0xf]
        %v1235 = vld [vmem:[%s1224 + $0x28] sm:$0xf]
        %v1236 = vld [vmem:[%s1224 + $0x2c] sm:$0xf]
        %v1237 = vld [vmem:[%s1224 + $0x30] sm:$0xf]
        %v1238 = vld [vmem:[%s1224 + $0x34] sm:$0xf]
        %v1239 = vld [vmem:[%s1224 + $0x38] sm:$0xf]
        %v1240 = vld [vmem:[%s1224 + $0x3c] sm:$0xf]
        %v1257 = vunpack.c.l.b16 %v1225
        %v1258 = vunpack.c.l.b16 %v1226
        %v1259 = vunpack.c.l.b16 %v1227
        %v1260 = vunpack.c.l.b16 %v1228
        %v1261 = vunpack.c.l.b16 %v1229
        %v1262 = vunpack.c.l.b16 %v1230
        %v1263 = vunpack.c.l.b16 %v1231
        %v1264 = vunpack.c.l.b16 %v1232
        %v1265 = vunpack.c.l.b16 %v1233
        %v1266 = vunpack.c.l.b16 %v1234
        %v1267 = vunpack.c.l.b16 %v1235
        %v1268 = vunpack.c.l.b16 %v1236
        %v1269 = vunpack.c.l.b16 %v1237
        %v1270 = vunpack.c.l.b16 %v1238
        %v1271 = vunpack.c.l.b16 %v1239
        %v1272 = vunpack.c.l.b16 %v1240
        %v1273 = vpack.c.b16 %v1258, %v1257
        %v1274 = vpack.c.b16 %v1260, %v1259
        %v1275 = vpack.c.b16 %v1262, %v1261
        %v1276 = vpack.c.b16 %v1264, %v1263
        %v1277 = vpack.c.b16 %v1266, %v1265
        %v1278 = vpack.c.b16 %v1268, %v1267
        %v1279 = vpack.c.b16 %v1270, %v1269
        %v1280 = vpack.c.b16 %v1272, %v1271
        %1289 = vmatprep.subr.bf16.mxu0 0
        %1290 = vmatpush1.bf16.msra.mxu0 %v1280
        %1291 = vmatprep.subr.bf16.mxu0 0
        %1292 = vmatpush1.bf16.msra.mxu0 %v1279
        %1293 = vmatprep.subr.bf16.mxu0 0
        %1294 = vmatpush1.bf16.msra.mxu0 %v1278
        %1295 = vmatprep.subr.bf16.mxu0 0
        %1296 = vmatpush1.bf16.msra.mxu0 %v1277
        %1297 = vmatprep.subr.bf16.mxu0 0
        %1298 = vmatpush1.bf16.msra.mxu0 %v1276
        %1299 = vmatprep.subr.bf16.mxu0 0
        %1300 = vmatpush1.bf16.msra.mxu0 %v1275
        %1301 = vmatprep.subr.bf16.mxu0 0
        %1302 = vmatpush1.bf16.msra.mxu0 %v1274
        %1303 = vmatprep.subr.bf16.mxu0 0
        %1304 = vmatpush1.bf16.msra.mxu0 %v1273
        %1305 = vmatprep.subr.bf16.mxu0 0
        %1306 = vmatpush2.bf16.msra.mxu0 0
        %1307 = vmatprep.subr.bf16.mxu0 0
        %1308 = vmatpush2.bf16.msra.mxu0 0
        %1309 = vmatprep.subr.bf16.mxu0 0
        %1310 = vmatpush2.bf16.msra.mxu0 0
        %1311 = vmatprep.subr.bf16.mxu0 0
        %1312 = vmatpush2.bf16.msra.mxu0 0
        %1313 = vmatprep.subr.bf16.mxu0 0
        %1314 = vmatpush2.bf16.msra.mxu0 0
        %1315 = vmatprep.subr.bf16.mxu0 0
        %1316 = vmatpush2.bf16.msra.mxu0 0
        %1317 = vmatprep.subr.bf16.mxu0 0
        %1318 = vmatpush2.bf16.msra.mxu0 0
        %1319 = vmatprep.subr.bf16.mxu0 0
        %1320 = vmatpush2.bf16.msra.mxu0 0
        %1321 = vmatprep.mubr.bf16.mxu0 0
        %1322 = vmatmul.mubr.bf16.gmra.mxu0 %v792
        %v1323 = vpop.f32.mrf.mxu0
        %v1324 = vadd.f32 0.0, %v1323
        %v1325 = vpop.f32.mrf.mxu0
        %v1326 = vpop.f32.mrf.mxu0
        %v1327 = vadd.f32 0.0, %v1326
        %v1328 = vpop.f32.mrf.mxu0
        %1329 = vdwg.mxu0
        %v1330 = vadd.f32 %v1222, %v1324
        %v1331 = vadd.f32 %v1223, %v1327
        %s1332 = scalar_lea.vmem %s4, 320
        %v1333 = vld [vmem:[%s1332] sm:$0xf]
        %v1334 = vld [vmem:[%s1332 + $0x4] sm:$0xf]
        %v1335 = vld [vmem:[%s1332 + $0x8] sm:$0xf]
        %v1336 = vld [vmem:[%s1332 + $0xc] sm:$0xf]
        %v1337 = vld [vmem:[%s1332 + $0x10] sm:$0xf]
        %v1338 = vld [vmem:[%s1332 + $0x14] sm:$0xf]
        %v1339 = vld [vmem:[%s1332 + $0x18] sm:$0xf]
        %v1340 = vld [vmem:[%s1332 + $0x1c] sm:$0xf]
        %v1341 = vld [vmem:[%s1332 + $0x20] sm:$0xf]
        %v1342 = vld [vmem:[%s1332 + $0x24] sm:$0xf]
        %v1343 = vld [vmem:[%s1332 + $0x28] sm:$0xf]
        %v1344 = vld [vmem:[%s1332 + $0x2c] sm:$0xf]
        %v1345 = vld [vmem:[%s1332 + $0x30] sm:$0xf]
        %v1346 = vld [vmem:[%s1332 + $0x34] sm:$0xf]
        %v1347 = vld [vmem:[%s1332 + $0x38] sm:$0xf]
        %v1348 = vld [vmem:[%s1332 + $0x3c] sm:$0xf]
        %v1365 = vunpack.c.l.b16 %v1333
        %v1366 = vunpack.c.l.b16 %v1334
        %v1367 = vunpack.c.l.b16 %v1335
        %v1368 = vunpack.c.l.b16 %v1336
        %v1369 = vunpack.c.l.b16 %v1337
        %v1370 = vunpack.c.l.b16 %v1338
        %v1371 = vunpack.c.l.b16 %v1339
        %v1372 = vunpack.c.l.b16 %v1340
        %v1373 = vunpack.c.l.b16 %v1341
        %v1374 = vunpack.c.l.b16 %v1342
        %v1375 = vunpack.c.l.b16 %v1343
        %v1376 = vunpack.c.l.b16 %v1344
        %v1377 = vunpack.c.l.b16 %v1345
        %v1378 = vunpack.c.l.b16 %v1346
        %v1379 = vunpack.c.l.b16 %v1347
        %v1380 = vunpack.c.l.b16 %v1348
        %v1381 = vpack.c.b16 %v1366, %v1365
        %v1382 = vpack.c.b16 %v1368, %v1367
        %v1383 = vpack.c.b16 %v1370, %v1369
        %v1384 = vpack.c.b16 %v1372, %v1371
        %v1385 = vpack.c.b16 %v1374, %v1373
        %v1386 = vpack.c.b16 %v1376, %v1375
        %v1387 = vpack.c.b16 %v1378, %v1377
        %v1388 = vpack.c.b16 %v1380, %v1379
        %1397 = vmatprep.subr.bf16.mxu0 0
        %1398 = vmatpush1.bf16.msra.mxu0 %v1388
        %1399 = vmatprep.subr.bf16.mxu0 0
        %1400 = vmatpush1.bf16.msra.mxu0 %v1387
        %1401 = vmatprep.subr.bf16.mxu0 0
        %1402 = vmatpush1.bf16.msra.mxu0 %v1386
        %1403 = vmatprep.subr.bf16.mxu0 0
        %1404 = vmatpush1.bf16.msra.mxu0 %v1385
        %1405 = vmatprep.subr.bf16.mxu0 0
        %1406 = vmatpush1.bf16.msra.mxu0 %v1384
        %1407 = vmatprep.subr.bf16.mxu0 0
        %1408 = vmatpush1.bf16.msra.mxu0 %v1383
        %1409 = vmatprep.subr.bf16.mxu0 0
        %1410 = vmatpush1.bf16.msra.mxu0 %v1382
        %1411 = vmatprep.subr.bf16.mxu0 0
        %1412 = vmatpush1.bf16.msra.mxu0 %v1381
        %1413 = vmatprep.subr.bf16.mxu0 0
        %1414 = vmatpush2.bf16.msra.mxu0 0
        %1415 = vmatprep.subr.bf16.mxu0 0
        %1416 = vmatpush2.bf16.msra.mxu0 0
        %1417 = vmatprep.subr.bf16.mxu0 0
        %1418 = vmatpush2.bf16.msra.mxu0 0
        %1419 = vmatprep.subr.bf16.mxu0 0
        %1420 = vmatpush2.bf16.msra.mxu0 0
        %1421 = vmatprep.subr.bf16.mxu0 0
        %1422 = vmatpush2.bf16.msra.mxu0 0
        %1423 = vmatprep.subr.bf16.mxu0 0
        %1424 = vmatpush2.bf16.msra.mxu0 0
        %1425 = vmatprep.subr.bf16.mxu0 0
        %1426 = vmatpush2.bf16.msra.mxu0 0
        %1427 = vmatprep.subr.bf16.mxu0 0
        %1428 = vmatpush2.bf16.msra.mxu0 0
        %1429 = vmatprep.mubr.bf16.mxu0 0
        %1430 = vmatmul.mubr.bf16.gmra.mxu0 %v793
        %v1431 = vpop.f32.mrf.mxu0
        %v1432 = vadd.f32 0.0, %v1431
        %v1433 = vpop.f32.mrf.mxu0
        %v1434 = vpop.f32.mrf.mxu0
        %v1435 = vadd.f32 0.0, %v1434
        %v1436 = vpop.f32.mrf.mxu0
        %1437 = vdwg.mxu0
        %v1438 = vadd.f32 %v1330, %v1432
        %v1439 = vadd.f32 %v1331, %v1435
        %s1440 = scalar_lea.vmem %s4, 384
        %v1441 = vld [vmem:[%s1440] sm:$0xf]
        %v1442 = vld [vmem:[%s1440 + $0x4] sm:$0xf]
        %v1443 = vld [vmem:[%s1440 + $0x8] sm:$0xf]
        %v1444 = vld [vmem:[%s1440 + $0xc] sm:$0xf]
        %v1445 = vld [vmem:[%s1440 + $0x10] sm:$0xf]
        %v1446 = vld [vmem:[%s1440 + $0x14] sm:$0xf]
        %v1447 = vld [vmem:[%s1440 + $0x18] sm:$0xf]
        %v1448 = vld [vmem:[%s1440 + $0x1c] sm:$0xf]
        %v1449 = vld [vmem:[%s1440 + $0x20] sm:$0xf]
        %v1450 = vld [vmem:[%s1440 + $0x24] sm:$0xf]
        %v1451 = vld [vmem:[%s1440 + $0x28] sm:$0xf]
        %v1452 = vld [vmem:[%s1440 + $0x2c] sm:$0xf]
        %v1453 = vld [vmem:[%s1440 + $0x30] sm:$0xf]
        %v1454 = vld [vmem:[%s1440 + $0x34] sm:$0xf]
        %v1455 = vld [vmem:[%s1440 + $0x38] sm:$0xf]
        %v1456 = vld [vmem:[%s1440 + $0x3c] sm:$0xf]
        %v1473 = vunpack.c.l.b16 %v1441
        %v1474 = vunpack.c.l.b16 %v1442
        %v1475 = vunpack.c.l.b16 %v1443
        %v1476 = vunpack.c.l.b16 %v1444
        %v1477 = vunpack.c.l.b16 %v1445
        %v1478 = vunpack.c.l.b16 %v1446
        %v1479 = vunpack.c.l.b16 %v1447
        %v1480 = vunpack.c.l.b16 %v1448
        %v1481 = vunpack.c.l.b16 %v1449
        %v1482 = vunpack.c.l.b16 %v1450
        %v1483 = vunpack.c.l.b16 %v1451
        %v1484 = vunpack.c.l.b16 %v1452
        %v1485 = vunpack.c.l.b16 %v1453
        %v1486 = vunpack.c.l.b16 %v1454
        %v1487 = vunpack.c.l.b16 %v1455
        %v1488 = vunpack.c.l.b16 %v1456
        %v1489 = vpack.c.b16 %v1474, %v1473
        %v1490 = vpack.c.b16 %v1476, %v1475
        %v1491 = vpack.c.b16 %v1478, %v1477
        %v1492 = vpack.c.b16 %v1480, %v1479
        %v1493 = vpack.c.b16 %v1482, %v1481
        %v1494 = vpack.c.b16 %v1484, %v1483
        %v1495 = vpack.c.b16 %v1486, %v1485
        %v1496 = vpack.c.b16 %v1488, %v1487
        %1505 = vmatprep.subr.bf16.mxu0 0
        %1506 = vmatpush1.bf16.msra.mxu0 %v1496
        %1507 = vmatprep.subr.bf16.mxu0 0
        %1508 = vmatpush1.bf16.msra.mxu0 %v1495
        %1509 = vmatprep.subr.bf16.mxu0 0
        %1510 = vmatpush1.bf16.msra.mxu0 %v1494
        %1511 = vmatprep.subr.bf16.mxu0 0
        %1512 = vmatpush1.bf16.msra.mxu0 %v1493
        %1513 = vmatprep.subr.bf16.mxu0 0
        %1514 = vmatpush1.bf16.msra.mxu0 %v1492
        %1515 = vmatprep.subr.bf16.mxu0 0
        %1516 = vmatpush1.bf16.msra.mxu0 %v1491
        %1517 = vmatprep.subr.bf16.mxu0 0
        %1518 = vmatpush1.bf16.msra.mxu0 %v1490
        %1519 = vmatprep.subr.bf16.mxu0 0
        %1520 = vmatpush1.bf16.msra.mxu0 %v1489
        %1521 = vmatprep.subr.bf16.mxu0 0
        %1522 = vmatpush2.bf16.msra.mxu0 0
        %1523 = vmatprep.subr.bf16.mxu0 0
        %1524 = vmatpush2.bf16.msra.mxu0 0
        %1525 = vmatprep.subr.bf16.mxu0 0
        %1526 = vmatpush2.bf16.msra.mxu0 0
        %1527 = vmatprep.subr.bf16.mxu0 0
        %1528 = vmatpush2.bf16.msra.mxu0 0
        %1529 = vmatprep.subr.bf16.mxu0 0
        %1530 = vmatpush2.bf16.msra.mxu0 0
        %1531 = vmatprep.subr.bf16.mxu0 0
        %1532 = vmatpush2.bf16.msra.mxu0 0
        %1533 = vmatprep.subr.bf16.mxu0 0
        %1534 = vmatpush2.bf16.msra.mxu0 0
        %1535 = vmatprep.subr.bf16.mxu0 0
        %1536 = vmatpush2.bf16.msra.mxu0 0
        %1537 = vmatprep.mubr.bf16.mxu0 0
        %1538 = vmatmul.mubr.bf16.gmra.mxu0 %v794
        %v1539 = vpop.f32.mrf.mxu0
        %v1540 = vadd.f32 0.0, %v1539
        %v1541 = vpop.f32.mrf.mxu0
        %v1542 = vpop.f32.mrf.mxu0
        %v1543 = vadd.f32 0.0, %v1542
        %v1544 = vpop.f32.mrf.mxu0
        %1545 = vdwg.mxu0
        %v1546 = vadd.f32 %v1438, %v1540
        %v1547 = vadd.f32 %v1439, %v1543
        %s1548 = scalar_lea.vmem %s4, 448
        %v1549 = vld [vmem:[%s1548] sm:$0xf]
        %v1550 = vld [vmem:[%s1548 + $0x4] sm:$0xf]
        %v1551 = vld [vmem:[%s1548 + $0x8] sm:$0xf]
        %v1552 = vld [vmem:[%s1548 + $0xc] sm:$0xf]
        %v1553 = vld [vmem:[%s1548 + $0x10] sm:$0xf]
        %v1554 = vld [vmem:[%s1548 + $0x14] sm:$0xf]
        %v1555 = vld [vmem:[%s1548 + $0x18] sm:$0xf]
        %v1556 = vld [vmem:[%s1548 + $0x1c] sm:$0xf]
        %v1557 = vld [vmem:[%s1548 + $0x20] sm:$0xf]
        %v1558 = vld [vmem:[%s1548 + $0x24] sm:$0xf]
        %v1559 = vld [vmem:[%s1548 + $0x28] sm:$0xf]
        %v1560 = vld [vmem:[%s1548 + $0x2c] sm:$0xf]
        %v1561 = vld [vmem:[%s1548 + $0x30] sm:$0xf]
        %v1562 = vld [vmem:[%s1548 + $0x34] sm:$0xf]
        %v1563 = vld [vmem:[%s1548 + $0x38] sm:$0xf]
        %v1564 = vld [vmem:[%s1548 + $0x3c] sm:$0xf]
        %v1581 = vunpack.c.l.b16 %v1549
        %v1582 = vunpack.c.l.b16 %v1550
        %v1583 = vunpack.c.l.b16 %v1551
        %v1584 = vunpack.c.l.b16 %v1552
        %v1585 = vunpack.c.l.b16 %v1553
        %v1586 = vunpack.c.l.b16 %v1554
        %v1587 = vunpack.c.l.b16 %v1555
        %v1588 = vunpack.c.l.b16 %v1556
        %v1589 = vunpack.c.l.b16 %v1557
        %v1590 = vunpack.c.l.b16 %v1558
        %v1591 = vunpack.c.l.b16 %v1559
        %v1592 = vunpack.c.l.b16 %v1560
        %v1593 = vunpack.c.l.b16 %v1561
        %v1594 = vunpack.c.l.b16 %v1562
        %v1595 = vunpack.c.l.b16 %v1563
        %v1596 = vunpack.c.l.b16 %v1564
        %v1597 = vpack.c.b16 %v1582, %v1581
        %v1598 = vpack.c.b16 %v1584, %v1583
        %v1599 = vpack.c.b16 %v1586, %v1585
        %v1600 = vpack.c.b16 %v1588, %v1587
        %v1601 = vpack.c.b16 %v1590, %v1589
        %v1602 = vpack.c.b16 %v1592, %v1591
        %v1603 = vpack.c.b16 %v1594, %v1593
        %v1604 = vpack.c.b16 %v1596, %v1595
        %1613 = vmatprep.subr.bf16.mxu0 0
        %1614 = vmatpush1.bf16.msra.mxu0 %v1604
        %1615 = vmatprep.subr.bf16.mxu0 0
        %1616 = vmatpush1.bf16.msra.mxu0 %v1603
        %1617 = vmatprep.subr.bf16.mxu0 0
        %1618 = vmatpush1.bf16.msra.mxu0 %v1602
        %1619 = vmatprep.subr.bf16.mxu0 0
        %1620 = vmatpush1.bf16.msra.mxu0 %v1601
        %1621 = vmatprep.subr.bf16.mxu0 0
        %1622 = vmatpush1.bf16.msra.mxu0 %v1600
        %1623 = vmatprep.subr.bf16.mxu0 0
        %1624 = vmatpush1.bf16.msra.mxu0 %v1599
        %1625 = vmatprep.subr.bf16.mxu0 0
        %1626 = vmatpush1.bf16.msra.mxu0 %v1598
        %1627 = vmatprep.subr.bf16.mxu0 0
        %1628 = vmatpush1.bf16.msra.mxu0 %v1597
        %1629 = vmatprep.subr.bf16.mxu0 0
        %1630 = vmatpush2.bf16.msra.mxu0 0
        %1631 = vmatprep.subr.bf16.mxu0 0
        %1632 = vmatpush2.bf16.msra.mxu0 0
        %1633 = vmatprep.subr.bf16.mxu0 0
        %1634 = vmatpush2.bf16.msra.mxu0 0
        %1635 = vmatprep.subr.bf16.mxu0 0
        %1636 = vmatpush2.bf16.msra.mxu0 0
        %1637 = vmatprep.subr.bf16.mxu0 0
        %1638 = vmatpush2.bf16.msra.mxu0 0
        %1639 = vmatprep.subr.bf16.mxu0 0
        %1640 = vmatpush2.bf16.msra.mxu0 0
        %1641 = vmatprep.subr.bf16.mxu0 0
        %1642 = vmatpush2.bf16.msra.mxu0 0
        %1643 = vmatprep.subr.bf16.mxu0 0
        %1644 = vmatpush2.bf16.msra.mxu0 0
        %1645 = vmatprep.mubr.bf16.mxu0 0
        %1646 = vmatmul.mubr.bf16.gmra.mxu0 %v795
        %v1647 = vpop.f32.mrf.mxu0
        %v1648 = vadd.f32 0.0, %v1647
        %v1649 = vpop.f32.mrf.mxu0
        %v1650 = vpop.f32.mrf.mxu0
        %v1651 = vadd.f32 0.0, %v1650
        %v1652 = vpop.f32.mrf.mxu0
        %1653 = vdwg.mxu0
        %v1654 = vadd.f32 %v1546, %v1648
        %v1655 = vadd.f32 %v1547, %v1651
        %s1656 = scalar_lea.vmem %s4, 512
        %v1657 = vld [vmem:[%s1656] sm:$0xf]
        %v1658 = vld [vmem:[%s1656 + $0x4] sm:$0xf]
        %v1659 = vld [vmem:[%s1656 + $0x8] sm:$0xf]
        %v1660 = vld [vmem:[%s1656 + $0xc] sm:$0xf]
        %v1661 = vld [vmem:[%s1656 + $0x10] sm:$0xf]
        %v1662 = vld [vmem:[%s1656 + $0x14] sm:$0xf]
        %v1663 = vld [vmem:[%s1656 + $0x18] sm:$0xf]
        %v1664 = vld [vmem:[%s1656 + $0x1c] sm:$0xf]
        %v1665 = vld [vmem:[%s1656 + $0x20] sm:$0xf]
        %v1666 = vld [vmem:[%s1656 + $0x24] sm:$0xf]
        %v1667 = vld [vmem:[%s1656 + $0x28] sm:$0xf]
        %v1668 = vld [vmem:[%s1656 + $0x2c] sm:$0xf]
        %v1669 = vld [vmem:[%s1656 + $0x30] sm:$0xf]
        %v1670 = vld [vmem:[%s1656 + $0x34] sm:$0xf]
        %v1671 = vld [vmem:[%s1656 + $0x38] sm:$0xf]
        %v1672 = vld [vmem:[%s1656 + $0x3c] sm:$0xf]
        %v1689 = vunpack.c.l.b16 %v1657
        %v1690 = vunpack.c.l.b16 %v1658
        %v1691 = vunpack.c.l.b16 %v1659
        %v1692 = vunpack.c.l.b16 %v1660
        %v1693 = vunpack.c.l.b16 %v1661
        %v1694 = vunpack.c.l.b16 %v1662
        %v1695 = vunpack.c.l.b16 %v1663
        %v1696 = vunpack.c.l.b16 %v1664
        %v1697 = vunpack.c.l.b16 %v1665
        %v1698 = vunpack.c.l.b16 %v1666
        %v1699 = vunpack.c.l.b16 %v1667
        %v1700 = vunpack.c.l.b16 %v1668
        %v1701 = vunpack.c.l.b16 %v1669
        %v1702 = vunpack.c.l.b16 %v1670
        %v1703 = vunpack.c.l.b16 %v1671
        %v1704 = vunpack.c.l.b16 %v1672
        %v1705 = vpack.c.b16 %v1690, %v1689
        %v1706 = vpack.c.b16 %v1692, %v1691
        %v1707 = vpack.c.b16 %v1694, %v1693
        %v1708 = vpack.c.b16 %v1696, %v1695
        %v1709 = vpack.c.b16 %v1698, %v1697
        %v1710 = vpack.c.b16 %v1700, %v1699
        %v1711 = vpack.c.b16 %v1702, %v1701
        %v1712 = vpack.c.b16 %v1704, %v1703
        %1721 = vmatprep.subr.bf16.mxu0 0
        %1722 = vmatpush1.bf16.msra.mxu0 %v1712
        %1723 = vmatprep.subr.bf16.mxu0 0
        %1724 = vmatpush1.bf16.msra.mxu0 %v1711
        %1725 = vmatprep.subr.bf16.mxu0 0
        %1726 = vmatpush1.bf16.msra.mxu0 %v1710
        %1727 = vmatprep.subr.bf16.mxu0 0
        %1728 = vmatpush1.bf16.msra.mxu0 %v1709
        %1729 = vmatprep.subr.bf16.mxu0 0
        %1730 = vmatpush1.bf16.msra.mxu0 %v1708
        %1731 = vmatprep.subr.bf16.mxu0 0
        %1732 = vmatpush1.bf16.msra.mxu0 %v1707
        %1733 = vmatprep.subr.bf16.mxu0 0
        %1734 = vmatpush1.bf16.msra.mxu0 %v1706
        %1735 = vmatprep.subr.bf16.mxu0 0
        %1736 = vmatpush1.bf16.msra.mxu0 %v1705
        %1737 = vmatprep.subr.bf16.mxu0 0
        %1738 = vmatpush2.bf16.msra.mxu0 0
        %1739 = vmatprep.subr.bf16.mxu0 0
        %1740 = vmatpush2.bf16.msra.mxu0 0
        %1741 = vmatprep.subr.bf16.mxu0 0
        %1742 = vmatpush2.bf16.msra.mxu0 0
        %1743 = vmatprep.subr.bf16.mxu0 0
        %1744 = vmatpush2.bf16.msra.mxu0 0
        %1745 = vmatprep.subr.bf16.mxu0 0
        %1746 = vmatpush2.bf16.msra.mxu0 0
        %1747 = vmatprep.subr.bf16.mxu0 0
        %1748 = vmatpush2.bf16.msra.mxu0 0
        %1749 = vmatprep.subr.bf16.mxu0 0
        %1750 = vmatpush2.bf16.msra.mxu0 0
        %1751 = vmatprep.subr.bf16.mxu0 0
        %1752 = vmatpush2.bf16.msra.mxu0 0
        %1753 = vmatprep.mubr.bf16.mxu0 0
        %1754 = vmatmul.mubr.bf16.gmra.mxu0 %v796
        %v1755 = vpop.f32.mrf.mxu0
        %v1756 = vadd.f32 0.0, %v1755
        %v1757 = vpop.f32.mrf.mxu0
        %v1758 = vpop.f32.mrf.mxu0
        %v1759 = vadd.f32 0.0, %v1758
        %v1760 = vpop.f32.mrf.mxu0
        %1761 = vdwg.mxu0
        %v1762 = vadd.f32 %v1654, %v1756
        %v1763 = vadd.f32 %v1655, %v1759
        %v1764 = vld [vmem:[%s5] sm:$0x1]
        %v1766 = vlaneseq
        %v1767 = vshrl.u32 %v1766, 7
        %v1768 = vsub.s32 0, %v1767
        %v1769 = vrot.slane %v1764, %v1768
        %v1771 = vadd.f32 %v1762, %v1769
        %v1772 = vadd.f32 %v1763, %v1769
        %vm1773 = vcmp.gt.f32.partialorder %v1771, 0.0
        %vm1774 = vcmp.gt.f32.partialorder %v1772, 0.0
        %v1775 = vmul.f32 %v1771, 0.01
        %v1776 = vmul.f32 %v1772, 0.01
        %v1777 = vsel %vm1773, %v1771, %v1775
        %v1778 = vsel %vm1774, %v1772, %v1776
        %v1779 = vpack.c.bf16 %v1778, %v1777
        %v1780 = vld [vmem:[%s6] sm:$0xf]
        %v1781 = vld [vmem:[%s6 + $0x4] sm:$0xf]
        %v1782 = vld [vmem:[%s6 + $0x8] sm:$0xf]
        %v1783 = vld [vmem:[%s6 + $0xc] sm:$0xf]
        %v1784 = vld [vmem:[%s6 + $0x10] sm:$0xf]
        %v1785 = vld [vmem:[%s6 + $0x14] sm:$0xf]
        %v1786 = vld [vmem:[%s6 + $0x18] sm:$0xf]
        %v1787 = vld [vmem:[%s6 + $0x1c] sm:$0xf]
        %v1788 = vld [vmem:[%s6 + $0x20] sm:$0xf]
        %v1789 = vld [vmem:[%s6 + $0x24] sm:$0xf]
        %v1790 = vld [vmem:[%s6 + $0x28] sm:$0xf]
        %v1791 = vld [vmem:[%s6 + $0x2c] sm:$0xf]
        %v1792 = vld [vmem:[%s6 + $0x30] sm:$0xf]
        %v1793 = vld [vmem:[%s6 + $0x34] sm:$0xf]
        %v1794 = vld [vmem:[%s6 + $0x38] sm:$0xf]
        %v1795 = vld [vmem:[%s6 + $0x3c] sm:$0xf]
        %s1796 = scalar_lea.vmem %s6, 64
        %v1797 = vld [vmem:[%s1796] sm:$0xf]
        %v1798 = vld [vmem:[%s1796 + $0x4] sm:$0xf]
        %v1799 = vld [vmem:[%s1796 + $0x8] sm:$0xf]
        %v1800 = vld [vmem:[%s1796 + $0xc] sm:$0xf]
        %v1801 = vld [vmem:[%s1796 + $0x10] sm:$0xf]
        %v1802 = vld [vmem:[%s1796 + $0x14] sm:$0xf]
        %v1803 = vld [vmem:[%s1796 + $0x18] sm:$0xf]
        %v1804 = vld [vmem:[%s1796 + $0x1c] sm:$0xf]
        %v1805 = vld [vmem:[%s1796 + $0x20] sm:$0xf]
        %v1806 = vld [vmem:[%s1796 + $0x24] sm:$0xf]
        %v1807 = vld [vmem:[%s1796 + $0x28] sm:$0xf]
        %v1808 = vld [vmem:[%s1796 + $0x2c] sm:$0xf]
        %v1809 = vld [vmem:[%s1796 + $0x30] sm:$0xf]
        %v1810 = vld [vmem:[%s1796 + $0x34] sm:$0xf]
        %v1811 = vld [vmem:[%s1796 + $0x38] sm:$0xf]
        %v1812 = vld [vmem:[%s1796 + $0x3c] sm:$0xf]
        %v1814 = vshrl.u32 %v1779, 16
        %v1833 = vunpack.c.l.b16 %v1797
        %v1834 = vunpack.c.l.b16 %v1798
        %v1835 = vunpack.c.l.b16 %v1799
        %v1836 = vunpack.c.l.b16 %v1800
        %v1837 = vunpack.c.l.b16 %v1801
        %v1838 = vunpack.c.l.b16 %v1802
        %v1839 = vunpack.c.l.b16 %v1803
        %v1840 = vunpack.c.l.b16 %v1804
        %v1841 = vunpack.c.l.b16 %v1805
        %v1842 = vunpack.c.l.b16 %v1806
        %v1843 = vunpack.c.l.b16 %v1807
        %v1844 = vunpack.c.l.b16 %v1808
        %v1845 = vunpack.c.l.b16 %v1809
        %v1846 = vunpack.c.l.b16 %v1810
        %v1847 = vunpack.c.l.b16 %v1811
        %v1848 = vunpack.c.l.b16 %v1812
        %v1849 = vpack.c.b16 %v1834, %v1833
        %v1850 = vpack.c.b16 %v1836, %v1835
        %v1851 = vpack.c.b16 %v1838, %v1837
        %v1852 = vpack.c.b16 %v1840, %v1839
        %v1853 = vpack.c.b16 %v1842, %v1841
        %v1854 = vpack.c.b16 %v1844, %v1843
        %v1855 = vpack.c.b16 %v1846, %v1845
        %v1856 = vpack.c.b16 %v1848, %v1847
        %1865 = vmatprep.subr.bf16.mxu0 0
        %1866 = vmatpush1.bf16.msra.mxu0 %v1856
        %1867 = vmatprep.subr.bf16.mxu0 0
        %1868 = vmatpush1.bf16.msra.mxu0 %v1855
        %1869 = vmatprep.subr.bf16.mxu0 0
        %1870 = vmatpush1.bf16.msra.mxu0 %v1854
        %1871 = vmatprep.subr.bf16.mxu0 0
        %1872 = vmatpush1.bf16.msra.mxu0 %v1853
        %1873 = vmatprep.subr.bf16.mxu0 0
        %1874 = vmatpush1.bf16.msra.mxu0 %v1852
        %1875 = vmatprep.subr.bf16.mxu0 0
        %1876 = vmatpush1.bf16.msra.mxu0 %v1851
        %1877 = vmatprep.subr.bf16.mxu0 0
        %1878 = vmatpush1.bf16.msra.mxu0 %v1850
        %1879 = vmatprep.subr.bf16.mxu0 0
        %1880 = vmatpush1.bf16.msra.mxu0 %v1849
        %1881 = vmatprep.subr.bf16.mxu0 0
        %1882 = vmatpush2.bf16.msra.mxu0 0
        %1883 = vmatprep.subr.bf16.mxu0 0
        %1884 = vmatpush2.bf16.msra.mxu0 0
        %1885 = vmatprep.subr.bf16.mxu0 0
        %1886 = vmatpush2.bf16.msra.mxu0 0
        %1887 = vmatprep.subr.bf16.mxu0 0
        %1888 = vmatpush2.bf16.msra.mxu0 0
        %1889 = vmatprep.subr.bf16.mxu0 0
        %1890 = vmatpush2.bf16.msra.mxu0 0
        %1891 = vmatprep.subr.bf16.mxu0 0
        %1892 = vmatpush2.bf16.msra.mxu0 0
        %1893 = vmatprep.subr.bf16.mxu0 0
        %1894 = vmatpush2.bf16.msra.mxu0 0
        %1895 = vmatprep.subr.bf16.mxu0 0
        %1896 = vmatpush2.bf16.msra.mxu0 0
        %1897 = vmatprep.mubr.bf16.mxu0 0
        %1898 = vmatmul.mubr.bf16.gmra.mxu0 %v1814
        %v1899 = vpop.f32.mrf.mxu0
        %v1900 = vadd.f32 0.0, %v1899
        %v1901 = vpop.f32.mrf.mxu0
        %v1902 = vpop.f32.mrf.mxu0
        %v1903 = vpop.f32.mrf.mxu0
        %1904 = vdwg.mxu0
        %v1921 = vunpack.c.l.b16 %v1780
        %v1922 = vunpack.c.l.b16 %v1781
        %v1923 = vunpack.c.l.b16 %v1782
        %v1924 = vunpack.c.l.b16 %v1783
        %v1925 = vunpack.c.l.b16 %v1784
        %v1926 = vunpack.c.l.b16 %v1785
        %v1927 = vunpack.c.l.b16 %v1786
        %v1928 = vunpack.c.l.b16 %v1787
        %v1929 = vunpack.c.l.b16 %v1788
        %v1930 = vunpack.c.l.b16 %v1789
        %v1931 = vunpack.c.l.b16 %v1790
        %v1932 = vunpack.c.l.b16 %v1791
        %v1933 = vunpack.c.l.b16 %v1792
        %v1934 = vunpack.c.l.b16 %v1793
        %v1935 = vunpack.c.l.b16 %v1794
        %v1936 = vunpack.c.l.b16 %v1795
        %v1937 = vpack.c.b16 %v1922, %v1921
        %v1938 = vpack.c.b16 %v1924, %v1923
        %v1939 = vpack.c.b16 %v1926, %v1925
        %v1940 = vpack.c.b16 %v1928, %v1927
        %v1941 = vpack.c.b16 %v1930, %v1929
        %v1942 = vpack.c.b16 %v1932, %v1931
        %v1943 = vpack.c.b16 %v1934, %v1933
        %v1944 = vpack.c.b16 %v1936, %v1935
        %1953 = vmatprep.subr.bf16.mxu0 0
        %1954 = vmatpush1.bf16.msra.mxu0 %v1944
        %1955 = vmatprep.subr.bf16.mxu0 0
        %1956 = vmatpush1.bf16.msra.mxu0 %v1943
        %1957 = vmatprep.subr.bf16.mxu0 0
        %1958 = vmatpush1.bf16.msra.mxu0 %v1942
        %1959 = vmatprep.subr.bf16.mxu0 0
        %1960 = vmatpush1.bf16.msra.mxu0 %v1941
        %1961 = vmatprep.subr.bf16.mxu0 0
        %1962 = vmatpush1.bf16.msra.mxu0 %v1940
        %1963 = vmatprep.subr.bf16.mxu0 0
        %1964 = vmatpush1.bf16.msra.mxu0 %v1939
        %1965 = vmatprep.subr.bf16.mxu0 0
        %1966 = vmatpush1.bf16.msra.mxu0 %v1938
        %1967 = vmatprep.subr.bf16.mxu0 0
        %1968 = vmatpush1.bf16.msra.mxu0 %v1937
        %1969 = vmatprep.subr.bf16.mxu0 0
        %1970 = vmatpush2.bf16.msra.mxu0 0
        %1971 = vmatprep.subr.bf16.mxu0 0
        %1972 = vmatpush2.bf16.msra.mxu0 0
        %1973 = vmatprep.subr.bf16.mxu0 0
        %1974 = vmatpush2.bf16.msra.mxu0 0
        %1975 = vmatprep.subr.bf16.mxu0 0
        %1976 = vmatpush2.bf16.msra.mxu0 0
        %1977 = vmatprep.subr.bf16.mxu0 0
        %1978 = vmatpush2.bf16.msra.mxu0 0
        %1979 = vmatprep.subr.bf16.mxu0 0
        %1980 = vmatpush2.bf16.msra.mxu0 0
        %1981 = vmatprep.subr.bf16.mxu0 0
        %1982 = vmatpush2.bf16.msra.mxu0 0
        %1983 = vmatprep.subr.bf16.mxu0 0
        %1984 = vmatpush2.bf16.msra.mxu0 0
        %1985 = vmatprep.mubr.bf16.mxu0 0
        %1986 = vmatmul.mubr.bf16.gmra.mxu0 %v1779
        %v1987 = vpop.f32.mrf.mxu0
        %v1988 = vadd.f32 %v1900, %v1987
        %v1989 = vpop.f32.mrf.mxu0
        %v1990 = vpop.f32.mrf.mxu0
        %v1991 = vpop.f32.mrf.mxu0
        %1992 = vdwg.mxu0
        %s1993 = scalar_lea.vmem %s6, 128
        %v1994 = vld [vmem:[%s1993] sm:$0xf]
        %v1995 = vld [vmem:[%s1993 + $0x4] sm:$0xf]
        %v1996 = vld [vmem:[%s1993 + $0x8] sm:$0xf]
        %v1997 = vld [vmem:[%s1993 + $0xc] sm:$0xf]
        %v1998 = vld [vmem:[%s1993 + $0x10] sm:$0xf]
        %v1999 = vld [vmem:[%s1993 + $0x14] sm:$0xf]
        %v2000 = vld [vmem:[%s1993 + $0x18] sm:$0xf]
        %v2001 = vld [vmem:[%s1993 + $0x1c] sm:$0xf]
        %v2002 = vld [vmem:[%s1993 + $0x20] sm:$0xf]
        %v2003 = vld [vmem:[%s1993 + $0x24] sm:$0xf]
        %v2004 = vld [vmem:[%s1993 + $0x28] sm:$0xf]
        %v2005 = vld [vmem:[%s1993 + $0x2c] sm:$0xf]
        %v2006 = vld [vmem:[%s1993 + $0x30] sm:$0xf]
        %v2007 = vld [vmem:[%s1993 + $0x34] sm:$0xf]
        %v2008 = vld [vmem:[%s1993 + $0x38] sm:$0xf]
        %v2009 = vld [vmem:[%s1993 + $0x3c] sm:$0xf]
        %v2011 = vrot.slane %v1779, 1
        %v2029 = vunpack.c.l.b16 %v1994
        %v2030 = vunpack.c.l.b16 %v1995
        %v2031 = vunpack.c.l.b16 %v1996
        %v2032 = vunpack.c.l.b16 %v1997
        %v2033 = vunpack.c.l.b16 %v1998
        %v2034 = vunpack.c.l.b16 %v1999
        %v2035 = vunpack.c.l.b16 %v2000
        %v2036 = vunpack.c.l.b16 %v2001
        %v2037 = vunpack.c.l.b16 %v2002
        %v2038 = vunpack.c.l.b16 %v2003
        %v2039 = vunpack.c.l.b16 %v2004
        %v2040 = vunpack.c.l.b16 %v2005
        %v2041 = vunpack.c.l.b16 %v2006
        %v2042 = vunpack.c.l.b16 %v2007
        %v2043 = vunpack.c.l.b16 %v2008
        %v2044 = vunpack.c.l.b16 %v2009
        %v2045 = vpack.c.b16 %v2030, %v2029
        %v2046 = vpack.c.b16 %v2032, %v2031
        %v2047 = vpack.c.b16 %v2034, %v2033
        %v2048 = vpack.c.b16 %v2036, %v2035
        %v2049 = vpack.c.b16 %v2038, %v2037
        %v2050 = vpack.c.b16 %v2040, %v2039
        %v2051 = vpack.c.b16 %v2042, %v2041
        %v2052 = vpack.c.b16 %v2044, %v2043
        %2061 = vmatprep.subr.bf16.mxu0 0
        %2062 = vmatpush1.bf16.msra.mxu0 %v2052
        %2063 = vmatprep.subr.bf16.mxu0 0
        %2064 = vmatpush1.bf16.msra.mxu0 %v2051
        %2065 = vmatprep.subr.bf16.mxu0 0
        %2066 = vmatpush1.bf16.msra.mxu0 %v2050
        %2067 = vmatprep.subr.bf16.mxu0 0
        %2068 = vmatpush1.bf16.msra.mxu0 %v2049
        %2069 = vmatprep.subr.bf16.mxu0 0
        %2070 = vmatpush1.bf16.msra.mxu0 %v2048
        %2071 = vmatprep.subr.bf16.mxu0 0
        %2072 = vmatpush1.bf16.msra.mxu0 %v2047
        %2073 = vmatprep.subr.bf16.mxu0 0
        %2074 = vmatpush1.bf16.msra.mxu0 %v2046
        %2075 = vmatprep.subr.bf16.mxu0 0
        %2076 = vmatpush1.bf16.msra.mxu0 %v2045
        %2077 = vmatprep.subr.bf16.mxu0 0
        %2078 = vmatpush2.bf16.msra.mxu0 0
        %2079 = vmatprep.subr.bf16.mxu0 0
        %2080 = vmatpush2.bf16.msra.mxu0 0
        %2081 = vmatprep.subr.bf16.mxu0 0
        %2082 = vmatpush2.bf16.msra.mxu0 0
        %2083 = vmatprep.subr.bf16.mxu0 0
        %2084 = vmatpush2.bf16.msra.mxu0 0
        %2085 = vmatprep.subr.bf16.mxu0 0
        %2086 = vmatpush2.bf16.msra.mxu0 0
        %2087 = vmatprep.subr.bf16.mxu0 0
        %2088 = vmatpush2.bf16.msra.mxu0 0
        %2089 = vmatprep.subr.bf16.mxu0 0
        %2090 = vmatpush2.bf16.msra.mxu0 0
        %2091 = vmatprep.subr.bf16.mxu0 0
        %2092 = vmatpush2.bf16.msra.mxu0 0
        %2093 = vmatprep.mubr.bf16.mxu0 0
        %2094 = vmatmul.mubr.bf16.gmra.mxu0 %v2011
        %v2095 = vpop.f32.mrf.mxu0
        %v2096 = vadd.f32 0.0, %v2095
        %v2097 = vpop.f32.mrf.mxu0
        %v2098 = vpop.f32.mrf.mxu0
        %v2099 = vpop.f32.mrf.mxu0
        %2100 = vdwg.mxu0
        %v2101 = vadd.f32 %v1988, %v2096
        %s2102 = scalar_lea.vmem %s6, 192
        %v2103 = vld [vmem:[%s2102] sm:$0xf]
        %v2104 = vld [vmem:[%s2102 + $0x4] sm:$0xf]
        %v2105 = vld [vmem:[%s2102 + $0x8] sm:$0xf]
        %v2106 = vld [vmem:[%s2102 + $0xc] sm:$0xf]
        %v2107 = vld [vmem:[%s2102 + $0x10] sm:$0xf]
        %v2108 = vld [vmem:[%s2102 + $0x14] sm:$0xf]
        %v2109 = vld [vmem:[%s2102 + $0x18] sm:$0xf]
        %v2110 = vld [vmem:[%s2102 + $0x1c] sm:$0xf]
        %v2111 = vld [vmem:[%s2102 + $0x20] sm:$0xf]
        %v2112 = vld [vmem:[%s2102 + $0x24] sm:$0xf]
        %v2113 = vld [vmem:[%s2102 + $0x28] sm:$0xf]
        %v2114 = vld [vmem:[%s2102 + $0x2c] sm:$0xf]
        %v2115 = vld [vmem:[%s2102 + $0x30] sm:$0xf]
        %v2116 = vld [vmem:[%s2102 + $0x34] sm:$0xf]
        %v2117 = vld [vmem:[%s2102 + $0x38] sm:$0xf]
        %v2118 = vld [vmem:[%s2102 + $0x3c] sm:$0xf]
        %v2119 = vrot.slane %v1814, 1
        %v2137 = vunpack.c.l.b16 %v2103
        %v2138 = vunpack.c.l.b16 %v2104
        %v2139 = vunpack.c.l.b16 %v2105
        %v2140 = vunpack.c.l.b16 %v2106
        %v2141 = vunpack.c.l.b16 %v2107
        %v2142 = vunpack.c.l.b16 %v2108
        %v2143 = vunpack.c.l.b16 %v2109
        %v2144 = vunpack.c.l.b16 %v2110
        %v2145 = vunpack.c.l.b16 %v2111
        %v2146 = vunpack.c.l.b16 %v2112
        %v2147 = vunpack.c.l.b16 %v2113
        %v2148 = vunpack.c.l.b16 %v2114
        %v2149 = vunpack.c.l.b16 %v2115
        %v2150 = vunpack.c.l.b16 %v2116
        %v2151 = vunpack.c.l.b16 %v2117
        %v2152 = vunpack.c.l.b16 %v2118
        %v2153 = vpack.c.b16 %v2138, %v2137
        %v2154 = vpack.c.b16 %v2140, %v2139
        %v2155 = vpack.c.b16 %v2142, %v2141
        %v2156 = vpack.c.b16 %v2144, %v2143
        %v2157 = vpack.c.b16 %v2146, %v2145
        %v2158 = vpack.c.b16 %v2148, %v2147
        %v2159 = vpack.c.b16 %v2150, %v2149
        %v2160 = vpack.c.b16 %v2152, %v2151
        %2169 = vmatprep.subr.bf16.mxu0 0
        %2170 = vmatpush1.bf16.msra.mxu0 %v2160
        %2171 = vmatprep.subr.bf16.mxu0 0
        %2172 = vmatpush1.bf16.msra.mxu0 %v2159
        %2173 = vmatprep.subr.bf16.mxu0 0
        %2174 = vmatpush1.bf16.msra.mxu0 %v2158
        %2175 = vmatprep.subr.bf16.mxu0 0
        %2176 = vmatpush1.bf16.msra.mxu0 %v2157
        %2177 = vmatprep.subr.bf16.mxu0 0
        %2178 = vmatpush1.bf16.msra.mxu0 %v2156
        %2179 = vmatprep.subr.bf16.mxu0 0
        %2180 = vmatpush1.bf16.msra.mxu0 %v2155
        %2181 = vmatprep.subr.bf16.mxu0 0
        %2182 = vmatpush1.bf16.msra.mxu0 %v2154
        %2183 = vmatprep.subr.bf16.mxu0 0
        %2184 = vmatpush1.bf16.msra.mxu0 %v2153
        %2185 = vmatprep.subr.bf16.mxu0 0
        %2186 = vmatpush2.bf16.msra.mxu0 0
        %2187 = vmatprep.subr.bf16.mxu0 0
        %2188 = vmatpush2.bf16.msra.mxu0 0
        %2189 = vmatprep.subr.bf16.mxu0 0
        %2190 = vmatpush2.bf16.msra.mxu0 0
        %2191 = vmatprep.subr.bf16.mxu0 0
        %2192 = vmatpush2.bf16.msra.mxu0 0
        %2193 = vmatprep.subr.bf16.mxu0 0
        %2194 = vmatpush2.bf16.msra.mxu0 0
        %2195 = vmatprep.subr.bf16.mxu0 0
        %2196 = vmatpush2.bf16.msra.mxu0 0
        %2197 = vmatprep.subr.bf16.mxu0 0
        %2198 = vmatpush2.bf16.msra.mxu0 0
        %2199 = vmatprep.subr.bf16.mxu0 0
        %2200 = vmatpush2.bf16.msra.mxu0 0
        %2201 = vmatprep.mubr.bf16.mxu0 0
        %2202 = vmatmul.mubr.bf16.gmra.mxu0 %v2119
        %v2203 = vpop.f32.mrf.mxu0
        %v2204 = vadd.f32 0.0, %v2203
        %v2205 = vpop.f32.mrf.mxu0
        %v2206 = vpop.f32.mrf.mxu0
        %v2207 = vpop.f32.mrf.mxu0
        %2208 = vdwg.mxu0
        %v2209 = vadd.f32 %v2101, %v2204
        %s2210 = scalar_lea.vmem %s6, 256
        %v2211 = vld [vmem:[%s2210] sm:$0xf]
        %v2212 = vld [vmem:[%s2210 + $0x4] sm:$0xf]
        %v2213 = vld [vmem:[%s2210 + $0x8] sm:$0xf]
        %v2214 = vld [vmem:[%s2210 + $0xc] sm:$0xf]
        %v2215 = vld [vmem:[%s2210 + $0x10] sm:$0xf]
        %v2216 = vld [vmem:[%s2210 + $0x14] sm:$0xf]
        %v2217 = vld [vmem:[%s2210 + $0x18] sm:$0xf]
        %v2218 = vld [vmem:[%s2210 + $0x1c] sm:$0xf]
        %v2219 = vld [vmem:[%s2210 + $0x20] sm:$0xf]
        %v2220 = vld [vmem:[%s2210 + $0x24] sm:$0xf]
        %v2221 = vld [vmem:[%s2210 + $0x28] sm:$0xf]
        %v2222 = vld [vmem:[%s2210 + $0x2c] sm:$0xf]
        %v2223 = vld [vmem:[%s2210 + $0x30] sm:$0xf]
        %v2224 = vld [vmem:[%s2210 + $0x34] sm:$0xf]
        %v2225 = vld [vmem:[%s2210 + $0x38] sm:$0xf]
        %v2226 = vld [vmem:[%s2210 + $0x3c] sm:$0xf]
        %v2227 = vrot.slane %v1779, 2
        %v2245 = vunpack.c.l.b16 %v2211
        %v2246 = vunpack.c.l.b16 %v2212
        %v2247 = vunpack.c.l.b16 %v2213
        %v2248 = vunpack.c.l.b16 %v2214
        %v2249 = vunpack.c.l.b16 %v2215
        %v2250 = vunpack.c.l.b16 %v2216
        %v2251 = vunpack.c.l.b16 %v2217
        %v2252 = vunpack.c.l.b16 %v2218
        %v2253 = vunpack.c.l.b16 %v2219
        %v2254 = vunpack.c.l.b16 %v2220
        %v2255 = vunpack.c.l.b16 %v2221
        %v2256 = vunpack.c.l.b16 %v2222
        %v2257 = vunpack.c.l.b16 %v2223
        %v2258 = vunpack.c.l.b16 %v2224
        %v2259 = vunpack.c.l.b16 %v2225
        %v2260 = vunpack.c.l.b16 %v2226
        %v2261 = vpack.c.b16 %v2246, %v2245
        %v2262 = vpack.c.b16 %v2248, %v2247
        %v2263 = vpack.c.b16 %v2250, %v2249
        %v2264 = vpack.c.b16 %v2252, %v2251
        %v2265 = vpack.c.b16 %v2254, %v2253
        %v2266 = vpack.c.b16 %v2256, %v2255
        %v2267 = vpack.c.b16 %v2258, %v2257
        %v2268 = vpack.c.b16 %v2260, %v2259
        %2277 = vmatprep.subr.bf16.mxu0 0
        %2278 = vmatpush1.bf16.msra.mxu0 %v2268
        %2279 = vmatprep.subr.bf16.mxu0 0
        %2280 = vmatpush1.bf16.msra.mxu0 %v2267
        %2281 = vmatprep.subr.bf16.mxu0 0
        %2282 = vmatpush1.bf16.msra.mxu0 %v2266
        %2283 = vmatprep.subr.bf16.mxu0 0
        %2284 = vmatpush1.bf16.msra.mxu0 %v2265
        %2285 = vmatprep.subr.bf16.mxu0 0
        %2286 = vmatpush1.bf16.msra.mxu0 %v2264
        %2287 = vmatprep.subr.bf16.mxu0 0
        %2288 = vmatpush1.bf16.msra.mxu0 %v2263
        %2289 = vmatprep.subr.bf16.mxu0 0
        %2290 = vmatpush1.bf16.msra.mxu0 %v2262
        %2291 = vmatprep.subr.bf16.mxu0 0
        %2292 = vmatpush1.bf16.msra.mxu0 %v2261
        %2293 = vmatprep.subr.bf16.mxu0 0
        %2294 = vmatpush2.bf16.msra.mxu0 0
        %2295 = vmatprep.subr.bf16.mxu0 0
        %2296 = vmatpush2.bf16.msra.mxu0 0
        %2297 = vmatprep.subr.bf16.mxu0 0
        %2298 = vmatpush2.bf16.msra.mxu0 0
        %2299 = vmatprep.subr.bf16.mxu0 0
        %2300 = vmatpush2.bf16.msra.mxu0 0
        %2301 = vmatprep.subr.bf16.mxu0 0
        %2302 = vmatpush2.bf16.msra.mxu0 0
        %2303 = vmatprep.subr.bf16.mxu0 0
        %2304 = vmatpush2.bf16.msra.mxu0 0
        %2305 = vmatprep.subr.bf16.mxu0 0
        %2306 = vmatpush2.bf16.msra.mxu0 0
        %2307 = vmatprep.subr.bf16.mxu0 0
        %2308 = vmatpush2.bf16.msra.mxu0 0
        %2309 = vmatprep.mubr.bf16.mxu0 0
        %2310 = vmatmul.mubr.bf16.gmra.mxu0 %v2227
        %v2311 = vpop.f32.mrf.mxu0
        %v2312 = vadd.f32 0.0, %v2311
        %v2313 = vpop.f32.mrf.mxu0
        %v2314 = vpop.f32.mrf.mxu0
        %v2315 = vpop.f32.mrf.mxu0
        %2316 = vdwg.mxu0
        %v2317 = vadd.f32 %v2209, %v2312
        %s2318 = scalar_lea.vmem %s6, 320
        %v2319 = vld [vmem:[%s2318] sm:$0xf]
        %v2320 = vld [vmem:[%s2318 + $0x4] sm:$0xf]
        %v2321 = vld [vmem:[%s2318 + $0x8] sm:$0xf]
        %v2322 = vld [vmem:[%s2318 + $0xc] sm:$0xf]
        %v2323 = vld [vmem:[%s2318 + $0x10] sm:$0xf]
        %v2324 = vld [vmem:[%s2318 + $0x14] sm:$0xf]
        %v2325 = vld [vmem:[%s2318 + $0x18] sm:$0xf]
        %v2326 = vld [vmem:[%s2318 + $0x1c] sm:$0xf]
        %v2327 = vld [vmem:[%s2318 + $0x20] sm:$0xf]
        %v2328 = vld [vmem:[%s2318 + $0x24] sm:$0xf]
        %v2329 = vld [vmem:[%s2318 + $0x28] sm:$0xf]
        %v2330 = vld [vmem:[%s2318 + $0x2c] sm:$0xf]
        %v2331 = vld [vmem:[%s2318 + $0x30] sm:$0xf]
        %v2332 = vld [vmem:[%s2318 + $0x34] sm:$0xf]
        %v2333 = vld [vmem:[%s2318 + $0x38] sm:$0xf]
        %v2334 = vld [vmem:[%s2318 + $0x3c] sm:$0xf]
        %v2335 = vrot.slane %v1814, 2
        %v2353 = vunpack.c.l.b16 %v2319
        %v2354 = vunpack.c.l.b16 %v2320
        %v2355 = vunpack.c.l.b16 %v2321
        %v2356 = vunpack.c.l.b16 %v2322
        %v2357 = vunpack.c.l.b16 %v2323
        %v2358 = vunpack.c.l.b16 %v2324
        %v2359 = vunpack.c.l.b16 %v2325
        %v2360 = vunpack.c.l.b16 %v2326
        %v2361 = vunpack.c.l.b16 %v2327
        %v2362 = vunpack.c.l.b16 %v2328
        %v2363 = vunpack.c.l.b16 %v2329
        %v2364 = vunpack.c.l.b16 %v2330
        %v2365 = vunpack.c.l.b16 %v2331
        %v2366 = vunpack.c.l.b16 %v2332
        %v2367 = vunpack.c.l.b16 %v2333
        %v2368 = vunpack.c.l.b16 %v2334
        %v2369 = vpack.c.b16 %v2354, %v2353
        %v2370 = vpack.c.b16 %v2356, %v2355
        %v2371 = vpack.c.b16 %v2358, %v2357
        %v2372 = vpack.c.b16 %v2360, %v2359
        %v2373 = vpack.c.b16 %v2362, %v2361
        %v2374 = vpack.c.b16 %v2364, %v2363
        %v2375 = vpack.c.b16 %v2366, %v2365
        %v2376 = vpack.c.b16 %v2368, %v2367
        %2385 = vmatprep.subr.bf16.mxu0 0
        %2386 = vmatpush1.bf16.msra.mxu0 %v2376
        %2387 = vmatprep.subr.bf16.mxu0 0
        %2388 = vmatpush1.bf16.msra.mxu0 %v2375
        %2389 = vmatprep.subr.bf16.mxu0 0
        %2390 = vmatpush1.bf16.msra.mxu0 %v2374
        %2391 = vmatprep.subr.bf16.mxu0 0
        %2392 = vmatpush1.bf16.msra.mxu0 %v2373
        %2393 = vmatprep.subr.bf16.mxu0 0
        %2394 = vmatpush1.bf16.msra.mxu0 %v2372
        %2395 = vmatprep.subr.bf16.mxu0 0
        %2396 = vmatpush1.bf16.msra.mxu0 %v2371
        %2397 = vmatprep.subr.bf16.mxu0 0
        %2398 = vmatpush1.bf16.msra.mxu0 %v2370
        %2399 = vmatprep.subr.bf16.mxu0 0
        %2400 = vmatpush1.bf16.msra.mxu0 %v2369
        %2401 = vmatprep.subr.bf16.mxu0 0
        %2402 = vmatpush2.bf16.msra.mxu0 0
        %2403 = vmatprep.subr.bf16.mxu0 0
        %2404 = vmatpush2.bf16.msra.mxu0 0
        %2405 = vmatprep.subr.bf16.mxu0 0
        %2406 = vmatpush2.bf16.msra.mxu0 0
        %2407 = vmatprep.subr.bf16.mxu0 0
        %2408 = vmatpush2.bf16.msra.mxu0 0
        %2409 = vmatprep.subr.bf16.mxu0 0
        %2410 = vmatpush2.bf16.msra.mxu0 0
        %2411 = vmatprep.subr.bf16.mxu0 0
        %2412 = vmatpush2.bf16.msra.mxu0 0
        %2413 = vmatprep.subr.bf16.mxu0 0
        %2414 = vmatpush2.bf16.msra.mxu0 0
        %2415 = vmatprep.subr.bf16.mxu0 0
        %2416 = vmatpush2.bf16.msra.mxu0 0
        %2417 = vmatprep.mubr.bf16.mxu0 0
        %2418 = vmatmul.mubr.bf16.gmra.mxu0 %v2335
        %v2419 = vpop.f32.mrf.mxu0
        %v2420 = vadd.f32 0.0, %v2419
        %v2421 = vpop.f32.mrf.mxu0
        %v2422 = vpop.f32.mrf.mxu0
        %v2423 = vpop.f32.mrf.mxu0
        %2424 = vdwg.mxu0
        %v2425 = vadd.f32 %v2317, %v2420
        %s2426 = scalar_lea.vmem %s6, 384
        %v2427 = vld [vmem:[%s2426] sm:$0xf]
        %v2428 = vld [vmem:[%s2426 + $0x4] sm:$0xf]
        %v2429 = vld [vmem:[%s2426 + $0x8] sm:$0xf]
        %v2430 = vld [vmem:[%s2426 + $0xc] sm:$0xf]
        %v2431 = vld [vmem:[%s2426 + $0x10] sm:$0xf]
        %v2432 = vld [vmem:[%s2426 + $0x14] sm:$0xf]
        %v2433 = vld [vmem:[%s2426 + $0x18] sm:$0xf]
        %v2434 = vld [vmem:[%s2426 + $0x1c] sm:$0xf]
        %v2435 = vld [vmem:[%s2426 + $0x20] sm:$0xf]
        %v2436 = vld [vmem:[%s2426 + $0x24] sm:$0xf]
        %v2437 = vld [vmem:[%s2426 + $0x28] sm:$0xf]
        %v2438 = vld [vmem:[%s2426 + $0x2c] sm:$0xf]
        %v2439 = vld [vmem:[%s2426 + $0x30] sm:$0xf]
        %v2440 = vld [vmem:[%s2426 + $0x34] sm:$0xf]
        %v2441 = vld [vmem:[%s2426 + $0x38] sm:$0xf]
        %v2442 = vld [vmem:[%s2426 + $0x3c] sm:$0xf]
        %v2443 = vrot.slane %v1779, 3
        %v2461 = vunpack.c.l.b16 %v2427
        %v2462 = vunpack.c.l.b16 %v2428
        %v2463 = vunpack.c.l.b16 %v2429
        %v2464 = vunpack.c.l.b16 %v2430
        %v2465 = vunpack.c.l.b16 %v2431
        %v2466 = vunpack.c.l.b16 %v2432
        %v2467 = vunpack.c.l.b16 %v2433
        %v2468 = vunpack.c.l.b16 %v2434
        %v2469 = vunpack.c.l.b16 %v2435
        %v2470 = vunpack.c.l.b16 %v2436
        %v2471 = vunpack.c.l.b16 %v2437
        %v2472 = vunpack.c.l.b16 %v2438
        %v2473 = vunpack.c.l.b16 %v2439
        %v2474 = vunpack.c.l.b16 %v2440
        %v2475 = vunpack.c.l.b16 %v2441
        %v2476 = vunpack.c.l.b16 %v2442
        %v2477 = vpack.c.b16 %v2462, %v2461
        %v2478 = vpack.c.b16 %v2464, %v2463
        %v2479 = vpack.c.b16 %v2466, %v2465
        %v2480 = vpack.c.b16 %v2468, %v2467
        %v2481 = vpack.c.b16 %v2470, %v2469
        %v2482 = vpack.c.b16 %v2472, %v2471
        %v2483 = vpack.c.b16 %v2474, %v2473
        %v2484 = vpack.c.b16 %v2476, %v2475
        %2493 = vmatprep.subr.bf16.mxu0 0
        %2494 = vmatpush1.bf16.msra.mxu0 %v2484
        %2495 = vmatprep.subr.bf16.mxu0 0
        %2496 = vmatpush1.bf16.msra.mxu0 %v2483
        %2497 = vmatprep.subr.bf16.mxu0 0
        %2498 = vmatpush1.bf16.msra.mxu0 %v2482
        %2499 = vmatprep.subr.bf16.mxu0 0
        %2500 = vmatpush1.bf16.msra.mxu0 %v2481
        %2501 = vmatprep.subr.bf16.mxu0 0
        %2502 = vmatpush1.bf16.msra.mxu0 %v2480
        %2503 = vmatprep.subr.bf16.mxu0 0
        %2504 = vmatpush1.bf16.msra.mxu0 %v2479
        %2505 = vmatprep.subr.bf16.mxu0 0
        %2506 = vmatpush1.bf16.msra.mxu0 %v2478
        %2507 = vmatprep.subr.bf16.mxu0 0
        %2508 = vmatpush1.bf16.msra.mxu0 %v2477
        %2509 = vmatprep.subr.bf16.mxu0 0
        %2510 = vmatpush2.bf16.msra.mxu0 0
        %2511 = vmatprep.subr.bf16.mxu0 0
        %2512 = vmatpush2.bf16.msra.mxu0 0
        %2513 = vmatprep.subr.bf16.mxu0 0
        %2514 = vmatpush2.bf16.msra.mxu0 0
        %2515 = vmatprep.subr.bf16.mxu0 0
        %2516 = vmatpush2.bf16.msra.mxu0 0
        %2517 = vmatprep.subr.bf16.mxu0 0
        %2518 = vmatpush2.bf16.msra.mxu0 0
        %2519 = vmatprep.subr.bf16.mxu0 0
        %2520 = vmatpush2.bf16.msra.mxu0 0
        %2521 = vmatprep.subr.bf16.mxu0 0
        %2522 = vmatpush2.bf16.msra.mxu0 0
        %2523 = vmatprep.subr.bf16.mxu0 0
        %2524 = vmatpush2.bf16.msra.mxu0 0
        %2525 = vmatprep.mubr.bf16.mxu0 0
        %2526 = vmatmul.mubr.bf16.gmra.mxu0 %v2443
        %v2527 = vpop.f32.mrf.mxu0
        %v2528 = vadd.f32 0.0, %v2527
        %v2529 = vpop.f32.mrf.mxu0
        %v2530 = vpop.f32.mrf.mxu0
        %v2531 = vpop.f32.mrf.mxu0
        %2532 = vdwg.mxu0
        %v2533 = vadd.f32 %v2425, %v2528
        %s2534 = scalar_lea.vmem %s6, 448
        %v2535 = vld [vmem:[%s2534] sm:$0xf]
        %v2536 = vld [vmem:[%s2534 + $0x4] sm:$0xf]
        %v2537 = vld [vmem:[%s2534 + $0x8] sm:$0xf]
        %v2538 = vld [vmem:[%s2534 + $0xc] sm:$0xf]
        %v2539 = vld [vmem:[%s2534 + $0x10] sm:$0xf]
        %v2540 = vld [vmem:[%s2534 + $0x14] sm:$0xf]
        %v2541 = vld [vmem:[%s2534 + $0x18] sm:$0xf]
        %v2542 = vld [vmem:[%s2534 + $0x1c] sm:$0xf]
        %v2543 = vld [vmem:[%s2534 + $0x20] sm:$0xf]
        %v2544 = vld [vmem:[%s2534 + $0x24] sm:$0xf]
        %v2545 = vld [vmem:[%s2534 + $0x28] sm:$0xf]
        %v2546 = vld [vmem:[%s2534 + $0x2c] sm:$0xf]
        %v2547 = vld [vmem:[%s2534 + $0x30] sm:$0xf]
        %v2548 = vld [vmem:[%s2534 + $0x34] sm:$0xf]
        %v2549 = vld [vmem:[%s2534 + $0x38] sm:$0xf]
        %v2550 = vld [vmem:[%s2534 + $0x3c] sm:$0xf]
        %v2551 = vrot.slane %v1814, 3
        %v2569 = vunpack.c.l.b16 %v2535
        %v2570 = vunpack.c.l.b16 %v2536
        %v2571 = vunpack.c.l.b16 %v2537
        %v2572 = vunpack.c.l.b16 %v2538
        %v2573 = vunpack.c.l.b16 %v2539
        %v2574 = vunpack.c.l.b16 %v2540
        %v2575 = vunpack.c.l.b16 %v2541
        %v2576 = vunpack.c.l.b16 %v2542
        %v2577 = vunpack.c.l.b16 %v2543
        %v2578 = vunpack.c.l.b16 %v2544
        %v2579 = vunpack.c.l.b16 %v2545
        %v2580 = vunpack.c.l.b16 %v2546
        %v2581 = vunpack.c.l.b16 %v2547
        %v2582 = vunpack.c.l.b16 %v2548
        %v2583 = vunpack.c.l.b16 %v2549
        %v2584 = vunpack.c.l.b16 %v2550
        %v2585 = vpack.c.b16 %v2570, %v2569
        %v2586 = vpack.c.b16 %v2572, %v2571
        %v2587 = vpack.c.b16 %v2574, %v2573
        %v2588 = vpack.c.b16 %v2576, %v2575
        %v2589 = vpack.c.b16 %v2578, %v2577
        %v2590 = vpack.c.b16 %v2580, %v2579
        %v2591 = vpack.c.b16 %v2582, %v2581
        %v2592 = vpack.c.b16 %v2584, %v2583
        %2601 = vmatprep.subr.bf16.mxu0 0
        %2602 = vmatpush1.bf16.msra.mxu0 %v2592
        %2603 = vmatprep.subr.bf16.mxu0 0
        %2604 = vmatpush1.bf16.msra.mxu0 %v2591
        %2605 = vmatprep.subr.bf16.mxu0 0
        %2606 = vmatpush1.bf16.msra.mxu0 %v2590
        %2607 = vmatprep.subr.bf16.mxu0 0
        %2608 = vmatpush1.bf16.msra.mxu0 %v2589
        %2609 = vmatprep.subr.bf16.mxu0 0
        %2610 = vmatpush1.bf16.msra.mxu0 %v2588
        %2611 = vmatprep.subr.bf16.mxu0 0
        %2612 = vmatpush1.bf16.msra.mxu0 %v2587
        %2613 = vmatprep.subr.bf16.mxu0 0
        %2614 = vmatpush1.bf16.msra.mxu0 %v2586
        %2615 = vmatprep.subr.bf16.mxu0 0
        %2616 = vmatpush1.bf16.msra.mxu0 %v2585
        %2617 = vmatprep.subr.bf16.mxu0 0
        %2618 = vmatpush2.bf16.msra.mxu0 0
        %2619 = vmatprep.subr.bf16.mxu0 0
        %2620 = vmatpush2.bf16.msra.mxu0 0
        %2621 = vmatprep.subr.bf16.mxu0 0
        %2622 = vmatpush2.bf16.msra.mxu0 0
        %2623 = vmatprep.subr.bf16.mxu0 0
        %2624 = vmatpush2.bf16.msra.mxu0 0
        %2625 = vmatprep.subr.bf16.mxu0 0
        %2626 = vmatpush2.bf16.msra.mxu0 0
        %2627 = vmatprep.subr.bf16.mxu0 0
        %2628 = vmatpush2.bf16.msra.mxu0 0
        %2629 = vmatprep.subr.bf16.mxu0 0
        %2630 = vmatpush2.bf16.msra.mxu0 0
        %2631 = vmatprep.subr.bf16.mxu0 0
        %2632 = vmatpush2.bf16.msra.mxu0 0
        %2633 = vmatprep.mubr.bf16.mxu0 0
        %2634 = vmatmul.mubr.bf16.gmra.mxu0 %v2551
        %v2635 = vpop.f32.mrf.mxu0
        %v2636 = vadd.f32 0.0, %v2635
        %v2637 = vpop.f32.mrf.mxu0
        %v2638 = vpop.f32.mrf.mxu0
        %v2639 = vpop.f32.mrf.mxu0
        %2640 = vdwg.mxu0
        %v2641 = vadd.f32 %v2533, %v2636
        %s2642 = scalar_lea.vmem %s6, 512
        %v2643 = vld [vmem:[%s2642] sm:$0xf]
        %v2644 = vld [vmem:[%s2642 + $0x4] sm:$0xf]
        %v2645 = vld [vmem:[%s2642 + $0x8] sm:$0xf]
        %v2646 = vld [vmem:[%s2642 + $0xc] sm:$0xf]
        %v2647 = vld [vmem:[%s2642 + $0x10] sm:$0xf]
        %v2648 = vld [vmem:[%s2642 + $0x14] sm:$0xf]
        %v2649 = vld [vmem:[%s2642 + $0x18] sm:$0xf]
        %v2650 = vld [vmem:[%s2642 + $0x1c] sm:$0xf]
        %v2651 = vld [vmem:[%s2642 + $0x20] sm:$0xf]
        %v2652 = vld [vmem:[%s2642 + $0x24] sm:$0xf]
        %v2653 = vld [vmem:[%s2642 + $0x28] sm:$0xf]
        %v2654 = vld [vmem:[%s2642 + $0x2c] sm:$0xf]
        %v2655 = vld [vmem:[%s2642 + $0x30] sm:$0xf]
        %v2656 = vld [vmem:[%s2642 + $0x34] sm:$0xf]
        %v2657 = vld [vmem:[%s2642 + $0x38] sm:$0xf]
        %v2658 = vld [vmem:[%s2642 + $0x3c] sm:$0xf]
        %v2659 = vrot.slane %v1779, 4
        %v2677 = vunpack.c.l.b16 %v2643
        %v2678 = vunpack.c.l.b16 %v2644
        %v2679 = vunpack.c.l.b16 %v2645
        %v2680 = vunpack.c.l.b16 %v2646
        %v2681 = vunpack.c.l.b16 %v2647
        %v2682 = vunpack.c.l.b16 %v2648
        %v2683 = vunpack.c.l.b16 %v2649
        %v2684 = vunpack.c.l.b16 %v2650
        %v2685 = vunpack.c.l.b16 %v2651
        %v2686 = vunpack.c.l.b16 %v2652
        %v2687 = vunpack.c.l.b16 %v2653
        %v2688 = vunpack.c.l.b16 %v2654
        %v2689 = vunpack.c.l.b16 %v2655
        %v2690 = vunpack.c.l.b16 %v2656
        %v2691 = vunpack.c.l.b16 %v2657
        %v2692 = vunpack.c.l.b16 %v2658
        %v2693 = vpack.c.b16 %v2678, %v2677
        %v2694 = vpack.c.b16 %v2680, %v2679
        %v2695 = vpack.c.b16 %v2682, %v2681
        %v2696 = vpack.c.b16 %v2684, %v2683
        %v2697 = vpack.c.b16 %v2686, %v2685
        %v2698 = vpack.c.b16 %v2688, %v2687
        %v2699 = vpack.c.b16 %v2690, %v2689
        %v2700 = vpack.c.b16 %v2692, %v2691
        %2709 = vmatprep.subr.bf16.mxu0 0
        %2710 = vmatpush1.bf16.msra.mxu0 %v2700
        %2711 = vmatprep.subr.bf16.mxu0 0
        %2712 = vmatpush1.bf16.msra.mxu0 %v2699
        %2713 = vmatprep.subr.bf16.mxu0 0
        %2714 = vmatpush1.bf16.msra.mxu0 %v2698
        %2715 = vmatprep.subr.bf16.mxu0 0
        %2716 = vmatpush1.bf16.msra.mxu0 %v2697
        %2717 = vmatprep.subr.bf16.mxu0 0
        %2718 = vmatpush1.bf16.msra.mxu0 %v2696
        %2719 = vmatprep.subr.bf16.mxu0 0
        %2720 = vmatpush1.bf16.msra.mxu0 %v2695
        %2721 = vmatprep.subr.bf16.mxu0 0
        %2722 = vmatpush1.bf16.msra.mxu0 %v2694
        %2723 = vmatprep.subr.bf16.mxu0 0
        %2724 = vmatpush1.bf16.msra.mxu0 %v2693
        %2725 = vmatprep.subr.bf16.mxu0 0
        %2726 = vmatpush2.bf16.msra.mxu0 0
        %2727 = vmatprep.subr.bf16.mxu0 0
        %2728 = vmatpush2.bf16.msra.mxu0 0
        %2729 = vmatprep.subr.bf16.mxu0 0
        %2730 = vmatpush2.bf16.msra.mxu0 0
        %2731 = vmatprep.subr.bf16.mxu0 0
        %2732 = vmatpush2.bf16.msra.mxu0 0
        %2733 = vmatprep.subr.bf16.mxu0 0
        %2734 = vmatpush2.bf16.msra.mxu0 0
        %2735 = vmatprep.subr.bf16.mxu0 0
        %2736 = vmatpush2.bf16.msra.mxu0 0
        %2737 = vmatprep.subr.bf16.mxu0 0
        %2738 = vmatpush2.bf16.msra.mxu0 0
        %2739 = vmatprep.subr.bf16.mxu0 0
        %2740 = vmatpush2.bf16.msra.mxu0 0
        %2741 = vmatprep.mubr.bf16.mxu0 0
        %2742 = vmatmul.mubr.bf16.gmra.mxu0 %v2659
        %v2743 = vpop.f32.mrf.mxu0
        %v2744 = vadd.f32 0.0, %v2743
        %v2745 = vpop.f32.mrf.mxu0
        %v2746 = vpop.f32.mrf.mxu0
        %v2747 = vpop.f32.mrf.mxu0
        %2748 = vdwg.mxu0
        %v2749 = vadd.f32 %v2641, %v2744
        %s2750 = scalar_lea.vmem %s6, 576
        %v2751 = vld [vmem:[%s2750] sm:$0xf]
        %v2752 = vld [vmem:[%s2750 + $0x4] sm:$0xf]
        %v2753 = vld [vmem:[%s2750 + $0x8] sm:$0xf]
        %v2754 = vld [vmem:[%s2750 + $0xc] sm:$0xf]
        %v2755 = vld [vmem:[%s2750 + $0x10] sm:$0xf]
        %v2756 = vld [vmem:[%s2750 + $0x14] sm:$0xf]
        %v2757 = vld [vmem:[%s2750 + $0x18] sm:$0xf]
        %v2758 = vld [vmem:[%s2750 + $0x1c] sm:$0xf]
        %v2759 = vld [vmem:[%s2750 + $0x20] sm:$0xf]
        %v2760 = vld [vmem:[%s2750 + $0x24] sm:$0xf]
        %v2761 = vld [vmem:[%s2750 + $0x28] sm:$0xf]
        %v2762 = vld [vmem:[%s2750 + $0x2c] sm:$0xf]
        %v2763 = vld [vmem:[%s2750 + $0x30] sm:$0xf]
        %v2764 = vld [vmem:[%s2750 + $0x34] sm:$0xf]
        %v2765 = vld [vmem:[%s2750 + $0x38] sm:$0xf]
        %v2766 = vld [vmem:[%s2750 + $0x3c] sm:$0xf]
        %v2767 = vrot.slane %v1814, 4
        %v2785 = vunpack.c.l.b16 %v2751
        %v2786 = vunpack.c.l.b16 %v2752
        %v2787 = vunpack.c.l.b16 %v2753
        %v2788 = vunpack.c.l.b16 %v2754
        %v2789 = vunpack.c.l.b16 %v2755
        %v2790 = vunpack.c.l.b16 %v2756
        %v2791 = vunpack.c.l.b16 %v2757
        %v2792 = vunpack.c.l.b16 %v2758
        %v2793 = vunpack.c.l.b16 %v2759
        %v2794 = vunpack.c.l.b16 %v2760
        %v2795 = vunpack.c.l.b16 %v2761
        %v2796 = vunpack.c.l.b16 %v2762
        %v2797 = vunpack.c.l.b16 %v2763
        %v2798 = vunpack.c.l.b16 %v2764
        %v2799 = vunpack.c.l.b16 %v2765
        %v2800 = vunpack.c.l.b16 %v2766
        %v2801 = vpack.c.b16 %v2786, %v2785
        %v2802 = vpack.c.b16 %v2788, %v2787
        %v2803 = vpack.c.b16 %v2790, %v2789
        %v2804 = vpack.c.b16 %v2792, %v2791
        %v2805 = vpack.c.b16 %v2794, %v2793
        %v2806 = vpack.c.b16 %v2796, %v2795
        %v2807 = vpack.c.b16 %v2798, %v2797
        %v2808 = vpack.c.b16 %v2800, %v2799
        %2817 = vmatprep.subr.bf16.mxu0 0
        %2818 = vmatpush1.bf16.msra.mxu0 %v2808
        %2819 = vmatprep.subr.bf16.mxu0 0
        %2820 = vmatpush1.bf16.msra.mxu0 %v2807
        %2821 = vmatprep.subr.bf16.mxu0 0
        %2822 = vmatpush1.bf16.msra.mxu0 %v2806
        %2823 = vmatprep.subr.bf16.mxu0 0
        %2824 = vmatpush1.bf16.msra.mxu0 %v2805
        %2825 = vmatprep.subr.bf16.mxu0 0
        %2826 = vmatpush1.bf16.msra.mxu0 %v2804
        %2827 = vmatprep.subr.bf16.mxu0 0
        %2828 = vmatpush1.bf16.msra.mxu0 %v2803
        %2829 = vmatprep.subr.bf16.mxu0 0
        %2830 = vmatpush1.bf16.msra.mxu0 %v2802
        %2831 = vmatprep.subr.bf16.mxu0 0
        %2832 = vmatpush1.bf16.msra.mxu0 %v2801
        %2833 = vmatprep.subr.bf16.mxu0 0
        %2834 = vmatpush2.bf16.msra.mxu0 0
        %2835 = vmatprep.subr.bf16.mxu0 0
        %2836 = vmatpush2.bf16.msra.mxu0 0
        %2837 = vmatprep.subr.bf16.mxu0 0
        %2838 = vmatpush2.bf16.msra.mxu0 0
        %2839 = vmatprep.subr.bf16.mxu0 0
        %2840 = vmatpush2.bf16.msra.mxu0 0
        %2841 = vmatprep.subr.bf16.mxu0 0
        %2842 = vmatpush2.bf16.msra.mxu0 0
        %2843 = vmatprep.subr.bf16.mxu0 0
        %2844 = vmatpush2.bf16.msra.mxu0 0
        %2845 = vmatprep.subr.bf16.mxu0 0
        %2846 = vmatpush2.bf16.msra.mxu0 0
        %2847 = vmatprep.subr.bf16.mxu0 0
        %2848 = vmatpush2.bf16.msra.mxu0 0
        %2849 = vmatprep.mubr.bf16.mxu0 0
        %2850 = vmatmul.mubr.bf16.gmra.mxu0 %v2767
        %v2851 = vpop.f32.mrf.mxu0
        %v2852 = vadd.f32 0.0, %v2851
        %v2853 = vpop.f32.mrf.mxu0
        %v2854 = vpop.f32.mrf.mxu0
        %v2855 = vpop.f32.mrf.mxu0
        %2856 = vdwg.mxu0
        %v2857 = vadd.f32 %v2749, %v2852
        %s2858 = scalar_lea.vmem %s6, 640
        %v2859 = vld [vmem:[%s2858] sm:$0xf]
        %v2860 = vld [vmem:[%s2858 + $0x4] sm:$0xf]
        %v2861 = vld [vmem:[%s2858 + $0x8] sm:$0xf]
        %v2862 = vld [vmem:[%s2858 + $0xc] sm:$0xf]
        %v2863 = vld [vmem:[%s2858 + $0x10] sm:$0xf]
        %v2864 = vld [vmem:[%s2858 + $0x14] sm:$0xf]
        %v2865 = vld [vmem:[%s2858 + $0x18] sm:$0xf]
        %v2866 = vld [vmem:[%s2858 + $0x1c] sm:$0xf]
        %v2867 = vld [vmem:[%s2858 + $0x20] sm:$0xf]
        %v2868 = vld [vmem:[%s2858 + $0x24] sm:$0xf]
        %v2869 = vld [vmem:[%s2858 + $0x28] sm:$0xf]
        %v2870 = vld [vmem:[%s2858 + $0x2c] sm:$0xf]
        %v2871 = vld [vmem:[%s2858 + $0x30] sm:$0xf]
        %v2872 = vld [vmem:[%s2858 + $0x34] sm:$0xf]
        %v2873 = vld [vmem:[%s2858 + $0x38] sm:$0xf]
        %v2874 = vld [vmem:[%s2858 + $0x3c] sm:$0xf]
        %v2875 = vrot.slane %v1779, 5
        %v2893 = vunpack.c.l.b16 %v2859
        %v2894 = vunpack.c.l.b16 %v2860
        %v2895 = vunpack.c.l.b16 %v2861
        %v2896 = vunpack.c.l.b16 %v2862
        %v2897 = vunpack.c.l.b16 %v2863
        %v2898 = vunpack.c.l.b16 %v2864
        %v2899 = vunpack.c.l.b16 %v2865
        %v2900 = vunpack.c.l.b16 %v2866
        %v2901 = vunpack.c.l.b16 %v2867
        %v2902 = vunpack.c.l.b16 %v2868
        %v2903 = vunpack.c.l.b16 %v2869
        %v2904 = vunpack.c.l.b16 %v2870
        %v2905 = vunpack.c.l.b16 %v2871
        %v2906 = vunpack.c.l.b16 %v2872
        %v2907 = vunpack.c.l.b16 %v2873
        %v2908 = vunpack.c.l.b16 %v2874
        %v2909 = vpack.c.b16 %v2894, %v2893
        %v2910 = vpack.c.b16 %v2896, %v2895
        %v2911 = vpack.c.b16 %v2898, %v2897
        %v2912 = vpack.c.b16 %v2900, %v2899
        %v2913 = vpack.c.b16 %v2902, %v2901
        %v2914 = vpack.c.b16 %v2904, %v2903
        %v2915 = vpack.c.b16 %v2906, %v2905
        %v2916 = vpack.c.b16 %v2908, %v2907
        %2925 = vmatprep.subr.bf16.mxu0 0
        %2926 = vmatpush1.bf16.msra.mxu0 %v2916
        %2927 = vmatprep.subr.bf16.mxu0 0
        %2928 = vmatpush1.bf16.msra.mxu0 %v2915
        %2929 = vmatprep.subr.bf16.mxu0 0
        %2930 = vmatpush1.bf16.msra.mxu0 %v2914
        %2931 = vmatprep.subr.bf16.mxu0 0
        %2932 = vmatpush1.bf16.msra.mxu0 %v2913
        %2933 = vmatprep.subr.bf16.mxu0 0
        %2934 = vmatpush1.bf16.msra.mxu0 %v2912
        %2935 = vmatprep.subr.bf16.mxu0 0
        %2936 = vmatpush1.bf16.msra.mxu0 %v2911
        %2937 = vmatprep.subr.bf16.mxu0 0
        %2938 = vmatpush1.bf16.msra.mxu0 %v2910
        %2939 = vmatprep.subr.bf16.mxu0 0
        %2940 = vmatpush1.bf16.msra.mxu0 %v2909
        %2941 = vmatprep.subr.bf16.mxu0 0
        %2942 = vmatpush2.bf16.msra.mxu0 0
        %2943 = vmatprep.subr.bf16.mxu0 0
        %2944 = vmatpush2.bf16.msra.mxu0 0
        %2945 = vmatprep.subr.bf16.mxu0 0
        %2946 = vmatpush2.bf16.msra.mxu0 0
        %2947 = vmatprep.subr.bf16.mxu0 0
        %2948 = vmatpush2.bf16.msra.mxu0 0
        %2949 = vmatprep.subr.bf16.mxu0 0
        %2950 = vmatpush2.bf16.msra.mxu0 0
        %2951 = vmatprep.subr.bf16.mxu0 0
        %2952 = vmatpush2.bf16.msra.mxu0 0
        %2953 = vmatprep.subr.bf16.mxu0 0
        %2954 = vmatpush2.bf16.msra.mxu0 0
        %2955 = vmatprep.subr.bf16.mxu0 0
        %2956 = vmatpush2.bf16.msra.mxu0 0
        %2957 = vmatprep.mubr.bf16.mxu0 0
        %2958 = vmatmul.mubr.bf16.gmra.mxu0 %v2875
        %v2959 = vpop.f32.mrf.mxu0
        %v2960 = vadd.f32 0.0, %v2959
        %v2961 = vpop.f32.mrf.mxu0
        %v2962 = vpop.f32.mrf.mxu0
        %v2963 = vpop.f32.mrf.mxu0
        %2964 = vdwg.mxu0
        %v2965 = vadd.f32 %v2857, %v2960
        %s2966 = scalar_lea.vmem %s6, 704
        %v2967 = vld [vmem:[%s2966] sm:$0xf]
        %v2968 = vld [vmem:[%s2966 + $0x4] sm:$0xf]
        %v2969 = vld [vmem:[%s2966 + $0x8] sm:$0xf]
        %v2970 = vld [vmem:[%s2966 + $0xc] sm:$0xf]
        %v2971 = vld [vmem:[%s2966 + $0x10] sm:$0xf]
        %v2972 = vld [vmem:[%s2966 + $0x14] sm:$0xf]
        %v2973 = vld [vmem:[%s2966 + $0x18] sm:$0xf]
        %v2974 = vld [vmem:[%s2966 + $0x1c] sm:$0xf]
        %v2975 = vld [vmem:[%s2966 + $0x20] sm:$0xf]
        %v2976 = vld [vmem:[%s2966 + $0x24] sm:$0xf]
        %v2977 = vld [vmem:[%s2966 + $0x28] sm:$0xf]
        %v2978 = vld [vmem:[%s2966 + $0x2c] sm:$0xf]
        %v2979 = vld [vmem:[%s2966 + $0x30] sm:$0xf]
        %v2980 = vld [vmem:[%s2966 + $0x34] sm:$0xf]
        %v2981 = vld [vmem:[%s2966 + $0x38] sm:$0xf]
        %v2982 = vld [vmem:[%s2966 + $0x3c] sm:$0xf]
        %v2983 = vrot.slane %v1814, 5
        %v3001 = vunpack.c.l.b16 %v2967
        %v3002 = vunpack.c.l.b16 %v2968
        %v3003 = vunpack.c.l.b16 %v2969
        %v3004 = vunpack.c.l.b16 %v2970
        %v3005 = vunpack.c.l.b16 %v2971
        %v3006 = vunpack.c.l.b16 %v2972
        %v3007 = vunpack.c.l.b16 %v2973
        %v3008 = vunpack.c.l.b16 %v2974
        %v3009 = vunpack.c.l.b16 %v2975
        %v3010 = vunpack.c.l.b16 %v2976
        %v3011 = vunpack.c.l.b16 %v2977
        %v3012 = vunpack.c.l.b16 %v2978
        %v3013 = vunpack.c.l.b16 %v2979
        %v3014 = vunpack.c.l.b16 %v2980
        %v3015 = vunpack.c.l.b16 %v2981
        %v3016 = vunpack.c.l.b16 %v2982
        %v3017 = vpack.c.b16 %v3002, %v3001
        %v3018 = vpack.c.b16 %v3004, %v3003
        %v3019 = vpack.c.b16 %v3006, %v3005
        %v3020 = vpack.c.b16 %v3008, %v3007
        %v3021 = vpack.c.b16 %v3010, %v3009
        %v3022 = vpack.c.b16 %v3012, %v3011
        %v3023 = vpack.c.b16 %v3014, %v3013
        %v3024 = vpack.c.b16 %v3016, %v3015
        %3033 = vmatprep.subr.bf16.mxu0 0
        %3034 = vmatpush1.bf16.msra.mxu0 %v3024
        %3035 = vmatprep.subr.bf16.mxu0 0
        %3036 = vmatpush1.bf16.msra.mxu0 %v3023
        %3037 = vmatprep.subr.bf16.mxu0 0
        %3038 = vmatpush1.bf16.msra.mxu0 %v3022
        %3039 = vmatprep.subr.bf16.mxu0 0
        %3040 = vmatpush1.bf16.msra.mxu0 %v3021
        %3041 = vmatprep.subr.bf16.mxu0 0
        %3042 = vmatpush1.bf16.msra.mxu0 %v3020
        %3043 = vmatprep.subr.bf16.mxu0 0
        %3044 = vmatpush1.bf16.msra.mxu0 %v3019
        %3045 = vmatprep.subr.bf16.mxu0 0
        %3046 = vmatpush1.bf16.msra.mxu0 %v3018
        %3047 = vmatprep.subr.bf16.mxu0 0
        %3048 = vmatpush1.bf16.msra.mxu0 %v3017
        %3049 = vmatprep.subr.bf16.mxu0 0
        %3050 = vmatpush2.bf16.msra.mxu0 0
        %3051 = vmatprep.subr.bf16.mxu0 0
        %3052 = vmatpush2.bf16.msra.mxu0 0
        %3053 = vmatprep.subr.bf16.mxu0 0
        %3054 = vmatpush2.bf16.msra.mxu0 0
        %3055 = vmatprep.subr.bf16.mxu0 0
        %3056 = vmatpush2.bf16.msra.mxu0 0
        %3057 = vmatprep.subr.bf16.mxu0 0
        %3058 = vmatpush2.bf16.msra.mxu0 0
        %3059 = vmatprep.subr.bf16.mxu0 0
        %3060 = vmatpush2.bf16.msra.mxu0 0
        %3061 = vmatprep.subr.bf16.mxu0 0
        %3062 = vmatpush2.bf16.msra.mxu0 0
        %3063 = vmatprep.subr.bf16.mxu0 0
        %3064 = vmatpush2.bf16.msra.mxu0 0
        %3065 = vmatprep.mubr.bf16.mxu0 0
        %3066 = vmatmul.mubr.bf16.gmra.mxu0 %v2983
        %v3067 = vpop.f32.mrf.mxu0
        %v3068 = vadd.f32 0.0, %v3067
        %v3069 = vpop.f32.mrf.mxu0
        %v3070 = vpop.f32.mrf.mxu0
        %v3071 = vpop.f32.mrf.mxu0
        %3072 = vdwg.mxu0
        %v3073 = vadd.f32 %v2965, %v3068
        %s3074 = scalar_lea.vmem %s6, 768
        %v3075 = vld [vmem:[%s3074] sm:$0xf]
        %v3076 = vld [vmem:[%s3074 + $0x4] sm:$0xf]
        %v3077 = vld [vmem:[%s3074 + $0x8] sm:$0xf]
        %v3078 = vld [vmem:[%s3074 + $0xc] sm:$0xf]
        %v3079 = vld [vmem:[%s3074 + $0x10] sm:$0xf]
        %v3080 = vld [vmem:[%s3074 + $0x14] sm:$0xf]
        %v3081 = vld [vmem:[%s3074 + $0x18] sm:$0xf]
        %v3082 = vld [vmem:[%s3074 + $0x1c] sm:$0xf]
        %v3083 = vld [vmem:[%s3074 + $0x20] sm:$0xf]
        %v3084 = vld [vmem:[%s3074 + $0x24] sm:$0xf]
        %v3085 = vld [vmem:[%s3074 + $0x28] sm:$0xf]
        %v3086 = vld [vmem:[%s3074 + $0x2c] sm:$0xf]
        %v3087 = vld [vmem:[%s3074 + $0x30] sm:$0xf]
        %v3088 = vld [vmem:[%s3074 + $0x34] sm:$0xf]
        %v3089 = vld [vmem:[%s3074 + $0x38] sm:$0xf]
        %v3090 = vld [vmem:[%s3074 + $0x3c] sm:$0xf]
        %v3091 = vrot.slane %v1779, 6
        %v3109 = vunpack.c.l.b16 %v3075
        %v3110 = vunpack.c.l.b16 %v3076
        %v3111 = vunpack.c.l.b16 %v3077
        %v3112 = vunpack.c.l.b16 %v3078
        %v3113 = vunpack.c.l.b16 %v3079
        %v3114 = vunpack.c.l.b16 %v3080
        %v3115 = vunpack.c.l.b16 %v3081
        %v3116 = vunpack.c.l.b16 %v3082
        %v3117 = vunpack.c.l.b16 %v3083
        %v3118 = vunpack.c.l.b16 %v3084
        %v3119 = vunpack.c.l.b16 %v3085
        %v3120 = vunpack.c.l.b16 %v3086
        %v3121 = vunpack.c.l.b16 %v3087
        %v3122 = vunpack.c.l.b16 %v3088
        %v3123 = vunpack.c.l.b16 %v3089
        %v3124 = vunpack.c.l.b16 %v3090
        %v3125 = vpack.c.b16 %v3110, %v3109
        %v3126 = vpack.c.b16 %v3112, %v3111
        %v3127 = vpack.c.b16 %v3114, %v3113
        %v3128 = vpack.c.b16 %v3116, %v3115
        %v3129 = vpack.c.b16 %v3118, %v3117
        %v3130 = vpack.c.b16 %v3120, %v3119
        %v3131 = vpack.c.b16 %v3122, %v3121
        %v3132 = vpack.c.b16 %v3124, %v3123
        %3141 = vmatprep.subr.bf16.mxu0 0
        %3142 = vmatpush1.bf16.msra.mxu0 %v3132
        %3143 = vmatprep.subr.bf16.mxu0 0
        %3144 = vmatpush1.bf16.msra.mxu0 %v3131
        %3145 = vmatprep.subr.bf16.mxu0 0
        %3146 = vmatpush1.bf16.msra.mxu0 %v3130
        %3147 = vmatprep.subr.bf16.mxu0 0
        %3148 = vmatpush1.bf16.msra.mxu0 %v3129
        %3149 = vmatprep.subr.bf16.mxu0 0
        %3150 = vmatpush1.bf16.msra.mxu0 %v3128
        %3151 = vmatprep.subr.bf16.mxu0 0
        %3152 = vmatpush1.bf16.msra.mxu0 %v3127
        %3153 = vmatprep.subr.bf16.mxu0 0
        %3154 = vmatpush1.bf16.msra.mxu0 %v3126
        %3155 = vmatprep.subr.bf16.mxu0 0
        %3156 = vmatpush1.bf16.msra.mxu0 %v3125
        %3157 = vmatprep.subr.bf16.mxu0 0
        %3158 = vmatpush2.bf16.msra.mxu0 0
        %3159 = vmatprep.subr.bf16.mxu0 0
        %3160 = vmatpush2.bf16.msra.mxu0 0
        %3161 = vmatprep.subr.bf16.mxu0 0
        %3162 = vmatpush2.bf16.msra.mxu0 0
        %3163 = vmatprep.subr.bf16.mxu0 0
        %3164 = vmatpush2.bf16.msra.mxu0 0
        %3165 = vmatprep.subr.bf16.mxu0 0
        %3166 = vmatpush2.bf16.msra.mxu0 0
        %3167 = vmatprep.subr.bf16.mxu0 0
        %3168 = vmatpush2.bf16.msra.mxu0 0
        %3169 = vmatprep.subr.bf16.mxu0 0
        %3170 = vmatpush2.bf16.msra.mxu0 0
        %3171 = vmatprep.subr.bf16.mxu0 0
        %3172 = vmatpush2.bf16.msra.mxu0 0
        %3173 = vmatprep.mubr.bf16.mxu0 0
        %3174 = vmatmul.mubr.bf16.gmra.mxu0 %v3091
        %v3175 = vpop.f32.mrf.mxu0
        %v3176 = vadd.f32 0.0, %v3175
        %v3177 = vpop.f32.mrf.mxu0
        %v3178 = vpop.f32.mrf.mxu0
        %v3179 = vpop.f32.mrf.mxu0
        %3180 = vdwg.mxu0
        %v3181 = vadd.f32 %v3073, %v3176
        %s3182 = scalar_lea.vmem %s6, 832
        %v3183 = vld [vmem:[%s3182] sm:$0xf]
        %v3184 = vld [vmem:[%s3182 + $0x4] sm:$0xf]
        %v3185 = vld [vmem:[%s3182 + $0x8] sm:$0xf]
        %v3186 = vld [vmem:[%s3182 + $0xc] sm:$0xf]
        %v3187 = vld [vmem:[%s3182 + $0x10] sm:$0xf]
        %v3188 = vld [vmem:[%s3182 + $0x14] sm:$0xf]
        %v3189 = vld [vmem:[%s3182 + $0x18] sm:$0xf]
        %v3190 = vld [vmem:[%s3182 + $0x1c] sm:$0xf]
        %v3191 = vld [vmem:[%s3182 + $0x20] sm:$0xf]
        %v3192 = vld [vmem:[%s3182 + $0x24] sm:$0xf]
        %v3193 = vld [vmem:[%s3182 + $0x28] sm:$0xf]
        %v3194 = vld [vmem:[%s3182 + $0x2c] sm:$0xf]
        %v3195 = vld [vmem:[%s3182 + $0x30] sm:$0xf]
        %v3196 = vld [vmem:[%s3182 + $0x34] sm:$0xf]
        %v3197 = vld [vmem:[%s3182 + $0x38] sm:$0xf]
        %v3198 = vld [vmem:[%s3182 + $0x3c] sm:$0xf]
        %v3199 = vrot.slane %v1814, 6
        %v3217 = vunpack.c.l.b16 %v3183
        %v3218 = vunpack.c.l.b16 %v3184
        %v3219 = vunpack.c.l.b16 %v3185
        %v3220 = vunpack.c.l.b16 %v3186
        %v3221 = vunpack.c.l.b16 %v3187
        %v3222 = vunpack.c.l.b16 %v3188
        %v3223 = vunpack.c.l.b16 %v3189
        %v3224 = vunpack.c.l.b16 %v3190
        %v3225 = vunpack.c.l.b16 %v3191
        %v3226 = vunpack.c.l.b16 %v3192
        %v3227 = vunpack.c.l.b16 %v3193
        %v3228 = vunpack.c.l.b16 %v3194
        %v3229 = vunpack.c.l.b16 %v3195
        %v3230 = vunpack.c.l.b16 %v3196
        %v3231 = vunpack.c.l.b16 %v3197
        %v3232 = vunpack.c.l.b16 %v3198
        %v3233 = vpack.c.b16 %v3218, %v3217
        %v3234 = vpack.c.b16 %v3220, %v3219
        %v3235 = vpack.c.b16 %v3222, %v3221
        %v3236 = vpack.c.b16 %v3224, %v3223
        %v3237 = vpack.c.b16 %v3226, %v3225
        %v3238 = vpack.c.b16 %v3228, %v3227
        %v3239 = vpack.c.b16 %v3230, %v3229
        %v3240 = vpack.c.b16 %v3232, %v3231
        %3249 = vmatprep.subr.bf16.mxu0 0
        %3250 = vmatpush1.bf16.msra.mxu0 %v3240
        %3251 = vmatprep.subr.bf16.mxu0 0
        %3252 = vmatpush1.bf16.msra.mxu0 %v3239
        %3253 = vmatprep.subr.bf16.mxu0 0
        %3254 = vmatpush1.bf16.msra.mxu0 %v3238
        %3255 = vmatprep.subr.bf16.mxu0 0
        %3256 = vmatpush1.bf16.msra.mxu0 %v3237
        %3257 = vmatprep.subr.bf16.mxu0 0
        %3258 = vmatpush1.bf16.msra.mxu0 %v3236
        %3259 = vmatprep.subr.bf16.mxu0 0
        %3260 = vmatpush1.bf16.msra.mxu0 %v3235
        %3261 = vmatprep.subr.bf16.mxu0 0
        %3262 = vmatpush1.bf16.msra.mxu0 %v3234
        %3263 = vmatprep.subr.bf16.mxu0 0
        %3264 = vmatpush1.bf16.msra.mxu0 %v3233
        %3265 = vmatprep.subr.bf16.mxu0 0
        %3266 = vmatpush2.bf16.msra.mxu0 0
        %3267 = vmatprep.subr.bf16.mxu0 0
        %3268 = vmatpush2.bf16.msra.mxu0 0
        %3269 = vmatprep.subr.bf16.mxu0 0
        %3270 = vmatpush2.bf16.msra.mxu0 0
        %3271 = vmatprep.subr.bf16.mxu0 0
        %3272 = vmatpush2.bf16.msra.mxu0 0
        %3273 = vmatprep.subr.bf16.mxu0 0
        %3274 = vmatpush2.bf16.msra.mxu0 0
        %3275 = vmatprep.subr.bf16.mxu0 0
        %3276 = vmatpush2.bf16.msra.mxu0 0
        %3277 = vmatprep.subr.bf16.mxu0 0
        %3278 = vmatpush2.bf16.msra.mxu0 0
        %3279 = vmatprep.subr.bf16.mxu0 0
        %3280 = vmatpush2.bf16.msra.mxu0 0
        %3281 = vmatprep.mubr.bf16.mxu0 0
        %3282 = vmatmul.mubr.bf16.gmra.mxu0 %v3199
        %v3283 = vpop.f32.mrf.mxu0
        %v3284 = vadd.f32 0.0, %v3283
        %v3285 = vpop.f32.mrf.mxu0
        %v3286 = vpop.f32.mrf.mxu0
        %v3287 = vpop.f32.mrf.mxu0
        %3288 = vdwg.mxu0
        %v3289 = vadd.f32 %v3181, %v3284
        %s3290 = scalar_lea.vmem %s6, 896
        %v3291 = vld [vmem:[%s3290] sm:$0xf]
        %v3292 = vld [vmem:[%s3290 + $0x4] sm:$0xf]
        %v3293 = vld [vmem:[%s3290 + $0x8] sm:$0xf]
        %v3294 = vld [vmem:[%s3290 + $0xc] sm:$0xf]
        %v3295 = vld [vmem:[%s3290 + $0x10] sm:$0xf]
        %v3296 = vld [vmem:[%s3290 + $0x14] sm:$0xf]
        %v3297 = vld [vmem:[%s3290 + $0x18] sm:$0xf]
        %v3298 = vld [vmem:[%s3290 + $0x1c] sm:$0xf]
        %v3299 = vld [vmem:[%s3290 + $0x20] sm:$0xf]
        %v3300 = vld [vmem:[%s3290 + $0x24] sm:$0xf]
        %v3301 = vld [vmem:[%s3290 + $0x28] sm:$0xf]
        %v3302 = vld [vmem:[%s3290 + $0x2c] sm:$0xf]
        %v3303 = vld [vmem:[%s3290 + $0x30] sm:$0xf]
        %v3304 = vld [vmem:[%s3290 + $0x34] sm:$0xf]
        %v3305 = vld [vmem:[%s3290 + $0x38] sm:$0xf]
        %v3306 = vld [vmem:[%s3290 + $0x3c] sm:$0xf]
        %v3307 = vrot.slane %v1779, 7
        %v3325 = vunpack.c.l.b16 %v3291
        %v3326 = vunpack.c.l.b16 %v3292
        %v3327 = vunpack.c.l.b16 %v3293
        %v3328 = vunpack.c.l.b16 %v3294
        %v3329 = vunpack.c.l.b16 %v3295
        %v3330 = vunpack.c.l.b16 %v3296
        %v3331 = vunpack.c.l.b16 %v3297
        %v3332 = vunpack.c.l.b16 %v3298
        %v3333 = vunpack.c.l.b16 %v3299
        %v3334 = vunpack.c.l.b16 %v3300
        %v3335 = vunpack.c.l.b16 %v3301
        %v3336 = vunpack.c.l.b16 %v3302
        %v3337 = vunpack.c.l.b16 %v3303
        %v3338 = vunpack.c.l.b16 %v3304
        %v3339 = vunpack.c.l.b16 %v3305
        %v3340 = vunpack.c.l.b16 %v3306
        %v3341 = vpack.c.b16 %v3326, %v3325
        %v3342 = vpack.c.b16 %v3328, %v3327
        %v3343 = vpack.c.b16 %v3330, %v3329
        %v3344 = vpack.c.b16 %v3332, %v3331
        %v3345 = vpack.c.b16 %v3334, %v3333
        %v3346 = vpack.c.b16 %v3336, %v3335
        %v3347 = vpack.c.b16 %v3338, %v3337
        %v3348 = vpack.c.b16 %v3340, %v3339
        %3357 = vmatprep.subr.bf16.mxu0 0
        %3358 = vmatpush1.bf16.msra.mxu0 %v3348
        %3359 = vmatprep.subr.bf16.mxu0 0
        %3360 = vmatpush1.bf16.msra.mxu0 %v3347
        %3361 = vmatprep.subr.bf16.mxu0 0
        %3362 = vmatpush1.bf16.msra.mxu0 %v3346
        %3363 = vmatprep.subr.bf16.mxu0 0
        %3364 = vmatpush1.bf16.msra.mxu0 %v3345
        %3365 = vmatprep.subr.bf16.mxu0 0
        %3366 = vmatpush1.bf16.msra.mxu0 %v3344
        %3367 = vmatprep.subr.bf16.mxu0 0
        %3368 = vmatpush1.bf16.msra.mxu0 %v3343
        %3369 = vmatprep.subr.bf16.mxu0 0
        %3370 = vmatpush1.bf16.msra.mxu0 %v3342
        %3371 = vmatprep.subr.bf16.mxu0 0
        %3372 = vmatpush1.bf16.msra.mxu0 %v3341
        %3373 = vmatprep.subr.bf16.mxu0 0
        %3374 = vmatpush2.bf16.msra.mxu0 0
        %3375 = vmatprep.subr.bf16.mxu0 0
        %3376 = vmatpush2.bf16.msra.mxu0 0
        %3377 = vmatprep.subr.bf16.mxu0 0
        %3378 = vmatpush2.bf16.msra.mxu0 0
        %3379 = vmatprep.subr.bf16.mxu0 0
        %3380 = vmatpush2.bf16.msra.mxu0 0
        %3381 = vmatprep.subr.bf16.mxu0 0
        %3382 = vmatpush2.bf16.msra.mxu0 0
        %3383 = vmatprep.subr.bf16.mxu0 0
        %3384 = vmatpush2.bf16.msra.mxu0 0
        %3385 = vmatprep.subr.bf16.mxu0 0
        %3386 = vmatpush2.bf16.msra.mxu0 0
        %3387 = vmatprep.subr.bf16.mxu0 0
        %3388 = vmatpush2.bf16.msra.mxu0 0
        %3389 = vmatprep.mubr.bf16.mxu0 0
        %3390 = vmatmul.mubr.bf16.gmra.mxu0 %v3307
        %v3391 = vpop.f32.mrf.mxu0
        %v3392 = vadd.f32 0.0, %v3391
        %v3393 = vpop.f32.mrf.mxu0
        %v3394 = vpop.f32.mrf.mxu0
        %v3395 = vpop.f32.mrf.mxu0
        %3396 = vdwg.mxu0
        %v3397 = vadd.f32 %v3289, %v3392
        %s3398 = scalar_lea.vmem %s6, 960
        %v3399 = vld [vmem:[%s3398] sm:$0xf]
        %v3400 = vld [vmem:[%s3398 + $0x4] sm:$0xf]
        %v3401 = vld [vmem:[%s3398 + $0x8] sm:$0xf]
        %v3402 = vld [vmem:[%s3398 + $0xc] sm:$0xf]
        %v3403 = vld [vmem:[%s3398 + $0x10] sm:$0xf]
        %v3404 = vld [vmem:[%s3398 + $0x14] sm:$0xf]
        %v3405 = vld [vmem:[%s3398 + $0x18] sm:$0xf]
        %v3406 = vld [vmem:[%s3398 + $0x1c] sm:$0xf]
        %v3407 = vld [vmem:[%s3398 + $0x20] sm:$0xf]
        %v3408 = vld [vmem:[%s3398 + $0x24] sm:$0xf]
        %v3409 = vld [vmem:[%s3398 + $0x28] sm:$0xf]
        %v3410 = vld [vmem:[%s3398 + $0x2c] sm:$0xf]
        %v3411 = vld [vmem:[%s3398 + $0x30] sm:$0xf]
        %v3412 = vld [vmem:[%s3398 + $0x34] sm:$0xf]
        %v3413 = vld [vmem:[%s3398 + $0x38] sm:$0xf]
        %v3414 = vld [vmem:[%s3398 + $0x3c] sm:$0xf]
        %v3415 = vrot.slane %v1814, 7
        %v3433 = vunpack.c.l.b16 %v3399
        %v3434 = vunpack.c.l.b16 %v3400
        %v3435 = vunpack.c.l.b16 %v3401
        %v3436 = vunpack.c.l.b16 %v3402
        %v3437 = vunpack.c.l.b16 %v3403
        %v3438 = vunpack.c.l.b16 %v3404
        %v3439 = vunpack.c.l.b16 %v3405
        %v3440 = vunpack.c.l.b16 %v3406
        %v3441 = vunpack.c.l.b16 %v3407
        %v3442 = vunpack.c.l.b16 %v3408
        %v3443 = vunpack.c.l.b16 %v3409
        %v3444 = vunpack.c.l.b16 %v3410
        %v3445 = vunpack.c.l.b16 %v3411
        %v3446 = vunpack.c.l.b16 %v3412
        %v3447 = vunpack.c.l.b16 %v3413
        %v3448 = vunpack.c.l.b16 %v3414
        %v3449 = vpack.c.b16 %v3434, %v3433
        %v3450 = vpack.c.b16 %v3436, %v3435
        %v3451 = vpack.c.b16 %v3438, %v3437
        %v3452 = vpack.c.b16 %v3440, %v3439
        %v3453 = vpack.c.b16 %v3442, %v3441
        %v3454 = vpack.c.b16 %v3444, %v3443
        %v3455 = vpack.c.b16 %v3446, %v3445
        %v3456 = vpack.c.b16 %v3448, %v3447
        %3465 = vmatprep.subr.bf16.mxu0 0
        %3466 = vmatpush1.bf16.msra.mxu0 %v3456
        %3467 = vmatprep.subr.bf16.mxu0 0
        %3468 = vmatpush1.bf16.msra.mxu0 %v3455
        %3469 = vmatprep.subr.bf16.mxu0 0
        %3470 = vmatpush1.bf16.msra.mxu0 %v3454
        %3471 = vmatprep.subr.bf16.mxu0 0
        %3472 = vmatpush1.bf16.msra.mxu0 %v3453
        %3473 = vmatprep.subr.bf16.mxu0 0
        %3474 = vmatpush1.bf16.msra.mxu0 %v3452
        %3475 = vmatprep.subr.bf16.mxu0 0
        %3476 = vmatpush1.bf16.msra.mxu0 %v3451
        %3477 = vmatprep.subr.bf16.mxu0 0
        %3478 = vmatpush1.bf16.msra.mxu0 %v3450
        %3479 = vmatprep.subr.bf16.mxu0 0
        %3480 = vmatpush1.bf16.msra.mxu0 %v3449
        %3481 = vmatprep.subr.bf16.mxu0 0
        %3482 = vmatpush2.bf16.msra.mxu0 0
        %3483 = vmatprep.subr.bf16.mxu0 0
        %3484 = vmatpush2.bf16.msra.mxu0 0
        %3485 = vmatprep.subr.bf16.mxu0 0
        %3486 = vmatpush2.bf16.msra.mxu0 0
        %3487 = vmatprep.subr.bf16.mxu0 0
        %3488 = vmatpush2.bf16.msra.mxu0 0
        %3489 = vmatprep.subr.bf16.mxu0 0
        %3490 = vmatpush2.bf16.msra.mxu0 0
        %3491 = vmatprep.subr.bf16.mxu0 0
        %3492 = vmatpush2.bf16.msra.mxu0 0
        %3493 = vmatprep.subr.bf16.mxu0 0
        %3494 = vmatpush2.bf16.msra.mxu0 0
        %3495 = vmatprep.subr.bf16.mxu0 0
        %3496 = vmatpush2.bf16.msra.mxu0 0
        %3497 = vmatprep.mubr.bf16.mxu0 0
        %3498 = vmatmul.mubr.bf16.gmra.mxu0 %v3415
        %v3499 = vpop.f32.mrf.mxu0
        %v3500 = vadd.f32 0.0, %v3499
        %v3501 = vpop.f32.mrf.mxu0
        %v3502 = vpop.f32.mrf.mxu0
        %v3503 = vpop.f32.mrf.mxu0
        %3504 = vdwg.mxu0
        %v3505 = vadd.f32 %v3397, %v3500
        %v3506 = vld [vmem:[%s7] sm:$0x1]
        %v3507 = vadd.f32 %v3505, %v3506
        %3508 = vst [vmem:[%s380] sm:$0x1] %v3507
        %v3509 = vld [vmem:[%s8] sm:$0xff]
        %v3510 = vld [vmem:[%s8 + $0x8] sm:$0xff]
        %v3511 = vld [vmem:[%s8 + $0x10] sm:$0xff]
        %v3512 = vld [vmem:[%s8 + $0x18] sm:$0xff]
        %v3513 = vld [vmem:[%s8 + $0x20] sm:$0xff]
        %v3514 = vld [vmem:[%s8 + $0x28] sm:$0xff]
        %v3515 = vld [vmem:[%s8 + $0x30] sm:$0xff]
        %v3516 = vld [vmem:[%s8 + $0x38] sm:$0xff]
        %v3517 = vld [vmem:[%s8 + $0x40] sm:$0xff]
        %v3518 = vld [vmem:[%s8 + $0x48] sm:$0xff]
        %v3519 = vld [vmem:[%s8 + $0x50] sm:$0xff]
        %v3520 = vld [vmem:[%s8 + $0x58] sm:$0xff]
        %v3521 = vld [vmem:[%s8 + $0x60] sm:$0xff]
        %v3522 = vld [vmem:[%s8 + $0x68] sm:$0xff]
        %v3523 = vld [vmem:[%s8 + $0x70] sm:$0xff]
        %v3524 = vld [vmem:[%s8 + $0x78] sm:$0xff]
        %v3525 = vld [vmem:[%s9] sm:$0x1]
        %3526 = vmatprep.subr.mxu0 0.0
        %3527 = vmatpush1.msra.mxu0 %v3524
        %3528 = vmatprep.subr.mxu0 0.0
        %3529 = vmatpush1.msra.mxu0 %v3523
        %3530 = vmatprep.subr.mxu0 0.0
        %3531 = vmatpush1.msra.mxu0 %v3522
        %3532 = vmatprep.subr.mxu0 0.0
        %3533 = vmatpush1.msra.mxu0 %v3521
        %3534 = vmatprep.subr.mxu0 0.0
        %3535 = vmatpush1.msra.mxu0 %v3520
        %3536 = vmatprep.subr.mxu0 0.0
        %3537 = vmatpush1.msra.mxu0 %v3519
        %3538 = vmatprep.subr.mxu0 0.0
        %3539 = vmatpush1.msra.mxu0 %v3518
        %3540 = vmatprep.subr.mxu0 0.0
        %3541 = vmatpush1.msra.mxu0 %v3517
        %3542 = vmatprep.subr.mxu0 0.0
        %3543 = vmatpush1.msra.mxu0 %v3516
        %3544 = vmatprep.subr.mxu0 0.0
        %3545 = vmatpush1.msra.mxu0 %v3515
        %3546 = vmatprep.subr.mxu0 0.0
        %3547 = vmatpush1.msra.mxu0 %v3514
        %3548 = vmatprep.subr.mxu0 0.0
        %3549 = vmatpush1.msra.mxu0 %v3513
        %3550 = vmatprep.subr.mxu0 0.0
        %3551 = vmatpush1.msra.mxu0 %v3512
        %3552 = vmatprep.subr.mxu0 0.0
        %3553 = vmatpush1.msra.mxu0 %v3511
        %3554 = vmatprep.subr.mxu0 0.0
        %3555 = vmatpush1.msra.mxu0 %v3510
        %3556 = vmatprep.subr.mxu0 0.0
        %3557 = vmatpush1.msra.mxu0 %v3509
        %3558 = vmatprep.subr.mxu0 0.0
        %3559 = vmatpush2.msra.mxu0 0.0
        %3560 = vmatprep.subr.mxu0 0.0
        %3561 = vmatpush2.msra.mxu0 0.0
        %3562 = vmatprep.subr.mxu0 0.0
        %3563 = vmatpush2.msra.mxu0 0.0
        %3564 = vmatprep.subr.mxu0 0.0
        %3565 = vmatpush2.msra.mxu0 0.0
        %3566 = vmatprep.subr.mxu0 0.0
        %3567 = vmatpush2.msra.mxu0 0.0
        %3568 = vmatprep.subr.mxu0 0.0
        %3569 = vmatpush2.msra.mxu0 0.0
        %3570 = vmatprep.subr.mxu0 0.0
        %3571 = vmatpush2.msra.mxu0 0.0
        %3572 = vmatprep.subr.mxu0 0.0
        %3573 = vmatpush2.msra.mxu0 0.0
        %3574 = vmatprep.subr.mxu0 0.0
        %3575 = vmatpush2.msra.mxu0 0.0
        %3576 = vmatprep.subr.mxu0 0.0
        %3577 = vmatpush2.msra.mxu0 0.0
        %3578 = vmatprep.subr.mxu0 0.0
        %3579 = vmatpush2.msra.mxu0 0.0
        %3580 = vmatprep.subr.mxu0 0.0
        %3581 = vmatpush2.msra.mxu0 0.0
        %3582 = vmatprep.subr.mxu0 0.0
        %3583 = vmatpush2.msra.mxu0 0.0
        %3584 = vmatprep.subr.mxu0 0.0
        %3585 = vmatpush2.msra.mxu0 0.0
        %3586 = vmatprep.subr.mxu0 0.0
        %3587 = vmatpush2.msra.mxu0 0.0
        %3588 = vmatprep.subr.mxu0 0.0
        %3589 = vmatpush2.msra.mxu0 0.0
        %3590 = vmatprep.mubr.f32.mxu0 0.0
        %3591 = vmatmul.mubr.f32.gmra.mxu0 %v3507
        %v3592 = vpop.f32.mrf.mxu0
        %v3593 = vadd.f32 %v3525, %v3592
        %v3594 = vpop.f32.mrf.mxu0
        %3595 = vdwg.mxu0
        %3596 = vst [vmem:[%s394] sm:$0x1] %v3593
        %s3597 = sand.u32 %s249, 1
        %s3598 = scalar_lea.sflag [#allocation3], %s3597
        %s3599 = sand.u32 %s249, 1
        %s3600 = scalar_lea.vmem [#allocation2], %s3599
        %p3601 = scmp.lt.s32.totalorder %s26, 1
        %s3602 = scalar_select %p3601, %s26, 1
        %s3603 = scalar_lea.vmem %s11, %s3602
        // Predicated region
        $region61: #{autoencoder_forward.2} parent=59 // pred_check
          %p3604 = pneg %p259
        $region62: #{autoencoder_forward.2} parent=59 // pred_check_branch
          %3606 = sbr.rel (%p3604) target = $region64
        $region63: #{autoencoder_forward.2} parent=59 // pred_region
          %s3608 = ssub.s32 16, 16
          %3609 = vsyncadd %s3598, %s3608
          %s3610 = smul.addr %s26, 16
          %s3611 = scalar_lea.hbm %s10, %s3610
          %s3613 = sshll.u32 %s3600, 4
          %s3614 = int_to_ptr.vmem [resolvable:$true] %s3613
          %3616 = dma.vmem_to_hbm [thread:$0]  %s3614, 16, %s3611, %s3598
        $region64: #{autoencoder_forward.2} parent=59 // pred_fallthru
          _
        // Predicated region
        $region65: #{autoencoder_forward.2} parent=59 // pred_check
          %p3617 = pneg %p285
        $region66: #{autoencoder_forward.2} parent=59 // pred_check_branch
          %3619 = sbr.rel (%p3617) target = $region68
        $region67: #{autoencoder_forward.2} parent=59 // pred_region
          _
        $region68: #{autoencoder_forward.2} parent=59 // pred_fallthru
          _
      $region60: #{autoencoder_forward.2} parent=5 // pred_fallthru
        _
      %p3620 = scmp.le.s32.totalorder 2, %s21
      // Predicated region
      $region69: #{autoencoder_forward.2} parent=5 // pred_check
        %p3621 = pneg %p3620
      $region70: #{autoencoder_forward.2} parent=5 // pred_check_branch
        %3623 = sbr.rel (%p3621) target = $region72
      $region71: #{autoencoder_forward.2} parent=5 // pred_region
        %s3624 = ssub.s32 %s21, 2
        // Predicated region
        $region73: #{autoencoder_forward.2} parent=71 // pred_check
          %p3625 = pneg %p265
        $region74: #{autoencoder_forward.2} parent=71 // pred_check_branch
          %3627 = sbr.rel (%p3625) target = $region76
        $region75: #{autoencoder_forward.2} parent=71 // pred_region
          %s3628 = sand.u32 %s250, 1
          %s3629 = scalar_lea.sflag [#allocation3], %s3628
          %s3630 = sand.u32 %s250, 1
          %s3631 = scalar_lea.vmem [#allocation2], %s3630
          %3632 = dma.done %s3629, 16
        $region76: #{autoencoder_forward.2} parent=71 // pred_fallthru
          _
        // Predicated region
        $region77: #{autoencoder_forward.2} parent=71 // pred_check
          %p3633 = pneg %p291
        $region78: #{autoencoder_forward.2} parent=71 // pred_check_branch
          %3635 = sbr.rel (%p3633) target = $region80
        $region79: #{autoencoder_forward.2} parent=71 // pred_region
          %p3636 = scmp.lt.s32.totalorder %s27, 1
          %s3637 = scalar_select %p3636, %s27, 1
          %s3638 = scalar_lea.vmem %s11, %s3637
        $region80: #{autoencoder_forward.2} parent=71 // pred_fallthru
          _
      $region72: #{autoencoder_forward.2} parent=5 // pred_fallthru
        _
    $region6: #{autoencoder_forward.2} parent=1 // loop_footer
      %s25 = sadd.s32 1, %s21
    $region7: #{autoencoder_forward.2} parent=1 // loop_footer_branch
      %20 = sbr.rel target = $region3
    $region8: #{autoencoder_forward.2} parent=1 // loop_exit
      _
    %3639 = vsyncpa [#allocation3], 1
    %s3640 = scalar_lea.sflag [#allocation3], 1
    %3641 = vsyncpa %s3640, 1

</llo_original>
